<compile_context>
chip_gen: v6e
topology: v6e:2x2x1
jax: 0.10.0
libtpu: 0.0.40
codegen_flags: <defaults>
</compile_context>

<pallas_src>
import functools
import numpy as np
import jax
import jax.numpy as jnp
from jax import lax
from jax.experimental import pallas as pl
from jax.experimental.pallas import tpu as pltpu

KMAX = 5      # shared DARTS weight is [Cout, Cin, 5, 5]
PAD = 4       # largest conv reach (dil-conv_5) -> pad rows by 4 on each side
GUARD = 4     # flat guard columns so every tap base offset stays >= 0


def _tap_list():
    """Union of (dy, dx) offsets used by conv_3/conv_5/dil-conv_3/dil-conv_5."""
    taps = set()
    for dy in range(-2, 3):
        for dx in range(-2, 3):
            taps.add((dy, dx))          # conv_3 / conv_5 / dil-conv_3
    for dy in range(-4, 5, 2):
        for dx in range(-4, 5, 2):
            taps.add((dy, dx))          # dil-conv_5
    return tuple(sorted(taps))          # 41 taps


def _images_per_step(n, cap=8):
    """Images per grid step.  Prefer a 2-step grid (feeds both v7x TensorCores,
    negligible extra overhead on the single-TC v5e/v6e); cap B to bound VMEM."""
    if n % 2 == 0 and n // 2 <= cap:
        return max(1, n // 2)
    for b in range(min(n, cap), 0, -1):
        if n % b == 0:
            return b
    return 1


def _darts_kernel(wc_ref, xflat_ref, poolc_ref, cmask_ref, pplace_ref,
                  o_ref, xs_ref, *, H, W, C, B, taps):
    """B images per grid step.  Layout: channels on sublanes, H*W (x B) on lanes."""
    HW = H * W

    # hoist the column-wrap masks (one broadcast per used dx, reused across taps/images)
    used_dx = sorted({dx for (_, dx) in taps if dx != 0})
    masks = {dx: jnp.broadcast_to(cmask_ref[dx + 4:dx + 5, :], (C, HW))
             for dx in used_dx}

    # ---- im2col over the 41 union taps for all B images (probs + skip folded in wc).
    #      Direct bf16 ref-slice loads (3-wide vld slot) and bf16 scratch stores
    #      (halves the binding vst bytes vs f32). ----
    for t, (dy, dx) in enumerate(taps):
        base = GUARD + (PAD + dy) * W + dx                 # static Python int
        for b in range(B):
            xs = xflat_ref[b, :, base:base + HW]           # [C, HW] bf16 slice load
            if dx != 0:
                xs = xs * masks[dx]                        # zero columns that wrapped
            xs_ref[t * C:(t + 1) * C, b * HW:(b + 1) * HW] = xs

    # one MXU pass: [C_out, 41*C_in] @ [41*C_in, B*HW] -> f32 accumulator [C_out, B*HW]
    acc = jnp.dot(wc_ref[...], xs_ref[...], preferred_element_type=jnp.float32)

    # ---- pooled contribution (window-reduced + prob-combined in the wrapper):
    #      scatter the Ho*Wo values back into the H*W map with one tiny constant matmul.
    pp = pplace_ref[...]                                   # [Ho*Wo, HW] bf16 (0/1)
    for b in range(B):
        pool_b = jnp.dot(poolc_ref[b], pp, preferred_element_type=jnp.float32)
        # probs[7] is the 'zero' op; it and the base ZeroOp contribute nothing.
        o_ref[b] = (acc[:, b * HW:(b + 1) * HW] + pool_b).astype(o_ref.dtype)


def darts_forward(x_nchw, weight_oihw, logits):
    """x: [N, Cin, H, W], weight: [Cout, Cin, 5, 5], logits: [8] -> [N, Cout, H, W]."""
    N, C_in, H, W = x_nchw.shape
    C_out = weight_oihw.shape[0]
    assert C_in == C_out, "kernel assumes in_channels == out_channels"
    # TODO(synk): ZeroOp channel pad/crop for in_channels != out_channels not implemented.

    taps = _tap_list()
    T = len(taps)
    HW = H * W
    Lx = (H + 2 * PAD) * W + 2 * GUARD                     # H-padded flat length + guard
    B = _images_per_step(N)
    steps = N // B

    x = x_nchw.astype(jnp.float32)
    probs = jax.nn.softmax(logits.astype(jnp.float32))

    # ---- combined, probability-folded tap weights (vectorized), bf16: [C_out, T*C_in] ----
    # static one-hot maps: which 5x5 weight entry each conv contributes at each (dy,dx) tap
    M = np.zeros((4, T, KMAX * KMAX), np.float32)
    for t, (dy, dx) in enumerate(taps):
        if abs(dy) <= 1 and abs(dx) <= 1:
            M[0, t, (2 + dy) * KMAX + (2 + dx)] = 1.0                  # conv_3
        if abs(dy) <= 2 and abs(dx) <= 2:
            M[1, t, (2 + dy) * KMAX + (2 + dx)] = 1.0                  # conv_5
        if dy % 2 == 0 and dx % 2 == 0:
            if abs(dy) <= 2 and abs(dx) <= 2:
                M[2, t, (2 + dy // 2) * KMAX + (2 + dx // 2)] = 1.0    # dil-conv_3
            M[3, t, (2 + dy // 2) * KMAX + (2 + dx // 2)] = 1.0        # dil-conv_5
    W5 = jnp.transpose(weight_oihw.astype(jnp.float32), (2, 3, 1, 0))  # [5,5,Cin,Cout]
    coef = jnp.einsum("o,otk->tk", probs[:4], jnp.asarray(M))          # [T, 25]
    tapw = (coef @ W5.reshape(KMAX * KMAX, C_in * C_out)).reshape(T, C_in, C_out)
    center = taps.index((0, 0))
    tapw = tapw.at[center].add(probs[6] * jnp.eye(C_in, dtype=jnp.float32))   # skip
    wc = jnp.transpose(tapw, (2, 0, 1)).reshape(C_out, T * C_in).astype(jnp.bfloat16)

    # ---- H-padded, flattened, bf16 input (lane-dense; column wraps masked in-kernel) ----
    xH = jnp.pad(x, ((0, 0), (0, 0), (PAD, PAD), (0, 0)))              # [N,C,H+8,W]
    xflat = jnp.pad(xH.reshape(N, C_in, (H + 2 * PAD) * W),
                    ((0, 0), (0, 0), (GUARD, GUARD))).astype(jnp.bfloat16)   # [N,C,Lx]

    # column-wrap masks, one row per dx in [-4, 4] (0/1 -> exact in bf16)
    cmask_np = np.zeros((9, HW), np.float32)
    cols = np.arange(HW) % W
    for dxi in range(-4, 5):
        cmask_np[dxi + 4] = ((cols + dxi >= 0) & (cols + dxi < W)).astype(np.float32)
    cmask = jnp.asarray(cmask_np, dtype=jnp.bfloat16)

    # ---- pools: 3x3/stride-3 window reduce + prob combine in the wrapper (f32, exact
    #      PyTorch semantics: -inf pad for max, count_include_pad for avg) ----
    Ho = (H + 2 - 3) // 3 + 1
    Wo = (W + 2 - 3) // 3 + 1
    mp = lax.reduce_window(x, -jnp.inf, lax.max, (1, 1, 3, 3), (1, 1, 3, 3),
                           [(0, 0), (0, 0), (1, 1), (1, 1)])
    ap = lax.reduce_window(x, 0.0, lax.add, (1, 1, 3, 3), (1, 1, 3, 3),
                           [(0, 0), (0, 0), (1, 1), (1, 1)]) / 9.0
    poolc = (probs[4] * mp + probs[5] * ap).reshape(N, C_in, Ho * Wo).astype(jnp.bfloat16)

    # placement matrix: pooled (oi,oj) -> ZeroOp re-padded position in the HxW map
    dh, dw = max(0, H - Ho), max(0, W - Wo)
    ph, pw = dh - dh // 2, dw - dw // 2
    pp_np = np.zeros((Ho * Wo, HW), np.float32)
    for oi in range(Ho):
        for oj in range(Wo):
            pp_np[oi * Wo + oj, (ph + oi) * W + (pw + oj)] = 1.0
    pplace = jnp.asarray(pp_np, dtype=jnp.bfloat16)                     # 0/1 -> exact
    # TODO(synk): at large H*W replace this dense O(HW^2/9) scatter matmul with direct
    # column writes / wrapper-side placement, and set vmem_limit_bytes explicitly for
    # the smaller 64 MiB VMEM on v7x.

    kernel = functools.partial(_darts_kernel, H=H, W=W, C=C_in, B=B, taps=taps)
    out = pl.pallas_call(
        kernel,
        grid=(steps,),
        in_specs=[
            pl.BlockSpec((C_out, T * C_in), lambda s: (0, 0)),               # wc (bf16)
            pl.BlockSpec((B, C_in, Lx), lambda s: (s, 0, 0)),                # xflat (bf16)
            pl.BlockSpec((B, C_in, Ho * Wo), lambda s: (s, 0, 0)),           # poolc (bf16)
            pl.BlockSpec((9, HW), lambda s: (0, 0)),                         # cmask (bf16)
            pl.BlockSpec((Ho * Wo, HW), lambda s: (0, 0)),                   # pplace (bf16)
        ],
        out_specs=pl.BlockSpec((B, C_out, HW), lambda s: (s, 0, 0)),
        out_shape=jax.ShapeDtypeStruct((N, C_out, HW), jnp.float32),
        scratch_shapes=[pltpu.VMEM((T * C_in, B * HW), jnp.bfloat16)],       # im2col (bf16)
        compiler_params=pltpu.CompilerParams(dimension_semantics=("parallel",)),
    )(wc, xflat, poolc, cmask, pplace)
    return out.reshape(N, C_out, H, W)                                       # NCHW, no transpose


def darts_reference(x, weight, logits):
    """Pure-JAX NCHW reference mirroring the PyTorch module."""
    N, C_in, H, W = x.shape
    C_out = weight.shape[0]
    probs = jax.nn.softmax(logits.astype(jnp.float32))
    dn = ("NCHW", "OIHW", "NCHW")

    def conv(k, pad, dil):
        off = (KMAX - k + (KMAX % 2)) // 2
        w = weight[:, :, off:off + k, off:off + k]
        return lax.conv_general_dilated(x, w, (1, 1), [(pad, pad), (pad, pad)],
                                        rhs_dilation=(dil, dil), dimension_numbers=dn)

    Ho = (H + 2 - 3) // 3 + 1
    Wo = (W + 2 - 3) // 3 + 1
    dh, dw = H - Ho, W - Wo
    padspec = [(0, 0), (0, 0), (dh - dh // 2, dh // 2), (dw - dw // 2, dw // 2)]
    mp = lax.reduce_window(x, -jnp.inf, lax.max, (1, 1, 3, 3), (1, 1, 3, 3),
                           [(0, 0), (0, 0), (1, 1), (1, 1)])
    ap = lax.reduce_window(x, 0.0, lax.add, (1, 1, 3, 3), (1, 1, 3, 3),
                           [(0, 0), (0, 0), (1, 1), (1, 1)]) / 9.0

    outs = [conv(3, 1, 1), conv(5, 2, 1), conv(3, 2, 2), conv(5, 4, 2),
            jnp.pad(mp, padspec), jnp.pad(ap, padspec), x, jnp.zeros_like(x)]
    total = jnp.zeros((N, C_out, H, W), jnp.float32)
    for k in range(len(outs)):
        total = total + probs[k] * outs[k]
    return total


if __name__ == "__main__":
    key = jax.random.PRNGKey(0)
    kx, kw, kl = jax.random.split(key, 3)
    N, C, H, W = 4, 8, 16, 16          # N=4 -> 2 images per grid step, grid=(2,)

    x = jax.random.normal(kx, (N, C, H, W), dtype=jnp.float32)
    # shared DARTS weight [out_channels, in_channels, 5, 5], kaiming-normal-style init
    fan_in = C * KMAX * KMAX
    weight = jax.random.normal(kw, (C, C, KMAX, KMAX), jnp.float32) * np.sqrt(2.0 / fan_in)
    # one architecture logit per operation (distinct values so the softmax matters)
    logits = 0.1 * jnp.arange(8, dtype=jnp.float32)

    out = jax.jit(darts_forward)(x, weight, logits)
    out = jax.block_until_ready(out)

    ref = darts_reference(x, weight, logits)
    # bf16 operands (x, wc, pooled values), f32 accumulation
    np.testing.assert_allclose(np.asarray(out), np.asarray(ref), rtol=2e-2, atol=2e-2)
    print("KERNEL_OK")
</pallas_src>

<mosaic_0001>
module attributes {stable_mosaic.version = 11 : i64} {
  func.func @_darts_kernel(%arg0: i32, %arg1: memref<8x328xbf16, #tpu.memory_space<vmem>>, %arg2: memref<2x8x392xbf16, #tpu.memory_space<vmem>>, %arg3: memref<2x8x36xbf16, #tpu.memory_space<vmem>>, %arg4: memref<9x256xbf16, #tpu.memory_space<vmem>>, %arg5: memref<36x256xbf16, #tpu.memory_space<vmem>>, %arg6: memref<2x8x256xf32, #tpu.memory_space<vmem>>, %arg7: memref<328x512xbf16, #tpu.memory_space<vmem>>) attributes {dimension_semantics = [#tpu.dimension_semantics<parallel>], iteration_bounds = array<i64: 2>, scalar_prefetch = 0 : i64, scratch_operands = 1 : i64, tpu.core_type = #tpu.core_type<tc>, window_params = [{pipeline_mode = #tpu.pipeline_mode<synchronous>, transform_indices = @transform_0, window_bounds = array<i64: 8, 328>}, {transform_indices = @transform_1, window_bounds = array<i64: 2, 8, 392>}, {transform_indices = @transform_2, window_bounds = array<i64: 2, 8, 36>}, {pipeline_mode = #tpu.pipeline_mode<synchronous>, transform_indices = @transform_3, window_bounds = array<i64: 9, 256>}, {pipeline_mode = #tpu.pipeline_mode<synchronous>, transform_indices = @transform_4, window_bounds = array<i64: 36, 256>}, {transform_indices = @transform_5, window_bounds = array<i64: 2, 8, 256>}]} {
    %c0 = arith.constant 0 : index
    %c0_0 = arith.constant 0 : index
    %0 = vector.load %arg4[%c0, %c0_0] : memref<9x256xbf16, #tpu.memory_space<vmem>>, vector<1x256xbf16>
    %1 = vector.shape_cast %0 : vector<1x256xbf16> to vector<1x256xbf16>
    %2 = vector.broadcast %1 : vector<1x256xbf16> to vector<8x256xbf16>
    %c2 = arith.constant 2 : index
    %c0_1 = arith.constant 0 : index
    %3 = vector.load %arg4[%c2, %c0_1] : memref<9x256xbf16, #tpu.memory_space<vmem>>, vector<1x256xbf16>
    %4 = vector.shape_cast %3 : vector<1x256xbf16> to vector<1x256xbf16>
    %5 = vector.broadcast %4 : vector<1x256xbf16> to vector<8x256xbf16>
    %c3 = arith.constant 3 : index
    %c0_2 = arith.constant 0 : index
    %6 = vector.load %arg4[%c3, %c0_2] : memref<9x256xbf16, #tpu.memory_space<vmem>>, vector<1x256xbf16>
    %7 = vector.shape_cast %6 : vector<1x256xbf16> to vector<1x256xbf16>
    %8 = vector.broadcast %7 : vector<1x256xbf16> to vector<8x256xbf16>
    %c5 = arith.constant 5 : index
    %c0_3 = arith.constant 0 : index
    %9 = vector.load %arg4[%c5, %c0_3] : memref<9x256xbf16, #tpu.memory_space<vmem>>, vector<1x256xbf16>
    %10 = vector.shape_cast %9 : vector<1x256xbf16> to vector<1x256xbf16>
    %11 = vector.broadcast %10 : vector<1x256xbf16> to vector<8x256xbf16>
    %c6 = arith.constant 6 : index
    %c0_4 = arith.constant 0 : index
    %12 = vector.load %arg4[%c6, %c0_4] : memref<9x256xbf16, #tpu.memory_space<vmem>>, vector<1x256xbf16>
    %13 = vector.shape_cast %12 : vector<1x256xbf16> to vector<1x256xbf16>
    %14 = vector.broadcast %13 : vector<1x256xbf16> to vector<8x256xbf16>
    %c8 = arith.constant 8 : index
    %c0_5 = arith.constant 0 : index
    %15 = vector.load %arg4[%c8, %c0_5] : memref<9x256xbf16, #tpu.memory_space<vmem>>, vector<1x256xbf16>
    %16 = vector.shape_cast %15 : vector<1x256xbf16> to vector<1x256xbf16>
    %17 = vector.broadcast %16 : vector<1x256xbf16> to vector<8x256xbf16>
    %c0_6 = arith.constant 0 : index
    %c0_7 = arith.constant 0 : index
    %c0_8 = arith.constant 0 : index
    %18 = vector.load %arg2[%c0_6, %c0_7, %c0_8] : memref<2x8x392xbf16, #tpu.memory_space<vmem>>, vector<1x8x256xbf16>
    %19 = vector.shape_cast %18 : vector<1x8x256xbf16> to vector<8x256xbf16>
    %20 = arith.mulf %19, %2 : vector<8x256xbf16>
    %c0_9 = arith.constant 0 : index
    %c0_10 = arith.constant 0 : index
    %21 = vector.load %arg7[%c0_9, %c0_10] : memref<328x512xbf16, #tpu.memory_space<vmem>>, vector<8x256xbf16>
    tpu.vector_store %arg7[%c0_9, %c0_10], %20 {strides = array<i32>} : memref<328x512xbf16, #tpu.memory_space<vmem>>, vector<8x256xbf16>,
    %c1 = arith.constant 1 : index
    %c0_11 = arith.constant 0 : index
    %c0_12 = arith.constant 0 : index
    %22 = vector.load %arg2[%c1, %c0_11, %c0_12] : memref<2x8x392xbf16, #tpu.memory_space<vmem>>, vector<1x8x256xbf16>
    %23 = vector.shape_cast %22 : vector<1x8x256xbf16> to vector<8x256xbf16>
    %24 = arith.mulf %23, %2 : vector<8x256xbf16>
    %c0_13 = arith.constant 0 : index
    %c256 = arith.constant 256 : index
    %25 = vector.load %arg7[%c0_13, %c256] : memref<328x512xbf16, #tpu.memory_space<vmem>>, vector<8x256xbf16>
    tpu.vector_store %arg7[%c0_13, %c256], %24 {strides = array<i32>} : memref<328x512xbf16, #tpu.memory_space<vmem>>, vector<8x256xbf16>,
    %c0_14 = arith.constant 0 : index
    %c0_15 = arith.constant 0 : index
    %c2_16 = arith.constant 2 : index
    %26 = vector.load %arg2[%c0_14, %c0_15, %c2_16] : memref<2x8x392xbf16, #tpu.memory_space<vmem>>, vector<1x8x256xbf16>
    %27 = vector.shape_cast %26 : vector<1x8x256xbf16> to vector<8x256xbf16>
    %28 = arith.mulf %27, %5 : vector<8x256xbf16>
    %c8_17 = arith.constant 8 : index
    %c0_18 = arith.constant 0 : index
    %29 = vector.load %arg7[%c8_17, %c0_18] : memref<328x512xbf16, #tpu.memory_space<vmem>>, vector<8x256xbf16>
    tpu.vector_store %arg7[%c8_17, %c0_18], %28 {strides = array<i32>} : memref<328x512xbf16, #tpu.memory_space<vmem>>, vector<8x256xbf16>,
    %c1_19 = arith.constant 1 : index
    %c0_20 = arith.constant 0 : index
    %c2_21 = arith.constant 2 : index
    %30 = vector.load %arg2[%c1_19, %c0_20, %c2_21] : memref<2x8x392xbf16, #tpu.memory_space<vmem>>, vector<1x8x256xbf16>
    %31 = vector.shape_cast %30 : vector<1x8x256xbf16> to vector<8x256xbf16>
    %32 = arith.mulf %31, %5 : vector<8x256xbf16>
    %c8_22 = arith.constant 8 : index
    %c256_23 = arith.constant 256 : index
    %33 = vector.load %arg7[%c8_22, %c256_23] : memref<328x512xbf16, #tpu.memory_space<vmem>>, vector<8x256xbf16>
    tpu.vector_store %arg7[%c8_22, %c256_23], %32 {strides = array<i32>} : memref<328x512xbf16, #tpu.memory_space<vmem>>, vector<8x256xbf16>,
    %c0_24 = arith.constant 0 : index
    %c0_25 = arith.constant 0 : index
    %c4 = arith.constant 4 : index
    %34 = vector.load %arg2[%c0_24, %c0_25, %c4] : memref<2x8x392xbf16, #tpu.memory_space<vmem>>, vector<1x8x256xbf16>
    %35 = vector.shape_cast %34 : vector<1x8x256xbf16> to vector<8x256xbf16>
    %c16 = arith.constant 16 : index
    %c0_26 = arith.constant 0 : index
    %36 = vector.load %arg7[%c16, %c0_26] : memref<328x512xbf16, #tpu.memory_space<vmem>>, vector<8x256xbf16>
    tpu.vector_store %arg7[%c16, %c0_26], %35 {strides = array<i32>} : memref<328x512xbf16, #tpu.memory_space<vmem>>, vector<8x256xbf16>,
    %c1_27 = arith.constant 1 : index
    %c0_28 = arith.constant 0 : index
    %c4_29 = arith.constant 4 : index
    %37 = vector.load %arg2[%c1_27, %c0_28, %c4_29] : memref<2x8x392xbf16, #tpu.memory_space<vmem>>, vector<1x8x256xbf16>
    %38 = vector.shape_cast %37 : vector<1x8x256xbf16> to vector<8x256xbf16>
    %c16_30 = arith.constant 16 : index
    %c256_31 = arith.constant 256 : index
    %39 = vector.load %arg7[%c16_30, %c256_31] : memref<328x512xbf16, #tpu.memory_space<vmem>>, vector<8x256xbf16>
    tpu.vector_store %arg7[%c16_30, %c256_31], %38 {strides = array<i32>} : memref<328x512xbf16, #tpu.memory_space<vmem>>, vector<8x256xbf16>,
    %c0_32 = arith.constant 0 : index
    %c0_33 = arith.constant 0 : index
    %c6_34 = arith.constant 6 : index
    %40 = vector.load %arg2[%c0_32, %c0_33, %c6_34] : memref<2x8x392xbf16, #tpu.memory_space<vmem>>, vector<1x8x256xbf16>
    %41 = vector.shape_cast %40 : vector<1x8x256xbf16> to vector<8x256xbf16>
    %42 = arith.mulf %41, %14 : vector<8x256xbf16>
    %c24 = arith.constant 24 : index
    %c0_35 = arith.constant 0 : index
    %43 = vector.load %arg7[%c24, %c0_35] : memref<328x512xbf16, #tpu.memory_space<vmem>>, vector<8x256xbf16>
    tpu.vector_store %arg7[%c24, %c0_35], %42 {strides = array<i32>} : memref<328x512xbf16, #tpu.memory_space<vmem>>, vector<8x256xbf16>,
    %c1_36 = arith.constant 1 : index
    %c0_37 = arith.constant 0 : index
    %c6_38 = arith.constant 6 : index
    %44 = vector.load %arg2[%c1_36, %c0_37, %c6_38] : memref<2x8x392xbf16, #tpu.memory_space<vmem>>, vector<1x8x256xbf16>
    %45 = vector.shape_cast %44 : vector<1x8x256xbf16> to vector<8x256xbf16>
    %46 = arith.mulf %45, %14 : vector<8x256xbf16>
    %c24_39 = arith.constant 24 : index
    %c256_40 = arith.constant 256 : index
    %47 = vector.load %arg7[%c24_39, %c256_40] : memref<328x512xbf16, #tpu.memory_space<vmem>>, vector<8x256xbf16>
    tpu.vector_store %arg7[%c24_39, %c256_40], %46 {strides = array<i32>} : memref<328x512xbf16, #tpu.memory_space<vmem>>, vector<8x256xbf16>,
    %c0_41 = arith.constant 0 : index
    %c0_42 = arith.constant 0 : index
    %c8_43 = arith.constant 8 : index
    %48 = vector.load %arg2[%c0_41, %c0_42, %c8_43] : memref<2x8x392xbf16, #tpu.memory_space<vmem>>, vector<1x8x256xbf16>
    %49 = vector.shape_cast %48 : vector<1x8x256xbf16> to vector<8x256xbf16>
    %50 = arith.mulf %49, %17 : vector<8x256xbf16>
    %c32 = arith.constant 32 : index
    %c0_44 = arith.constant 0 : index
    %51 = vector.load %arg7[%c32, %c0_44] : memref<328x512xbf16, #tpu.memory_space<vmem>>, vector<8x256xbf16>
    tpu.vector_store %arg7[%c32, %c0_44], %50 {strides = array<i32>} : memref<328x512xbf16, #tpu.memory_space<vmem>>, vector<8x256xbf16>,
    %c1_45 = arith.constant 1 : index
    %c0_46 = arith.constant 0 : index
    %c8_47 = arith.constant 8 : index
    %52 = vector.load %arg2[%c1_45, %c0_46, %c8_47] : memref<2x8x392xbf16, #tpu.memory_space<vmem>>, vector<1x8x256xbf16>
    %53 = vector.shape_cast %52 : vector<1x8x256xbf16> to vector<8x256xbf16>
    %54 = arith.mulf %53, %17 : vector<8x256xbf16>
    %c32_48 = arith.constant 32 : index
    %c256_49 = arith.constant 256 : index
    %55 = vector.load %arg7[%c32_48, %c256_49] : memref<328x512xbf16, #tpu.memory_space<vmem>>, vector<8x256xbf16>
    tpu.vector_store %arg7[%c32_48, %c256_49], %54 {strides = array<i32>} : memref<328x512xbf16, #tpu.memory_space<vmem>>, vector<8x256xbf16>,
    %c0_50 = arith.constant 0 : index
    %c0_51 = arith.constant 0 : index
    %c32_52 = arith.constant 32 : index
    %56 = vector.load %arg2[%c0_50, %c0_51, %c32_52] : memref<2x8x392xbf16, #tpu.memory_space<vmem>>, vector<1x8x256xbf16>
    %57 = vector.shape_cast %56 : vector<1x8x256xbf16> to vector<8x256xbf16>
    %58 = arith.mulf %57, %2 : vector<8x256xbf16>
    %c40 = arith.constant 40 : index
    %c0_53 = arith.constant 0 : index
    %59 = vector.load %arg7[%c40, %c0_53] : memref<328x512xbf16, #tpu.memory_space<vmem>>, vector<8x256xbf16>
    tpu.vector_store %arg7[%c40, %c0_53], %58 {strides = array<i32>} : memref<328x512xbf16, #tpu.memory_space<vmem>>, vector<8x256xbf16>,
    %c1_54 = arith.constant 1 : index
    %c0_55 = arith.constant 0 : index
    %c32_56 = arith.constant 32 : index
    %60 = vector.load %arg2[%c1_54, %c0_55, %c32_56] : memref<2x8x392xbf16, #tpu.memory_space<vmem>>, vector<1x8x256xbf16>
    %61 = vector.shape_cast %60 : vector<1x8x256xbf16> to vector<8x256xbf16>
    %62 = arith.mulf %61, %2 : vector<8x256xbf16>
    %c40_57 = arith.constant 40 : index
    %c256_58 = arith.constant 256 : index
    %63 = vector.load %arg7[%c40_57, %c256_58] : memref<328x512xbf16, #tpu.memory_space<vmem>>, vector<8x256xbf16>
    tpu.vector_store %arg7[%c40_57, %c256_58], %62 {strides = array<i32>} : memref<328x512xbf16, #tpu.memory_space<vmem>>, vector<8x256xbf16>,
    %c0_59 = arith.constant 0 : index
    %c0_60 = arith.constant 0 : index
    %c34 = arith.constant 34 : index
    %64 = vector.load %arg2[%c0_59, %c0_60, %c34] : memref<2x8x392xbf16, #tpu.memory_space<vmem>>, vector<1x8x256xbf16>
    %65 = vector.shape_cast %64 : vector<1x8x256xbf16> to vector<8x256xbf16>
    %66 = arith.mulf %65, %5 : vector<8x256xbf16>
    %c48 = arith.constant 48 : index
    %c0_61 = arith.constant 0 : index
    %67 = vector.load %arg7[%c48, %c0_61] : memref<328x512xbf16, #tpu.memory_space<vmem>>, vector<8x256xbf16>
    tpu.vector_store %arg7[%c48, %c0_61], %66 {strides = array<i32>} : memref<328x512xbf16, #tpu.memory_space<vmem>>, vector<8x256xbf16>,
    %c1_62 = arith.constant 1 : index
    %c0_63 = arith.constant 0 : index
    %c34_64 = arith.constant 34 : index
    %68 = vector.load %arg2[%c1_62, %c0_63, %c34_64] : memref<2x8x392xbf16, #tpu.memory_space<vmem>>, vector<1x8x256xbf16>
    %69 = vector.shape_cast %68 : vector<1x8x256xbf16> to vector<8x256xbf16>
    %70 = arith.mulf %69, %5 : vector<8x256xbf16>
    %c48_65 = arith.constant 48 : index
    %c256_66 = arith.constant 256 : index
    %71 = vector.load %arg7[%c48_65, %c256_66] : memref<328x512xbf16, #tpu.memory_space<vmem>>, vector<8x256xbf16>
    tpu.vector_store %arg7[%c48_65, %c256_66], %70 {strides = array<i32>} : memref<328x512xbf16, #tpu.memory_space<vmem>>, vector<8x256xbf16>,
    %c0_67 = arith.constant 0 : index
    %c0_68 = arith.constant 0 : index
    %c35 = arith.constant 35 : index
    %72 = vector.load %arg2[%c0_67, %c0_68, %c35] : memref<2x8x392xbf16, #tpu.memory_space<vmem>>, vector<1x8x256xbf16>
    %73 = vector.shape_cast %72 : vector<1x8x256xbf16> to vector<8x256xbf16>
    %74 = arith.mulf %73, %8 : vector<8x256xbf16>
    %c56 = arith.constant 56 : index
    %c0_69 = arith.constant 0 : index
    %75 = vector.load %arg7[%c56, %c0_69] : memref<328x512xbf16, #tpu.memory_space<vmem>>, vector<8x256xbf16>
    tpu.vector_store %arg7[%c56, %c0_69], %74 {strides = array<i32>} : memref<328x512xbf16, #tpu.memory_space<vmem>>, vector<8x256xbf16>,
    %c1_70 = arith.constant 1 : index
    %c0_71 = arith.constant 0 : index
    %c35_72 = arith.constant 35 : index
    %76 = vector.load %arg2[%c1_70, %c0_71, %c35_72] : memref<2x8x392xbf16, #tpu.memory_space<vmem>>, vector<1x8x256xbf16>
    %77 = vector.shape_cast %76 : vector<1x8x256xbf16> to vector<8x256xbf16>
    %78 = arith.mulf %77, %8 : vector<8x256xbf16>
    %c56_73 = arith.constant 56 : index
    %c256_74 = arith.constant 256 : index
    %79 = vector.load %arg7[%c56_73, %c256_74] : memref<328x512xbf16, #tpu.memory_space<vmem>>, vector<8x256xbf16>
    tpu.vector_store %arg7[%c56_73, %c256_74], %78 {strides = array<i32>} : memref<328x512xbf16, #tpu.memory_space<vmem>>, vector<8x256xbf16>,
    %c0_75 = arith.constant 0 : index
    %c0_76 = arith.constant 0 : index
    %c36 = arith.constant 36 : index
    %80 = vector.load %arg2[%c0_75, %c0_76, %c36] : memref<2x8x392xbf16, #tpu.memory_space<vmem>>, vector<1x8x256xbf16>
    %81 = vector.shape_cast %80 : vector<1x8x256xbf16> to vector<8x256xbf16>
    %c64 = arith.constant 64 : index
    %c0_77 = arith.constant 0 : index
    %82 = vector.load %arg7[%c64, %c0_77] : memref<328x512xbf16, #tpu.memory_space<vmem>>, vector<8x256xbf16>
    tpu.vector_store %arg7[%c64, %c0_77], %81 {strides = array<i32>} : memref<328x512xbf16, #tpu.memory_space<vmem>>, vector<8x256xbf16>,
    %c1_78 = arith.constant 1 : index
    %c0_79 = arith.constant 0 : index
    %c36_80 = arith.constant 36 : index
    %83 = vector.load %arg2[%c1_78, %c0_79, %c36_80] : memref<2x8x392xbf16, #tpu.memory_space<vmem>>, vector<1x8x256xbf16>
    %84 = vector.shape_cast %83 : vector<1x8x256xbf16> to vector<8x256xbf16>
    %c64_81 = arith.constant 64 : index
    %c256_82 = arith.constant 256 : index
    %85 = vector.load %arg7[%c64_81, %c256_82] : memref<328x512xbf16, #tpu.memory_space<vmem>>, vector<8x256xbf16>
    tpu.vector_store %arg7[%c64_81, %c256_82], %84 {strides = array<i32>} : memref<328x512xbf16, #tpu.memory_space<vmem>>, vector<8x256xbf16>,
    %c0_83 = arith.constant 0 : index
    %c0_84 = arith.constant 0 : index
    %c37 = arith.constant 37 : index
    %86 = vector.load %arg2[%c0_83, %c0_84, %c37] : memref<2x8x392xbf16, #tpu.memory_space<vmem>>, vector<1x8x256xbf16>
    %87 = vector.shape_cast %86 : vector<1x8x256xbf16> to vector<8x256xbf16>
    %88 = arith.mulf %87, %11 : vector<8x256xbf16>
    %c72 = arith.constant 72 : index
    %c0_85 = arith.constant 0 : index
    %89 = vector.load %arg7[%c72, %c0_85] : memref<328x512xbf16, #tpu.memory_space<vmem>>, vector<8x256xbf16>
    tpu.vector_store %arg7[%c72, %c0_85], %88 {strides = array<i32>} : memref<328x512xbf16, #tpu.memory_space<vmem>>, vector<8x256xbf16>,
    %c1_86 = arith.constant 1 : index
    %c0_87 = arith.constant 0 : index
    %c37_88 = arith.constant 37 : index
    %90 = vector.load %arg2[%c1_86, %c0_87, %c37_88] : memref<2x8x392xbf16, #tpu.memory_space<vmem>>, vector<1x8x256xbf16>
    %91 = vector.shape_cast %90 : vector<1x8x256xbf16> to vector<8x256xbf16>
    %92 = arith.mulf %91, %11 : vector<8x256xbf16>
    %c72_89 = arith.constant 72 : index
    %c256_90 = arith.constant 256 : index
    %93 = vector.load %arg7[%c72_89, %c256_90] : memref<328x512xbf16, #tpu.memory_space<vmem>>, vector<8x256xbf16>
    tpu.vector_store %arg7[%c72_89, %c256_90], %92 {strides = array<i32>} : memref<328x512xbf16, #tpu.memory_space<vmem>>, vector<8x256xbf16>,
    %c0_91 = arith.constant 0 : index
    %c0_92 = arith.constant 0 : index
    %c38 = arith.constant 38 : index
    %94 = vector.load %arg2[%c0_91, %c0_92, %c38] : memref<2x8x392xbf16, #tpu.memory_space<vmem>>, vector<1x8x256xbf16>
    %95 = vector.shape_cast %94 : vector<1x8x256xbf16> to vector<8x256xbf16>
    %96 = arith.mulf %95, %14 : vector<8x256xbf16>
    %c80 = arith.constant 80 : index
    %c0_93 = arith.constant 0 : index
    %97 = vector.load %arg7[%c80, %c0_93] : memref<328x512xbf16, #tpu.memory_space<vmem>>, vector<8x256xbf16>
    tpu.vector_store %arg7[%c80, %c0_93], %96 {strides = array<i32>} : memref<328x512xbf16, #tpu.memory_space<vmem>>, vector<8x256xbf16>,
    %c1_94 = arith.constant 1 : index
    %c0_95 = arith.constant 0 : index
    %c38_96 = arith.constant 38 : index
    %98 = vector.load %arg2[%c1_94, %c0_95, %c38_96] : memref<2x8x392xbf16, #tpu.memory_space<vmem>>, vector<1x8x256xbf16>
    %99 = vector.shape_cast %98 : vector<1x8x256xbf16> to vector<8x256xbf16>
    %100 = arith.mulf %99, %14 : vector<8x256xbf16>
    %c80_97 = arith.constant 80 : index
    %c256_98 = arith.constant 256 : index
    %101 = vector.load %arg7[%c80_97, %c256_98] : memref<328x512xbf16, #tpu.memory_space<vmem>>, vector<8x256xbf16>
    tpu.vector_store %arg7[%c80_97, %c256_98], %100 {strides = array<i32>} : memref<328x512xbf16, #tpu.memory_space<vmem>>, vector<8x256xbf16>,
    %c0_99 = arith.constant 0 : index
    %c0_100 = arith.constant 0 : index
    %c40_101 = arith.constant 40 : index
    %102 = vector.load %arg2[%c0_99, %c0_100, %c40_101] : memref<2x8x392xbf16, #tpu.memory_space<vmem>>, vector<1x8x256xbf16>
    %103 = vector.shape_cast %102 : vector<1x8x256xbf16> to vector<8x256xbf16>
    %104 = arith.mulf %103, %17 : vector<8x256xbf16>
    %c88 = arith.constant 88 : index
    %c0_102 = arith.constant 0 : index
    %105 = vector.load %arg7[%c88, %c0_102] : memref<328x512xbf16, #tpu.memory_space<vmem>>, vector<8x256xbf16>
    tpu.vector_store %arg7[%c88, %c0_102], %104 {strides = array<i32>} : memref<328x512xbf16, #tpu.memory_space<vmem>>, vector<8x256xbf16>,
    %c1_103 = arith.constant 1 : index
    %c0_104 = arith.constant 0 : index
    %c40_105 = arith.constant 40 : index
    %106 = vector.load %arg2[%c1_103, %c0_104, %c40_105] : memref<2x8x392xbf16, #tpu.memory_space<vmem>>, vector<1x8x256xbf16>
    %107 = vector.shape_cast %106 : vector<1x8x256xbf16> to vector<8x256xbf16>
    %108 = arith.mulf %107, %17 : vector<8x256xbf16>
    %c88_106 = arith.constant 88 : index
    %c256_107 = arith.constant 256 : index
    %109 = vector.load %arg7[%c88_106, %c256_107] : memref<328x512xbf16, #tpu.memory_space<vmem>>, vector<8x256xbf16>
    tpu.vector_store %arg7[%c88_106, %c256_107], %108 {strides = array<i32>} : memref<328x512xbf16, #tpu.memory_space<vmem>>, vector<8x256xbf16>,
    %c0_108 = arith.constant 0 : index
    %c0_109 = arith.constant 0 : index
    %c50 = arith.constant 50 : index
    %110 = vector.load %arg2[%c0_108, %c0_109, %c50] : memref<2x8x392xbf16, #tpu.memory_space<vmem>>, vector<1x8x256xbf16>
    %111 = vector.shape_cast %110 : vector<1x8x256xbf16> to vector<8x256xbf16>
    %112 = arith.mulf %111, %5 : vector<8x256xbf16>
    %c96 = arith.constant 96 : index
    %c0_110 = arith.constant 0 : index
    %113 = vector.load %arg7[%c96, %c0_110] : memref<328x512xbf16, #tpu.memory_space<vmem>>, vector<8x256xbf16>
    tpu.vector_store %arg7[%c96, %c0_110], %112 {strides = array<i32>} : memref<328x512xbf16, #tpu.memory_space<vmem>>, vector<8x256xbf16>,
    %c1_111 = arith.constant 1 : index
    %c0_112 = arith.constant 0 : index
    %c50_113 = arith.constant 50 : index
    %114 = vector.load %arg2[%c1_111, %c0_112, %c50_113] : memref<2x8x392xbf16, #tpu.memory_space<vmem>>, vector<1x8x256xbf16>
    %115 = vector.shape_cast %114 : vector<1x8x256xbf16> to vector<8x256xbf16>
    %116 = arith.mulf %115, %5 : vector<8x256xbf16>
    %c96_114 = arith.constant 96 : index
    %c256_115 = arith.constant 256 : index
    %117 = vector.load %arg7[%c96_114, %c256_115] : memref<328x512xbf16, #tpu.memory_space<vmem>>, vector<8x256xbf16>
    tpu.vector_store %arg7[%c96_114, %c256_115], %116 {strides = array<i32>} : memref<328x512xbf16, #tpu.memory_space<vmem>>, vector<8x256xbf16>,
    %c0_116 = arith.constant 0 : index
    %c0_117 = arith.constant 0 : index
    %c51 = arith.constant 51 : index
    %118 = vector.load %arg2[%c0_116, %c0_117, %c51] : memref<2x8x392xbf16, #tpu.memory_space<vmem>>, vector<1x8x256xbf16>
    %119 = vector.shape_cast %118 : vector<1x8x256xbf16> to vector<8x256xbf16>
    %120 = arith.mulf %119, %8 : vector<8x256xbf16>
    %c104 = arith.constant 104 : index
    %c0_118 = arith.constant 0 : index
    %121 = vector.load %arg7[%c104, %c0_118] : memref<328x512xbf16, #tpu.memory_space<vmem>>, vector<8x256xbf16>
    tpu.vector_store %arg7[%c104, %c0_118], %120 {strides = array<i32>} : memref<328x512xbf16, #tpu.memory_space<vmem>>, vector<8x256xbf16>,
    %c1_119 = arith.constant 1 : index
    %c0_120 = arith.constant 0 : index
    %c51_121 = arith.constant 51 : index
    %122 = vector.load %arg2[%c1_119, %c0_120, %c51_121] : memref<2x8x392xbf16, #tpu.memory_space<vmem>>, vector<1x8x256xbf16>
    %123 = vector.shape_cast %122 : vector<1x8x256xbf16> to vector<8x256xbf16>
    %124 = arith.mulf %123, %8 : vector<8x256xbf16>
    %c104_122 = arith.constant 104 : index
    %c256_123 = arith.constant 256 : index
    %125 = vector.load %arg7[%c104_122, %c256_123] : memref<328x512xbf16, #tpu.memory_space<vmem>>, vector<8x256xbf16>
    tpu.vector_store %arg7[%c104_122, %c256_123], %124 {strides = array<i32>} : memref<328x512xbf16, #tpu.memory_space<vmem>>, vector<8x256xbf16>,
    %c0_124 = arith.constant 0 : index
    %c0_125 = arith.constant 0 : index
    %c52 = arith.constant 52 : index
    %126 = vector.load %arg2[%c0_124, %c0_125, %c52] : memref<2x8x392xbf16, #tpu.memory_space<vmem>>, vector<1x8x256xbf16>
    %127 = vector.shape_cast %126 : vector<1x8x256xbf16> to vector<8x256xbf16>
    %c112 = arith.constant 112 : index
    %c0_126 = arith.constant 0 : index
    %128 = vector.load %arg7[%c112, %c0_126] : memref<328x512xbf16, #tpu.memory_space<vmem>>, vector<8x256xbf16>
    tpu.vector_store %arg7[%c112, %c0_126], %127 {strides = array<i32>} : memref<328x512xbf16, #tpu.memory_space<vmem>>, vector<8x256xbf16>,
    %c1_127 = arith.constant 1 : index
    %c0_128 = arith.constant 0 : index
    %c52_129 = arith.constant 52 : index
    %129 = vector.load %arg2[%c1_127, %c0_128, %c52_129] : memref<2x8x392xbf16, #tpu.memory_space<vmem>>, vector<1x8x256xbf16>
    %130 = vector.shape_cast %129 : vector<1x8x256xbf16> to vector<8x256xbf16>
    %c112_130 = arith.constant 112 : index
    %c256_131 = arith.constant 256 : index
    %131 = vector.load %arg7[%c112_130, %c256_131] : memref<328x512xbf16, #tpu.memory_space<vmem>>, vector<8x256xbf16>
    tpu.vector_store %arg7[%c112_130, %c256_131], %130 {strides = array<i32>} : memref<328x512xbf16, #tpu.memory_space<vmem>>, vector<8x256xbf16>,
    %c0_132 = arith.constant 0 : index
    %c0_133 = arith.constant 0 : index
    %c53 = arith.constant 53 : index
    %132 = vector.load %arg2[%c0_132, %c0_133, %c53] : memref<2x8x392xbf16, #tpu.memory_space<vmem>>, vector<1x8x256xbf16>
    %133 = vector.shape_cast %132 : vector<1x8x256xbf16> to vector<8x256xbf16>
    %134 = arith.mulf %133, %11 : vector<8x256xbf16>
    %c120 = arith.constant 120 : index
    %c0_134 = arith.constant 0 : index
    %135 = vector.load %arg7[%c120, %c0_134] : memref<328x512xbf16, #tpu.memory_space<vmem>>, vector<8x256xbf16>
    tpu.vector_store %arg7[%c120, %c0_134], %134 {strides = array<i32>} : memref<328x512xbf16, #tpu.memory_space<vmem>>, vector<8x256xbf16>,
    %c1_135 = arith.constant 1 : index
    %c0_136 = arith.constant 0 : index
    %c53_137 = arith.constant 53 : index
    %136 = vector.load %arg2[%c1_135, %c0_136, %c53_137] : memref<2x8x392xbf16, #tpu.memory_space<vmem>>, vector<1x8x256xbf16>
    %137 = vector.shape_cast %136 : vector<1x8x256xbf16> to vector<8x256xbf16>
    %138 = arith.mulf %137, %11 : vector<8x256xbf16>
    %c120_138 = arith.constant 120 : index
    %c256_139 = arith.constant 256 : index
    %139 = vector.load %arg7[%c120_138, %c256_139] : memref<328x512xbf16, #tpu.memory_space<vmem>>, vector<8x256xbf16>
    tpu.vector_store %arg7[%c120_138, %c256_139], %138 {strides = array<i32>} : memref<328x512xbf16, #tpu.memory_space<vmem>>, vector<8x256xbf16>,
    %c0_140 = arith.constant 0 : index
    %c0_141 = arith.constant 0 : index
    %c54 = arith.constant 54 : index
    %140 = vector.load %arg2[%c0_140, %c0_141, %c54] : memref<2x8x392xbf16, #tpu.memory_space<vmem>>, vector<1x8x256xbf16>
    %141 = vector.shape_cast %140 : vector<1x8x256xbf16> to vector<8x256xbf16>
    %142 = arith.mulf %141, %14 : vector<8x256xbf16>
    %c128 = arith.constant 128 : index
    %c0_142 = arith.constant 0 : index
    %143 = vector.load %arg7[%c128, %c0_142] : memref<328x512xbf16, #tpu.memory_space<vmem>>, vector<8x256xbf16>
    tpu.vector_store %arg7[%c128, %c0_142], %142 {strides = array<i32>} : memref<328x512xbf16, #tpu.memory_space<vmem>>, vector<8x256xbf16>,
    %c1_143 = arith.constant 1 : index
    %c0_144 = arith.constant 0 : index
    %c54_145 = arith.constant 54 : index
    %144 = vector.load %arg2[%c1_143, %c0_144, %c54_145] : memref<2x8x392xbf16, #tpu.memory_space<vmem>>, vector<1x8x256xbf16>
    %145 = vector.shape_cast %144 : vector<1x8x256xbf16> to vector<8x256xbf16>
    %146 = arith.mulf %145, %14 : vector<8x256xbf16>
    %c128_146 = arith.constant 128 : index
    %c256_147 = arith.constant 256 : index
    %147 = vector.load %arg7[%c128_146, %c256_147] : memref<328x512xbf16, #tpu.memory_space<vmem>>, vector<8x256xbf16>
    tpu.vector_store %arg7[%c128_146, %c256_147], %146 {strides = array<i32>} : memref<328x512xbf16, #tpu.memory_space<vmem>>, vector<8x256xbf16>,
    %c0_148 = arith.constant 0 : index
    %c0_149 = arith.constant 0 : index
    %c64_150 = arith.constant 64 : index
    %148 = vector.load %arg2[%c0_148, %c0_149, %c64_150] : memref<2x8x392xbf16, #tpu.memory_space<vmem>>, vector<1x8x256xbf16>
    %149 = vector.shape_cast %148 : vector<1x8x256xbf16> to vector<8x256xbf16>
    %150 = arith.mulf %149, %2 : vector<8x256xbf16>
    %c136 = arith.constant 136 : index
    %c0_151 = arith.constant 0 : index
    %151 = vector.load %arg7[%c136, %c0_151] : memref<328x512xbf16, #tpu.memory_space<vmem>>, vector<8x256xbf16>
    tpu.vector_store %arg7[%c136, %c0_151], %150 {strides = array<i32>} : memref<328x512xbf16, #tpu.memory_space<vmem>>, vector<8x256xbf16>,
    %c1_152 = arith.constant 1 : index
    %c0_153 = arith.constant 0 : index
    %c64_154 = arith.constant 64 : index
    %152 = vector.load %arg2[%c1_152, %c0_153, %c64_154] : memref<2x8x392xbf16, #tpu.memory_space<vmem>>, vector<1x8x256xbf16>
    %153 = vector.shape_cast %152 : vector<1x8x256xbf16> to vector<8x256xbf16>
    %154 = arith.mulf %153, %2 : vector<8x256xbf16>
    %c136_155 = arith.constant 136 : index
    %c256_156 = arith.constant 256 : index
    %155 = vector.load %arg7[%c136_155, %c256_156] : memref<328x512xbf16, #tpu.memory_space<vmem>>, vector<8x256xbf16>
    tpu.vector_store %arg7[%c136_155, %c256_156], %154 {strides = array<i32>} : memref<328x512xbf16, #tpu.memory_space<vmem>>, vector<8x256xbf16>,
    %c0_157 = arith.constant 0 : index
    %c0_158 = arith.constant 0 : index
    %c66 = arith.constant 66 : index
    %156 = vector.load %arg2[%c0_157, %c0_158, %c66] : memref<2x8x392xbf16, #tpu.memory_space<vmem>>, vector<1x8x256xbf16>
    %157 = vector.shape_cast %156 : vector<1x8x256xbf16> to vector<8x256xbf16>
    %158 = arith.mulf %157, %5 : vector<8x256xbf16>
    %c144 = arith.constant 144 : index
    %c0_159 = arith.constant 0 : index
    %159 = vector.load %arg7[%c144, %c0_159] : memref<328x512xbf16, #tpu.memory_space<vmem>>, vector<8x256xbf16>
    tpu.vector_store %arg7[%c144, %c0_159], %158 {strides = array<i32>} : memref<328x512xbf16, #tpu.memory_space<vmem>>, vector<8x256xbf16>,
    %c1_160 = arith.constant 1 : index
    %c0_161 = arith.constant 0 : index
    %c66_162 = arith.constant 66 : index
    %160 = vector.load %arg2[%c1_160, %c0_161, %c66_162] : memref<2x8x392xbf16, #tpu.memory_space<vmem>>, vector<1x8x256xbf16>
    %161 = vector.shape_cast %160 : vector<1x8x256xbf16> to vector<8x256xbf16>
    %162 = arith.mulf %161, %5 : vector<8x256xbf16>
    %c144_163 = arith.constant 144 : index
    %c256_164 = arith.constant 256 : index
    %163 = vector.load %arg7[%c144_163, %c256_164] : memref<328x512xbf16, #tpu.memory_space<vmem>>, vector<8x256xbf16>
    tpu.vector_store %arg7[%c144_163, %c256_164], %162 {strides = array<i32>} : memref<328x512xbf16, #tpu.memory_space<vmem>>, vector<8x256xbf16>,
    %c0_165 = arith.constant 0 : index
    %c0_166 = arith.constant 0 : index
    %c67 = arith.constant 67 : index
    %164 = vector.load %arg2[%c0_165, %c0_166, %c67] : memref<2x8x392xbf16, #tpu.memory_space<vmem>>, vector<1x8x256xbf16>
    %165 = vector.shape_cast %164 : vector<1x8x256xbf16> to vector<8x256xbf16>
    %166 = arith.mulf %165, %8 : vector<8x256xbf16>
    %c152 = arith.constant 152 : index
    %c0_167 = arith.constant 0 : index
    %167 = vector.load %arg7[%c152, %c0_167] : memref<328x512xbf16, #tpu.memory_space<vmem>>, vector<8x256xbf16>
    tpu.vector_store %arg7[%c152, %c0_167], %166 {strides = array<i32>} : memref<328x512xbf16, #tpu.memory_space<vmem>>, vector<8x256xbf16>,
    %c1_168 = arith.constant 1 : index
    %c0_169 = arith.constant 0 : index
    %c67_170 = arith.constant 67 : index
    %168 = vector.load %arg2[%c1_168, %c0_169, %c67_170] : memref<2x8x392xbf16, #tpu.memory_space<vmem>>, vector<1x8x256xbf16>
    %169 = vector.shape_cast %168 : vector<1x8x256xbf16> to vector<8x256xbf16>
    %170 = arith.mulf %169, %8 : vector<8x256xbf16>
    %c152_171 = arith.constant 152 : index
    %c256_172 = arith.constant 256 : index
    %171 = vector.load %arg7[%c152_171, %c256_172] : memref<328x512xbf16, #tpu.memory_space<vmem>>, vector<8x256xbf16>
    tpu.vector_store %arg7[%c152_171, %c256_172], %170 {strides = array<i32>} : memref<328x512xbf16, #tpu.memory_space<vmem>>, vector<8x256xbf16>,
    %c0_173 = arith.constant 0 : index
    %c0_174 = arith.constant 0 : index
    %c68 = arith.constant 68 : index
    %172 = vector.load %arg2[%c0_173, %c0_174, %c68] : memref<2x8x392xbf16, #tpu.memory_space<vmem>>, vector<1x8x256xbf16>
    %173 = vector.shape_cast %172 : vector<1x8x256xbf16> to vector<8x256xbf16>
    %c160 = arith.constant 160 : index
    %c0_175 = arith.constant 0 : index
    %174 = vector.load %arg7[%c160, %c0_175] : memref<328x512xbf16, #tpu.memory_space<vmem>>, vector<8x256xbf16>
    tpu.vector_store %arg7[%c160, %c0_175], %173 {strides = array<i32>} : memref<328x512xbf16, #tpu.memory_space<vmem>>, vector<8x256xbf16>,
    %c1_176 = arith.constant 1 : index
    %c0_177 = arith.constant 0 : index
    %c68_178 = arith.constant 68 : index
    %175 = vector.load %arg2[%c1_176, %c0_177, %c68_178] : memref<2x8x392xbf16, #tpu.memory_space<vmem>>, vector<1x8x256xbf16>
    %176 = vector.shape_cast %175 : vector<1x8x256xbf16> to vector<8x256xbf16>
    %c160_179 = arith.constant 160 : index
    %c256_180 = arith.constant 256 : index
    %177 = vector.load %arg7[%c160_179, %c256_180] : memref<328x512xbf16, #tpu.memory_space<vmem>>, vector<8x256xbf16>
    tpu.vector_store %arg7[%c160_179, %c256_180], %176 {strides = array<i32>} : memref<328x512xbf16, #tpu.memory_space<vmem>>, vector<8x256xbf16>,
    %c0_181 = arith.constant 0 : index
    %c0_182 = arith.constant 0 : index
    %c69 = arith.constant 69 : index
    %178 = vector.load %arg2[%c0_181, %c0_182, %c69] : memref<2x8x392xbf16, #tpu.memory_space<vmem>>, vector<1x8x256xbf16>
    %179 = vector.shape_cast %178 : vector<1x8x256xbf16> to vector<8x256xbf16>
    %180 = arith.mulf %179, %11 : vector<8x256xbf16>
    %c168 = arith.constant 168 : index
    %c0_183 = arith.constant 0 : index
    %181 = vector.load %arg7[%c168, %c0_183] : memref<328x512xbf16, #tpu.memory_space<vmem>>, vector<8x256xbf16>
    tpu.vector_store %arg7[%c168, %c0_183], %180 {strides = array<i32>} : memref<328x512xbf16, #tpu.memory_space<vmem>>, vector<8x256xbf16>,
    %c1_184 = arith.constant 1 : index
    %c0_185 = arith.constant 0 : index
    %c69_186 = arith.constant 69 : index
    %182 = vector.load %arg2[%c1_184, %c0_185, %c69_186] : memref<2x8x392xbf16, #tpu.memory_space<vmem>>, vector<1x8x256xbf16>
    %183 = vector.shape_cast %182 : vector<1x8x256xbf16> to vector<8x256xbf16>
    %184 = arith.mulf %183, %11 : vector<8x256xbf16>
    %c168_187 = arith.constant 168 : index
    %c256_188 = arith.constant 256 : index
    %185 = vector.load %arg7[%c168_187, %c256_188] : memref<328x512xbf16, #tpu.memory_space<vmem>>, vector<8x256xbf16>
    tpu.vector_store %arg7[%c168_187, %c256_188], %184 {strides = array<i32>} : memref<328x512xbf16, #tpu.memory_space<vmem>>, vector<8x256xbf16>,
    %c0_189 = arith.constant 0 : index
    %c0_190 = arith.constant 0 : index
    %c70 = arith.constant 70 : index
    %186 = vector.load %arg2[%c0_189, %c0_190, %c70] : memref<2x8x392xbf16, #tpu.memory_space<vmem>>, vector<1x8x256xbf16>
    %187 = vector.shape_cast %186 : vector<1x8x256xbf16> to vector<8x256xbf16>
    %188 = arith.mulf %187, %14 : vector<8x256xbf16>
    %c176 = arith.constant 176 : index
    %c0_191 = arith.constant 0 : index
    %189 = vector.load %arg7[%c176, %c0_191] : memref<328x512xbf16, #tpu.memory_space<vmem>>, vector<8x256xbf16>
    tpu.vector_store %arg7[%c176, %c0_191], %188 {strides = array<i32>} : memref<328x512xbf16, #tpu.memory_space<vmem>>, vector<8x256xbf16>,
    %c1_192 = arith.constant 1 : index
    %c0_193 = arith.constant 0 : index
    %c70_194 = arith.constant 70 : index
    %190 = vector.load %arg2[%c1_192, %c0_193, %c70_194] : memref<2x8x392xbf16, #tpu.memory_space<vmem>>, vector<1x8x256xbf16>
    %191 = vector.shape_cast %190 : vector<1x8x256xbf16> to vector<8x256xbf16>
    %192 = arith.mulf %191, %14 : vector<8x256xbf16>
    %c176_195 = arith.constant 176 : index
    %c256_196 = arith.constant 256 : index
    %193 = vector.load %arg7[%c176_195, %c256_196] : memref<328x512xbf16, #tpu.memory_space<vmem>>, vector<8x256xbf16>
    tpu.vector_store %arg7[%c176_195, %c256_196], %192 {strides = array<i32>} : memref<328x512xbf16, #tpu.memory_space<vmem>>, vector<8x256xbf16>,
    %c0_197 = arith.constant 0 : index
    %c0_198 = arith.constant 0 : index
    %c72_199 = arith.constant 72 : index
    %194 = vector.load %arg2[%c0_197, %c0_198, %c72_199] : memref<2x8x392xbf16, #tpu.memory_space<vmem>>, vector<1x8x256xbf16>
    %195 = vector.shape_cast %194 : vector<1x8x256xbf16> to vector<8x256xbf16>
    %196 = arith.mulf %195, %17 : vector<8x256xbf16>
    %c184 = arith.constant 184 : index
    %c0_200 = arith.constant 0 : index
    %197 = vector.load %arg7[%c184, %c0_200] : memref<328x512xbf16, #tpu.memory_space<vmem>>, vector<8x256xbf16>
    tpu.vector_store %arg7[%c184, %c0_200], %196 {strides = array<i32>} : memref<328x512xbf16, #tpu.memory_space<vmem>>, vector<8x256xbf16>,
    %c1_201 = arith.constant 1 : index
    %c0_202 = arith.constant 0 : index
    %c72_203 = arith.constant 72 : index
    %198 = vector.load %arg2[%c1_201, %c0_202, %c72_203] : memref<2x8x392xbf16, #tpu.memory_space<vmem>>, vector<1x8x256xbf16>
    %199 = vector.shape_cast %198 : vector<1x8x256xbf16> to vector<8x256xbf16>
    %200 = arith.mulf %199, %17 : vector<8x256xbf16>
    %c184_204 = arith.constant 184 : index
    %c256_205 = arith.constant 256 : index
    %201 = vector.load %arg7[%c184_204, %c256_205] : memref<328x512xbf16, #tpu.memory_space<vmem>>, vector<8x256xbf16>
    tpu.vector_store %arg7[%c184_204, %c256_205], %200 {strides = array<i32>} : memref<328x512xbf16, #tpu.memory_space<vmem>>, vector<8x256xbf16>,
    %c0_206 = arith.constant 0 : index
    %c0_207 = arith.constant 0 : index
    %c82 = arith.constant 82 : index
    %202 = vector.load %arg2[%c0_206, %c0_207, %c82] : memref<2x8x392xbf16, #tpu.memory_space<vmem>>, vector<1x8x256xbf16>
    %203 = vector.shape_cast %202 : vector<1x8x256xbf16> to vector<8x256xbf16>
    %204 = arith.mulf %203, %5 : vector<8x256xbf16>
    %c192 = arith.constant 192 : index
    %c0_208 = arith.constant 0 : index
    %205 = vector.load %arg7[%c192, %c0_208] : memref<328x512xbf16, #tpu.memory_space<vmem>>, vector<8x256xbf16>
    tpu.vector_store %arg7[%c192, %c0_208], %204 {strides = array<i32>} : memref<328x512xbf16, #tpu.memory_space<vmem>>, vector<8x256xbf16>,
    %c1_209 = arith.constant 1 : index
    %c0_210 = arith.constant 0 : index
    %c82_211 = arith.constant 82 : index
    %206 = vector.load %arg2[%c1_209, %c0_210, %c82_211] : memref<2x8x392xbf16, #tpu.memory_space<vmem>>, vector<1x8x256xbf16>
    %207 = vector.shape_cast %206 : vector<1x8x256xbf16> to vector<8x256xbf16>
    %208 = arith.mulf %207, %5 : vector<8x256xbf16>
    %c192_212 = arith.constant 192 : index
    %c256_213 = arith.constant 256 : index
    %209 = vector.load %arg7[%c192_212, %c256_213] : memref<328x512xbf16, #tpu.memory_space<vmem>>, vector<8x256xbf16>
    tpu.vector_store %arg7[%c192_212, %c256_213], %208 {strides = array<i32>} : memref<328x512xbf16, #tpu.memory_space<vmem>>, vector<8x256xbf16>,
    %c0_214 = arith.constant 0 : index
    %c0_215 = arith.constant 0 : index
    %c83 = arith.constant 83 : index
    %210 = vector.load %arg2[%c0_214, %c0_215, %c83] : memref<2x8x392xbf16, #tpu.memory_space<vmem>>, vector<1x8x256xbf16>
    %211 = vector.shape_cast %210 : vector<1x8x256xbf16> to vector<8x256xbf16>
    %212 = arith.mulf %211, %8 : vector<8x256xbf16>
    %c200 = arith.constant 200 : index
    %c0_216 = arith.constant 0 : index
    %213 = vector.load %arg7[%c200, %c0_216] : memref<328x512xbf16, #tpu.memory_space<vmem>>, vector<8x256xbf16>
    tpu.vector_store %arg7[%c200, %c0_216], %212 {strides = array<i32>} : memref<328x512xbf16, #tpu.memory_space<vmem>>, vector<8x256xbf16>,
    %c1_217 = arith.constant 1 : index
    %c0_218 = arith.constant 0 : index
    %c83_219 = arith.constant 83 : index
    %214 = vector.load %arg2[%c1_217, %c0_218, %c83_219] : memref<2x8x392xbf16, #tpu.memory_space<vmem>>, vector<1x8x256xbf16>
    %215 = vector.shape_cast %214 : vector<1x8x256xbf16> to vector<8x256xbf16>
    %216 = arith.mulf %215, %8 : vector<8x256xbf16>
    %c200_220 = arith.constant 200 : index
    %c256_221 = arith.constant 256 : index
    %217 = vector.load %arg7[%c200_220, %c256_221] : memref<328x512xbf16, #tpu.memory_space<vmem>>, vector<8x256xbf16>
    tpu.vector_store %arg7[%c200_220, %c256_221], %216 {strides = array<i32>} : memref<328x512xbf16, #tpu.memory_space<vmem>>, vector<8x256xbf16>,
    %c0_222 = arith.constant 0 : index
    %c0_223 = arith.constant 0 : index
    %c84 = arith.constant 84 : index
    %218 = vector.load %arg2[%c0_222, %c0_223, %c84] : memref<2x8x392xbf16, #tpu.memory_space<vmem>>, vector<1x8x256xbf16>
    %219 = vector.shape_cast %218 : vector<1x8x256xbf16> to vector<8x256xbf16>
    %c208 = arith.constant 208 : index
    %c0_224 = arith.constant 0 : index
    %220 = vector.load %arg7[%c208, %c0_224] : memref<328x512xbf16, #tpu.memory_space<vmem>>, vector<8x256xbf16>
    tpu.vector_store %arg7[%c208, %c0_224], %219 {strides = array<i32>} : memref<328x512xbf16, #tpu.memory_space<vmem>>, vector<8x256xbf16>,
    %c1_225 = arith.constant 1 : index
    %c0_226 = arith.constant 0 : index
    %c84_227 = arith.constant 84 : index
    %221 = vector.load %arg2[%c1_225, %c0_226, %c84_227] : memref<2x8x392xbf16, #tpu.memory_space<vmem>>, vector<1x8x256xbf16>
    %222 = vector.shape_cast %221 : vector<1x8x256xbf16> to vector<8x256xbf16>
    %c208_228 = arith.constant 208 : index
    %c256_229 = arith.constant 256 : index
    %223 = vector.load %arg7[%c208_228, %c256_229] : memref<328x512xbf16, #tpu.memory_space<vmem>>, vector<8x256xbf16>
    tpu.vector_store %arg7[%c208_228, %c256_229], %222 {strides = array<i32>} : memref<328x512xbf16, #tpu.memory_space<vmem>>, vector<8x256xbf16>,
    %c0_230 = arith.constant 0 : index
    %c0_231 = arith.constant 0 : index
    %c85 = arith.constant 85 : index
    %224 = vector.load %arg2[%c0_230, %c0_231, %c85] : memref<2x8x392xbf16, #tpu.memory_space<vmem>>, vector<1x8x256xbf16>
    %225 = vector.shape_cast %224 : vector<1x8x256xbf16> to vector<8x256xbf16>
    %226 = arith.mulf %225, %11 : vector<8x256xbf16>
    %c216 = arith.constant 216 : index
    %c0_232 = arith.constant 0 : index
    %227 = vector.load %arg7[%c216, %c0_232] : memref<328x512xbf16, #tpu.memory_space<vmem>>, vector<8x256xbf16>
    tpu.vector_store %arg7[%c216, %c0_232], %226 {strides = array<i32>} : memref<328x512xbf16, #tpu.memory_space<vmem>>, vector<8x256xbf16>,
    %c1_233 = arith.constant 1 : index
    %c0_234 = arith.constant 0 : index
    %c85_235 = arith.constant 85 : index
    %228 = vector.load %arg2[%c1_233, %c0_234, %c85_235] : memref<2x8x392xbf16, #tpu.memory_space<vmem>>, vector<1x8x256xbf16>
    %229 = vector.shape_cast %228 : vector<1x8x256xbf16> to vector<8x256xbf16>
    %230 = arith.mulf %229, %11 : vector<8x256xbf16>
    %c216_236 = arith.constant 216 : index
    %c256_237 = arith.constant 256 : index
    %231 = vector.load %arg7[%c216_236, %c256_237] : memref<328x512xbf16, #tpu.memory_space<vmem>>, vector<8x256xbf16>
    tpu.vector_store %arg7[%c216_236, %c256_237], %230 {strides = array<i32>} : memref<328x512xbf16, #tpu.memory_space<vmem>>, vector<8x256xbf16>,
    %c0_238 = arith.constant 0 : index
    %c0_239 = arith.constant 0 : index
    %c86 = arith.constant 86 : index
    %232 = vector.load %arg2[%c0_238, %c0_239, %c86] : memref<2x8x392xbf16, #tpu.memory_space<vmem>>, vector<1x8x256xbf16>
    %233 = vector.shape_cast %232 : vector<1x8x256xbf16> to vector<8x256xbf16>
    %234 = arith.mulf %233, %14 : vector<8x256xbf16>
    %c224 = arith.constant 224 : index
    %c0_240 = arith.constant 0 : index
    %235 = vector.load %arg7[%c224, %c0_240] : memref<328x512xbf16, #tpu.memory_space<vmem>>, vector<8x256xbf16>
    tpu.vector_store %arg7[%c224, %c0_240], %234 {strides = array<i32>} : memref<328x512xbf16, #tpu.memory_space<vmem>>, vector<8x256xbf16>,
    %c1_241 = arith.constant 1 : index
    %c0_242 = arith.constant 0 : index
    %c86_243 = arith.constant 86 : index
    %236 = vector.load %arg2[%c1_241, %c0_242, %c86_243] : memref<2x8x392xbf16, #tpu.memory_space<vmem>>, vector<1x8x256xbf16>
    %237 = vector.shape_cast %236 : vector<1x8x256xbf16> to vector<8x256xbf16>
    %238 = arith.mulf %237, %14 : vector<8x256xbf16>
    %c224_244 = arith.constant 224 : index
    %c256_245 = arith.constant 256 : index
    %239 = vector.load %arg7[%c224_244, %c256_245] : memref<328x512xbf16, #tpu.memory_space<vmem>>, vector<8x256xbf16>
    tpu.vector_store %arg7[%c224_244, %c256_245], %238 {strides = array<i32>} : memref<328x512xbf16, #tpu.memory_space<vmem>>, vector<8x256xbf16>,
    %c0_246 = arith.constant 0 : index
    %c0_247 = arith.constant 0 : index
    %c96_248 = arith.constant 96 : index
    %240 = vector.load %arg2[%c0_246, %c0_247, %c96_248] : memref<2x8x392xbf16, #tpu.memory_space<vmem>>, vector<1x8x256xbf16>
    %241 = vector.shape_cast %240 : vector<1x8x256xbf16> to vector<8x256xbf16>
    %242 = arith.mulf %241, %2 : vector<8x256xbf16>
    %c232 = arith.constant 232 : index
    %c0_249 = arith.constant 0 : index
    %243 = vector.load %arg7[%c232, %c0_249] : memref<328x512xbf16, #tpu.memory_space<vmem>>, vector<8x256xbf16>
    tpu.vector_store %arg7[%c232, %c0_249], %242 {strides = array<i32>} : memref<328x512xbf16, #tpu.memory_space<vmem>>, vector<8x256xbf16>,
    %c1_250 = arith.constant 1 : index
    %c0_251 = arith.constant 0 : index
    %c96_252 = arith.constant 96 : index
    %244 = vector.load %arg2[%c1_250, %c0_251, %c96_252] : memref<2x8x392xbf16, #tpu.memory_space<vmem>>, vector<1x8x256xbf16>
    %245 = vector.shape_cast %244 : vector<1x8x256xbf16> to vector<8x256xbf16>
    %246 = arith.mulf %245, %2 : vector<8x256xbf16>
    %c232_253 = arith.constant 232 : index
    %c256_254 = arith.constant 256 : index
    %247 = vector.load %arg7[%c232_253, %c256_254] : memref<328x512xbf16, #tpu.memory_space<vmem>>, vector<8x256xbf16>
    tpu.vector_store %arg7[%c232_253, %c256_254], %246 {strides = array<i32>} : memref<328x512xbf16, #tpu.memory_space<vmem>>, vector<8x256xbf16>,
    %c0_255 = arith.constant 0 : index
    %c0_256 = arith.constant 0 : index
    %c98 = arith.constant 98 : index
    %248 = vector.load %arg2[%c0_255, %c0_256, %c98] : memref<2x8x392xbf16, #tpu.memory_space<vmem>>, vector<1x8x256xbf16>
    %249 = vector.shape_cast %248 : vector<1x8x256xbf16> to vector<8x256xbf16>
    %250 = arith.mulf %249, %5 : vector<8x256xbf16>
    %c240 = arith.constant 240 : index
    %c0_257 = arith.constant 0 : index
    %251 = vector.load %arg7[%c240, %c0_257] : memref<328x512xbf16, #tpu.memory_space<vmem>>, vector<8x256xbf16>
    tpu.vector_store %arg7[%c240, %c0_257], %250 {strides = array<i32>} : memref<328x512xbf16, #tpu.memory_space<vmem>>, vector<8x256xbf16>,
    %c1_258 = arith.constant 1 : index
    %c0_259 = arith.constant 0 : index
    %c98_260 = arith.constant 98 : index
    %252 = vector.load %arg2[%c1_258, %c0_259, %c98_260] : memref<2x8x392xbf16, #tpu.memory_space<vmem>>, vector<1x8x256xbf16>
    %253 = vector.shape_cast %252 : vector<1x8x256xbf16> to vector<8x256xbf16>
    %254 = arith.mulf %253, %5 : vector<8x256xbf16>
    %c240_261 = arith.constant 240 : index
    %c256_262 = arith.constant 256 : index
    %255 = vector.load %arg7[%c240_261, %c256_262] : memref<328x512xbf16, #tpu.memory_space<vmem>>, vector<8x256xbf16>
    tpu.vector_store %arg7[%c240_261, %c256_262], %254 {strides = array<i32>} : memref<328x512xbf16, #tpu.memory_space<vmem>>, vector<8x256xbf16>,
    %c0_263 = arith.constant 0 : index
    %c0_264 = arith.constant 0 : index
    %c99 = arith.constant 99 : index
    %256 = vector.load %arg2[%c0_263, %c0_264, %c99] : memref<2x8x392xbf16, #tpu.memory_space<vmem>>, vector<1x8x256xbf16>
    %257 = vector.shape_cast %256 : vector<1x8x256xbf16> to vector<8x256xbf16>
    %258 = arith.mulf %257, %8 : vector<8x256xbf16>
    %c248 = arith.constant 248 : index
    %c0_265 = arith.constant 0 : index
    %259 = vector.load %arg7[%c248, %c0_265] : memref<328x512xbf16, #tpu.memory_space<vmem>>, vector<8x256xbf16>
    tpu.vector_store %arg7[%c248, %c0_265], %258 {strides = array<i32>} : memref<328x512xbf16, #tpu.memory_space<vmem>>, vector<8x256xbf16>,
    %c1_266 = arith.constant 1 : index
    %c0_267 = arith.constant 0 : index
    %c99_268 = arith.constant 99 : index
    %260 = vector.load %arg2[%c1_266, %c0_267, %c99_268] : memref<2x8x392xbf16, #tpu.memory_space<vmem>>, vector<1x8x256xbf16>
    %261 = vector.shape_cast %260 : vector<1x8x256xbf16> to vector<8x256xbf16>
    %262 = arith.mulf %261, %8 : vector<8x256xbf16>
    %c248_269 = arith.constant 248 : index
    %c256_270 = arith.constant 256 : index
    %263 = vector.load %arg7[%c248_269, %c256_270] : memref<328x512xbf16, #tpu.memory_space<vmem>>, vector<8x256xbf16>
    tpu.vector_store %arg7[%c248_269, %c256_270], %262 {strides = array<i32>} : memref<328x512xbf16, #tpu.memory_space<vmem>>, vector<8x256xbf16>,
    %c0_271 = arith.constant 0 : index
    %c0_272 = arith.constant 0 : index
    %c100 = arith.constant 100 : index
    %264 = vector.load %arg2[%c0_271, %c0_272, %c100] : memref<2x8x392xbf16, #tpu.memory_space<vmem>>, vector<1x8x256xbf16>
    %265 = vector.shape_cast %264 : vector<1x8x256xbf16> to vector<8x256xbf16>
    %c256_273 = arith.constant 256 : index
    %c0_274 = arith.constant 0 : index
    %266 = vector.load %arg7[%c256_273, %c0_274] : memref<328x512xbf16, #tpu.memory_space<vmem>>, vector<8x256xbf16>
    tpu.vector_store %arg7[%c256_273, %c0_274], %265 {strides = array<i32>} : memref<328x512xbf16, #tpu.memory_space<vmem>>, vector<8x256xbf16>,
    %c1_275 = arith.constant 1 : index
    %c0_276 = arith.constant 0 : index
    %c100_277 = arith.constant 100 : index
    %267 = vector.load %arg2[%c1_275, %c0_276, %c100_277] : memref<2x8x392xbf16, #tpu.memory_space<vmem>>, vector<1x8x256xbf16>
    %268 = vector.shape_cast %267 : vector<1x8x256xbf16> to vector<8x256xbf16>
    %c256_278 = arith.constant 256 : index
    %c256_279 = arith.constant 256 : index
    %269 = vector.load %arg7[%c256_278, %c256_279] : memref<328x512xbf16, #tpu.memory_space<vmem>>, vector<8x256xbf16>
    tpu.vector_store %arg7[%c256_278, %c256_279], %268 {strides = array<i32>} : memref<328x512xbf16, #tpu.memory_space<vmem>>, vector<8x256xbf16>,
    %c0_280 = arith.constant 0 : index
    %c0_281 = arith.constant 0 : index
    %c101 = arith.constant 101 : index
    %270 = vector.load %arg2[%c0_280, %c0_281, %c101] : memref<2x8x392xbf16, #tpu.memory_space<vmem>>, vector<1x8x256xbf16>
    %271 = vector.shape_cast %270 : vector<1x8x256xbf16> to vector<8x256xbf16>
    %272 = arith.mulf %271, %11 : vector<8x256xbf16>
    %c264 = arith.constant 264 : index
    %c0_282 = arith.constant 0 : index
    %273 = vector.load %arg7[%c264, %c0_282] : memref<328x512xbf16, #tpu.memory_space<vmem>>, vector<8x256xbf16>
    tpu.vector_store %arg7[%c264, %c0_282], %272 {strides = array<i32>} : memref<328x512xbf16, #tpu.memory_space<vmem>>, vector<8x256xbf16>,
    %c1_283 = arith.constant 1 : index
    %c0_284 = arith.constant 0 : index
    %c101_285 = arith.constant 101 : index
    %274 = vector.load %arg2[%c1_283, %c0_284, %c101_285] : memref<2x8x392xbf16, #tpu.memory_space<vmem>>, vector<1x8x256xbf16>
    %275 = vector.shape_cast %274 : vector<1x8x256xbf16> to vector<8x256xbf16>
    %276 = arith.mulf %275, %11 : vector<8x256xbf16>
    %c264_286 = arith.constant 264 : index
    %c256_287 = arith.constant 256 : index
    %277 = vector.load %arg7[%c264_286, %c256_287] : memref<328x512xbf16, #tpu.memory_space<vmem>>, vector<8x256xbf16>
    tpu.vector_store %arg7[%c264_286, %c256_287], %276 {strides = array<i32>} : memref<328x512xbf16, #tpu.memory_space<vmem>>, vector<8x256xbf16>,
    %c0_288 = arith.constant 0 : index
    %c0_289 = arith.constant 0 : index
    %c102 = arith.constant 102 : index
    %278 = vector.load %arg2[%c0_288, %c0_289, %c102] : memref<2x8x392xbf16, #tpu.memory_space<vmem>>, vector<1x8x256xbf16>
    %279 = vector.shape_cast %278 : vector<1x8x256xbf16> to vector<8x256xbf16>
    %280 = arith.mulf %279, %14 : vector<8x256xbf16>
    %c272 = arith.constant 272 : index
    %c0_290 = arith.constant 0 : index
    %281 = vector.load %arg7[%c272, %c0_290] : memref<328x512xbf16, #tpu.memory_space<vmem>>, vector<8x256xbf16>
    tpu.vector_store %arg7[%c272, %c0_290], %280 {strides = array<i32>} : memref<328x512xbf16, #tpu.memory_space<vmem>>, vector<8x256xbf16>,
    %c1_291 = arith.constant 1 : index
    %c0_292 = arith.constant 0 : index
    %c102_293 = arith.constant 102 : index
    %282 = vector.load %arg2[%c1_291, %c0_292, %c102_293] : memref<2x8x392xbf16, #tpu.memory_space<vmem>>, vector<1x8x256xbf16>
    %283 = vector.shape_cast %282 : vector<1x8x256xbf16> to vector<8x256xbf16>
    %284 = arith.mulf %283, %14 : vector<8x256xbf16>
    %c272_294 = arith.constant 272 : index
    %c256_295 = arith.constant 256 : index
    %285 = vector.load %arg7[%c272_294, %c256_295] : memref<328x512xbf16, #tpu.memory_space<vmem>>, vector<8x256xbf16>
    tpu.vector_store %arg7[%c272_294, %c256_295], %284 {strides = array<i32>} : memref<328x512xbf16, #tpu.memory_space<vmem>>, vector<8x256xbf16>,
    %c0_296 = arith.constant 0 : index
    %c0_297 = arith.constant 0 : index
    %c104_298 = arith.constant 104 : index
    %286 = vector.load %arg2[%c0_296, %c0_297, %c104_298] : memref<2x8x392xbf16, #tpu.memory_space<vmem>>, vector<1x8x256xbf16>
    %287 = vector.shape_cast %286 : vector<1x8x256xbf16> to vector<8x256xbf16>
    %288 = arith.mulf %287, %17 : vector<8x256xbf16>
    %c280 = arith.constant 280 : index
    %c0_299 = arith.constant 0 : index
    %289 = vector.load %arg7[%c280, %c0_299] : memref<328x512xbf16, #tpu.memory_space<vmem>>, vector<8x256xbf16>
    tpu.vector_store %arg7[%c280, %c0_299], %288 {strides = array<i32>} : memref<328x512xbf16, #tpu.memory_space<vmem>>, vector<8x256xbf16>,
    %c1_300 = arith.constant 1 : index
    %c0_301 = arith.constant 0 : index
    %c104_302 = arith.constant 104 : index
    %290 = vector.load %arg2[%c1_300, %c0_301, %c104_302] : memref<2x8x392xbf16, #tpu.memory_space<vmem>>, vector<1x8x256xbf16>
    %291 = vector.shape_cast %290 : vector<1x8x256xbf16> to vector<8x256xbf16>
    %292 = arith.mulf %291, %17 : vector<8x256xbf16>
    %c280_303 = arith.constant 280 : index
    %c256_304 = arith.constant 256 : index
    %293 = vector.load %arg7[%c280_303, %c256_304] : memref<328x512xbf16, #tpu.memory_space<vmem>>, vector<8x256xbf16>
    tpu.vector_store %arg7[%c280_303, %c256_304], %292 {strides = array<i32>} : memref<328x512xbf16, #tpu.memory_space<vmem>>, vector<8x256xbf16>,
    %c0_305 = arith.constant 0 : index
    %c0_306 = arith.constant 0 : index
    %c128_307 = arith.constant 128 : index
    %294 = vector.load %arg2[%c0_305, %c0_306, %c128_307] : memref<2x8x392xbf16, #tpu.memory_space<vmem>>, vector<1x8x256xbf16>
    %295 = vector.shape_cast %294 : vector<1x8x256xbf16> to vector<8x256xbf16>
    %296 = arith.mulf %295, %2 : vector<8x256xbf16>
    %c288 = arith.constant 288 : index
    %c0_308 = arith.constant 0 : index
    %297 = vector.load %arg7[%c288, %c0_308] : memref<328x512xbf16, #tpu.memory_space<vmem>>, vector<8x256xbf16>
    tpu.vector_store %arg7[%c288, %c0_308], %296 {strides = array<i32>} : memref<328x512xbf16, #tpu.memory_space<vmem>>, vector<8x256xbf16>,
    %c1_309 = arith.constant 1 : index
    %c0_310 = arith.constant 0 : index
    %c128_311 = arith.constant 128 : index
    %298 = vector.load %arg2[%c1_309, %c0_310, %c128_311] : memref<2x8x392xbf16, #tpu.memory_space<vmem>>, vector<1x8x256xbf16>
    %299 = vector.shape_cast %298 : vector<1x8x256xbf16> to vector<8x256xbf16>
    %300 = arith.mulf %299, %2 : vector<8x256xbf16>
    %c288_312 = arith.constant 288 : index
    %c256_313 = arith.constant 256 : index
    %301 = vector.load %arg7[%c288_312, %c256_313] : memref<328x512xbf16, #tpu.memory_space<vmem>>, vector<8x256xbf16>
    tpu.vector_store %arg7[%c288_312, %c256_313], %300 {strides = array<i32>} : memref<328x512xbf16, #tpu.memory_space<vmem>>, vector<8x256xbf16>,
    %c0_314 = arith.constant 0 : index
    %c0_315 = arith.constant 0 : index
    %c130 = arith.constant 130 : index
    %302 = vector.load %arg2[%c0_314, %c0_315, %c130] : memref<2x8x392xbf16, #tpu.memory_space<vmem>>, vector<1x8x256xbf16>
    %303 = vector.shape_cast %302 : vector<1x8x256xbf16> to vector<8x256xbf16>
    %304 = arith.mulf %303, %5 : vector<8x256xbf16>
    %c296 = arith.constant 296 : index
    %c0_316 = arith.constant 0 : index
    %305 = vector.load %arg7[%c296, %c0_316] : memref<328x512xbf16, #tpu.memory_space<vmem>>, vector<8x256xbf16>
    tpu.vector_store %arg7[%c296, %c0_316], %304 {strides = array<i32>} : memref<328x512xbf16, #tpu.memory_space<vmem>>, vector<8x256xbf16>,
    %c1_317 = arith.constant 1 : index
    %c0_318 = arith.constant 0 : index
    %c130_319 = arith.constant 130 : index
    %306 = vector.load %arg2[%c1_317, %c0_318, %c130_319] : memref<2x8x392xbf16, #tpu.memory_space<vmem>>, vector<1x8x256xbf16>
    %307 = vector.shape_cast %306 : vector<1x8x256xbf16> to vector<8x256xbf16>
    %308 = arith.mulf %307, %5 : vector<8x256xbf16>
    %c296_320 = arith.constant 296 : index
    %c256_321 = arith.constant 256 : index
    %309 = vector.load %arg7[%c296_320, %c256_321] : memref<328x512xbf16, #tpu.memory_space<vmem>>, vector<8x256xbf16>
    tpu.vector_store %arg7[%c296_320, %c256_321], %308 {strides = array<i32>} : memref<328x512xbf16, #tpu.memory_space<vmem>>, vector<8x256xbf16>,
    %c0_322 = arith.constant 0 : index
    %c0_323 = arith.constant 0 : index
    %c132 = arith.constant 132 : index
    %310 = vector.load %arg2[%c0_322, %c0_323, %c132] : memref<2x8x392xbf16, #tpu.memory_space<vmem>>, vector<1x8x256xbf16>
    %311 = vector.shape_cast %310 : vector<1x8x256xbf16> to vector<8x256xbf16>
    %c304 = arith.constant 304 : index
    %c0_324 = arith.constant 0 : index
    %312 = vector.load %arg7[%c304, %c0_324] : memref<328x512xbf16, #tpu.memory_space<vmem>>, vector<8x256xbf16>
    tpu.vector_store %arg7[%c304, %c0_324], %311 {strides = array<i32>} : memref<328x512xbf16, #tpu.memory_space<vmem>>, vector<8x256xbf16>,
    %c1_325 = arith.constant 1 : index
    %c0_326 = arith.constant 0 : index
    %c132_327 = arith.constant 132 : index
    %313 = vector.load %arg2[%c1_325, %c0_326, %c132_327] : memref<2x8x392xbf16, #tpu.memory_space<vmem>>, vector<1x8x256xbf16>
    %314 = vector.shape_cast %313 : vector<1x8x256xbf16> to vector<8x256xbf16>
    %c304_328 = arith.constant 304 : index
    %c256_329 = arith.constant 256 : index
    %315 = vector.load %arg7[%c304_328, %c256_329] : memref<328x512xbf16, #tpu.memory_space<vmem>>, vector<8x256xbf16>
    tpu.vector_store %arg7[%c304_328, %c256_329], %314 {strides = array<i32>} : memref<328x512xbf16, #tpu.memory_space<vmem>>, vector<8x256xbf16>,
    %c0_330 = arith.constant 0 : index
    %c0_331 = arith.constant 0 : index
    %c134 = arith.constant 134 : index
    %316 = vector.load %arg2[%c0_330, %c0_331, %c134] : memref<2x8x392xbf16, #tpu.memory_space<vmem>>, vector<1x8x256xbf16>
    %317 = vector.shape_cast %316 : vector<1x8x256xbf16> to vector<8x256xbf16>
    %318 = arith.mulf %317, %14 : vector<8x256xbf16>
    %c312 = arith.constant 312 : index
    %c0_332 = arith.constant 0 : index
    %319 = vector.load %arg7[%c312, %c0_332] : memref<328x512xbf16, #tpu.memory_space<vmem>>, vector<8x256xbf16>
    tpu.vector_store %arg7[%c312, %c0_332], %318 {strides = array<i32>} : memref<328x512xbf16, #tpu.memory_space<vmem>>, vector<8x256xbf16>,
    %c1_333 = arith.constant 1 : index
    %c0_334 = arith.constant 0 : index
    %c134_335 = arith.constant 134 : index
    %320 = vector.load %arg2[%c1_333, %c0_334, %c134_335] : memref<2x8x392xbf16, #tpu.memory_space<vmem>>, vector<1x8x256xbf16>
    %321 = vector.shape_cast %320 : vector<1x8x256xbf16> to vector<8x256xbf16>
    %322 = arith.mulf %321, %14 : vector<8x256xbf16>
    %c312_336 = arith.constant 312 : index
    %c256_337 = arith.constant 256 : index
    %323 = vector.load %arg7[%c312_336, %c256_337] : memref<328x512xbf16, #tpu.memory_space<vmem>>, vector<8x256xbf16>
    tpu.vector_store %arg7[%c312_336, %c256_337], %322 {strides = array<i32>} : memref<328x512xbf16, #tpu.memory_space<vmem>>, vector<8x256xbf16>,
    %c0_338 = arith.constant 0 : index
    %c0_339 = arith.constant 0 : index
    %c136_340 = arith.constant 136 : index
    %324 = vector.load %arg2[%c0_338, %c0_339, %c136_340] : memref<2x8x392xbf16, #tpu.memory_space<vmem>>, vector<1x8x256xbf16>
    %325 = vector.shape_cast %324 : vector<1x8x256xbf16> to vector<8x256xbf16>
    %326 = arith.mulf %325, %17 : vector<8x256xbf16>
    %c320 = arith.constant 320 : index
    %c0_341 = arith.constant 0 : index
    %327 = vector.load %arg7[%c320, %c0_341] : memref<328x512xbf16, #tpu.memory_space<vmem>>, vector<8x256xbf16>
    tpu.vector_store %arg7[%c320, %c0_341], %326 {strides = array<i32>} : memref<328x512xbf16, #tpu.memory_space<vmem>>, vector<8x256xbf16>,
    %c1_342 = arith.constant 1 : index
    %c0_343 = arith.constant 0 : index
    %c136_344 = arith.constant 136 : index
    %328 = vector.load %arg2[%c1_342, %c0_343, %c136_344] : memref<2x8x392xbf16, #tpu.memory_space<vmem>>, vector<1x8x256xbf16>
    %329 = vector.shape_cast %328 : vector<1x8x256xbf16> to vector<8x256xbf16>
    %330 = arith.mulf %329, %17 : vector<8x256xbf16>
    %c320_345 = arith.constant 320 : index
    %c256_346 = arith.constant 256 : index
    %331 = vector.load %arg7[%c320_345, %c256_346] : memref<328x512xbf16, #tpu.memory_space<vmem>>, vector<8x256xbf16>
    tpu.vector_store %arg7[%c320_345, %c256_346], %330 {strides = array<i32>} : memref<328x512xbf16, #tpu.memory_space<vmem>>, vector<8x256xbf16>,
    %c0_347 = arith.constant 0 : index
    %c0_348 = arith.constant 0 : index
    %332 = vector.load %arg1[%c0_347, %c0_348] : memref<8x328xbf16, #tpu.memory_space<vmem>>, vector<8x328xbf16>
    %c0_349 = arith.constant 0 : index
    %c0_350 = arith.constant 0 : index
    %333 = vector.load %arg7[%c0_349, %c0_350] : memref<328x512xbf16, #tpu.memory_space<vmem>>, vector<328x512xbf16>
    %cst = arith.constant dense<0.000000e+00> : vector<8x512xf32>
    %334 = tpu.matmul %332, %333, %cst {dimension_numbers = #tpu.dot_dimension_numbers<[1], [0], [0], [1], [0, 0, 1, 1], [], []>} : vector<8x328xbf16>, vector<328x512xbf16>, vector<8x512xf32> -> vector<8x512xf32>
    %c0_351 = arith.constant 0 : index
    %c0_352 = arith.constant 0 : index
    %335 = vector.load %arg5[%c0_351, %c0_352] : memref<36x256xbf16, #tpu.memory_space<vmem>>, vector<36x256xbf16>
    %c0_353 = arith.constant 0 : index
    %c0_354 = arith.constant 0 : index
    %c0_355 = arith.constant 0 : index
    %336 = vector.load %arg3[%c0_353, %c0_354, %c0_355] : memref<2x8x36xbf16, #tpu.memory_space<vmem>>, vector<1x8x36xbf16>
    %337 = vector.shape_cast %336 : vector<1x8x36xbf16> to vector<8x36xbf16>
    %cst_356 = arith.constant dense<0.000000e+00> : vector<8x256xf32>
    %338 = tpu.matmul %337, %335, %cst_356 {dimension_numbers = #tpu.dot_dimension_numbers<[1], [0], [0], [1], [0, 0, 1, 1], [], []>} : vector<8x36xbf16>, vector<36x256xbf16>, vector<8x256xf32> -> vector<8x256xf32>
    %339 = vector.extract_strided_slice %334 {offsets = [0, 0], sizes = [8, 256], strides = [1, 1]} : vector<8x512xf32> to vector<8x256xf32>
    %340 = arith.addf %339, %338 : vector<8x256xf32>
    %c0_357 = arith.constant 0 : index
    %c0_358 = arith.constant 0 : index
    %c0_359 = arith.constant 0 : index
    %341 = vector.load %arg6[%c0_357, %c0_358, %c0_359] : memref<2x8x256xf32, #tpu.memory_space<vmem>>, vector<1x8x256xf32>
    %342 = vector.shape_cast %341 : vector<1x8x256xf32> to vector<8x256xf32>
    %343 = vector.shape_cast %340 : vector<8x256xf32> to vector<1x8x256xf32>
    tpu.vector_store %arg6[%c0_357, %c0_358, %c0_359], %343 {strides = array<i32>} : memref<2x8x256xf32, #tpu.memory_space<vmem>>, vector<1x8x256xf32>,
    %c1_360 = arith.constant 1 : index
    %c0_361 = arith.constant 0 : index
    %c0_362 = arith.constant 0 : index
    %344 = vector.load %arg3[%c1_360, %c0_361, %c0_362] : memref<2x8x36xbf16, #tpu.memory_space<vmem>>, vector<1x8x36xbf16>
    %345 = vector.shape_cast %344 : vector<1x8x36xbf16> to vector<8x36xbf16>
    %cst_363 = arith.constant dense<0.000000e+00> : vector<8x256xf32>
    %346 = tpu.matmul %345, %335, %cst_363 {dimension_numbers = #tpu.dot_dimension_numbers<[1], [0], [0], [1], [0, 0, 1, 1], [], []>} : vector<8x36xbf16>, vector<36x256xbf16>, vector<8x256xf32> -> vector<8x256xf32>
    %347 = vector.extract_strided_slice %334 {offsets = [0, 256], sizes = [8, 256], strides = [1, 1]} : vector<8x512xf32> to vector<8x256xf32>
    %348 = arith.addf %347, %346 : vector<8x256xf32>
    %c1_364 = arith.constant 1 : index
    %c0_365 = arith.constant 0 : index
    %c0_366 = arith.constant 0 : index
    %349 = vector.load %arg6[%c1_364, %c0_365, %c0_366] : memref<2x8x256xf32, #tpu.memory_space<vmem>>, vector<1x8x256xf32>
    %350 = vector.shape_cast %349 : vector<1x8x256xf32> to vector<8x256xf32>
    %351 = vector.shape_cast %348 : vector<8x256xf32> to vector<1x8x256xf32>
    tpu.vector_store %arg6[%c1_364, %c0_365, %c0_366], %351 {strides = array<i32>} : memref<2x8x256xf32, #tpu.memory_space<vmem>>, vector<1x8x256xf32>,
    return
  }
  func.func @transform_0(%arg0: i32) -> (i32, i32) {
    %c0_i32 = arith.constant 0 : i32
    %c0_i32_0 = arith.constant 0 : i32
    %c0_i32_1 = arith.constant 0 : i32
    return %c0_i32, %c0_i32_0 : i32, i32
  }
  func.func @transform_1(%arg0: i32) -> (i32, i32, i32) {
    %c0_i32 = arith.constant 0 : i32
    %c0_i32_0 = arith.constant 0 : i32
    %c0_i32_1 = arith.constant 0 : i32
    return %arg0, %c0_i32, %c0_i32_0 : i32, i32, i32
  }
  func.func @transform_2(%arg0: i32) -> (i32, i32, i32) {
    %c0_i32 = arith.constant 0 : i32
    %c0_i32_0 = arith.constant 0 : i32
    %c0_i32_1 = arith.constant 0 : i32
    return %arg0, %c0_i32, %c0_i32_0 : i32, i32, i32
  }
  func.func @transform_3(%arg0: i32) -> (i32, i32) {
    %c0_i32 = arith.constant 0 : i32
    %c0_i32_0 = arith.constant 0 : i32
    %c0_i32_1 = arith.constant 0 : i32
    return %c0_i32, %c0_i32_0 : i32, i32
  }
  func.func @transform_4(%arg0: i32) -> (i32, i32) {
    %c0_i32 = arith.constant 0 : i32
    %c0_i32_0 = arith.constant 0 : i32
    %c0_i32_1 = arith.constant 0 : i32
    return %c0_i32, %c0_i32_0 : i32, i32
  }
  func.func @transform_5(%arg0: i32) -> (i32, i32, i32) {
    %c0_i32 = arith.constant 0 : i32
    %c0_i32_0 = arith.constant 0 : i32
    %c0_i32_1 = arith.constant 0 : i32
    return %arg0, %c0_i32, %c0_i32_0 : i32, i32, i32
  }
}

</mosaic_0001>

<llo_original>
// kernel: darts_forward.1
$region0: #{darts_forward.1}
  #allocation0 [shape = 'u32[]', space=smem, size = 0x4, offset = 0x4, fixed_abs, tag = 'smem constant byte address 0x4 - core index']
  #allocation1 [shape = 'u32[144,128]{1,0:T(1,128)}', space=vmem, size = 0x12000, scoped, tag = 'internal scratch']
  #allocation2 [shape = 'bf16[328,512]{1,0:T(8,128)(2,1)}', space=vmem, size = 0x52000, scoped, tag = 'scratch operand']
  %s0 = inlined_call_operand.vmem [shape: bf16[8,328], index: 0, kind: input, shape index: {}]
  %s1 = inlined_call_operand.vmem [shape: bf16[4,8,392], index: 1, kind: input, shape index: {}]
  %s2 = inlined_call_operand.vmem [shape: bf16[4,8,36], index: 2, kind: input, shape index: {}]
  %s3 = inlined_call_operand.vmem [shape: bf16[9,256], index: 3, kind: input, shape index: {}]
  %s4 = inlined_call_operand.vmem [shape: bf16[36,256], index: 4, kind: input, shape index: {}]
  %s5 = inlined_call_operand.vmem [shape: f32[4,8,256], index: 5, kind: output, shape index: {}]
  %s6 = sld [smem:[#allocation0]]
  $region53: #{darts_forward.1} parent=0
    _
  %s8 = ssub.s32 1, %s6
  %s9 = scalar_select 0, %s8, %s6
  loop: start=0, step=1, limit=4
  $region2: #{darts_forward.1} parent=0 // loop_pre_header
    _
  $region3: #{darts_forward.1} parent=0 // loop_header
    %s11 = sphi 0, %s15
    %p12 = scmp.ge.s32.totalorder %s11, 4
    %s19 = sphi 0, %s19
    %s21 = sphi 0, %s19
    %s22 = sphi 0, %s21
    %s36 = sphi 0, %s22
    %s42 = sphi 0, %s44
    %s45 = sphi 0, %s42
    %s46 = sphi 0, %s45
    %s62 = sphi 0, %s46
    %s68 = sphi 0, %s70
    %s71 = sphi 0, %s68
    %s72 = sphi 0, %s71
    %s88 = sphi 0, %s72
    %s92 = sphi 0, %s92
    %s94 = sphi 0, %s92
    %s95 = sphi 0, %s94
    %s109 = sphi 0, %s95
    %s113 = sphi 0, %s113
    %s115 = sphi 0, %s113
    %s116 = sphi 0, %s115
    %s130 = sphi 0, %s116
    %s136 = sphi 0, %s138
    %s139 = sphi 0, %s136
    %s140 = sphi 0, %s139
    %s156 = sphi 0, %s140
  $region4: #{darts_forward.1} parent=0 // loop_header_branch
    %14 = sbr.rel (%p12) target = $region8
  $region5: #{darts_forward.1} parent=0 // loop_body
    %s16 = ssub.s32 %s11, 1
    %s17 = ssub.s32 %s11, 2
    %s18 = sadd.s32 %s11, 1
    %s20 = sadd.s32 %s19, 1
    %p23 = scmp.eq.s32.totalorder %s11, 1
    %p24 = scmp.ne.s32.totalorder %s19, %s21
    %p25 = scmp.eq.s32.totalorder %s11, 0
    %p26 = por %p24, %p25
    %p27 = scmp.ne.s32.totalorder %s19, %s21
    %p28 = scmp.eq.s32.totalorder %s16, 1
    %p29 = por %p27, %p28
    %p30 = scmp.ne.s32.totalorder %s21, %s22
    %p31 = scmp.eq.s32.totalorder %s16, 0
    %p32 = por %p30, %p31
    %p33 = scmp.ne.s32.totalorder %s21, %s22
    %p34 = scmp.eq.s32.totalorder %s17, 1
    %p35 = por %p33, %p34
    %p37 = scmp.ne.s32.totalorder %s22, %s36
    %p38 = scmp.eq.s32.totalorder %s17, 0
    %p39 = por %p37, %p38
    %s40 = ssub.s32 %s11, %s18
    %p41 = scmp.eq.s32.totalorder %s40, 0
    %s43 = sadd.s32 %s42, 1
    %s44 = scalar_select %p41, %s42, %s43
    %p47 = pneg %p41
    %p48 = scmp.eq.s32.totalorder %s11, 1
    %p49 = por %p47, %p48
    %p50 = scmp.ne.s32.totalorder %s42, %s45
    %p51 = scmp.eq.s32.totalorder %s11, 0
    %p52 = por %p50, %p51
    %p53 = scmp.ne.s32.totalorder %s42, %s45
    %p54 = scmp.eq.s32.totalorder %s16, 1
    %p55 = por %p53, %p54
    %p56 = scmp.ne.s32.totalorder %s45, %s46
    %p57 = scmp.eq.s32.totalorder %s16, 0
    %p58 = por %p56, %p57
    %p59 = scmp.ne.s32.totalorder %s45, %s46
    %p60 = scmp.eq.s32.totalorder %s17, 1
    %p61 = por %p59, %p60
    %p63 = scmp.ne.s32.totalorder %s46, %s62
    %p64 = scmp.eq.s32.totalorder %s17, 0
    %p65 = por %p63, %p64
    %s66 = ssub.s32 %s11, %s18
    %p67 = scmp.eq.s32.totalorder %s66, 0
    %s69 = sadd.s32 %s68, 1
    %s70 = scalar_select %p67, %s68, %s69
    %p73 = pneg %p67
    %p74 = scmp.eq.s32.totalorder %s11, 1
    %p75 = por %p73, %p74
    %p76 = scmp.ne.s32.totalorder %s68, %s71
    %p77 = scmp.eq.s32.totalorder %s11, 0
    %p78 = por %p76, %p77
    %p79 = scmp.ne.s32.totalorder %s68, %s71
    %p80 = scmp.eq.s32.totalorder %s16, 1
    %p81 = por %p79, %p80
    %p82 = scmp.ne.s32.totalorder %s71, %s72
    %p83 = scmp.eq.s32.totalorder %s16, 0
    %p84 = por %p82, %p83
    %p85 = scmp.ne.s32.totalorder %s71, %s72
    %p86 = scmp.eq.s32.totalorder %s17, 1
    %p87 = por %p85, %p86
    %p89 = scmp.ne.s32.totalorder %s72, %s88
    %p90 = scmp.eq.s32.totalorder %s17, 0
    %p91 = por %p89, %p90
    %s93 = sadd.s32 %s92, 1
    %p96 = scmp.eq.s32.totalorder %s11, 1
    %p97 = scmp.ne.s32.totalorder %s92, %s94
    %p98 = scmp.eq.s32.totalorder %s11, 0
    %p99 = por %p97, %p98
    %p100 = scmp.ne.s32.totalorder %s92, %s94
    %p101 = scmp.eq.s32.totalorder %s16, 1
    %p102 = por %p100, %p101
    %p103 = scmp.ne.s32.totalorder %s94, %s95
    %p104 = scmp.eq.s32.totalorder %s16, 0
    %p105 = por %p103, %p104
    %p106 = scmp.ne.s32.totalorder %s94, %s95
    %p107 = scmp.eq.s32.totalorder %s17, 1
    %p108 = por %p106, %p107
    %p110 = scmp.ne.s32.totalorder %s95, %s109
    %p111 = scmp.eq.s32.totalorder %s17, 0
    %p112 = por %p110, %p111
    %s114 = sadd.s32 %s113, 1
    %p117 = scmp.eq.s32.totalorder %s11, 1
    %p118 = scmp.ne.s32.totalorder %s113, %s115
    %p119 = scmp.eq.s32.totalorder %s11, 0
    %p120 = por %p118, %p119
    %p121 = scmp.ne.s32.totalorder %s113, %s115
    %p122 = scmp.eq.s32.totalorder %s16, 1
    %p123 = por %p121, %p122
    %p124 = scmp.ne.s32.totalorder %s115, %s116
    %p125 = scmp.eq.s32.totalorder %s16, 0
    %p126 = por %p124, %p125
    %p127 = scmp.ne.s32.totalorder %s115, %s116
    %p128 = scmp.eq.s32.totalorder %s17, 1
    %p129 = por %p127, %p128
    %p131 = scmp.ne.s32.totalorder %s116, %s130
    %p132 = scmp.eq.s32.totalorder %s17, 0
    %p133 = por %p131, %p132
    %s134 = ssub.s32 %s11, %s18
    %p135 = scmp.eq.s32.totalorder %s134, 0
    %s137 = sadd.s32 %s136, 1
    %s138 = scalar_select %p135, %s136, %s137
    %p141 = pneg %p135
    %p142 = scmp.eq.s32.totalorder %s11, 1
    %p143 = por %p141, %p142
    %p144 = scmp.ne.s32.totalorder %s136, %s139
    %p145 = scmp.eq.s32.totalorder %s11, 0
    %p146 = por %p144, %p145
    %p147 = scmp.ne.s32.totalorder %s136, %s139
    %p148 = scmp.eq.s32.totalorder %s16, 1
    %p149 = por %p147, %p148
    %p150 = scmp.ne.s32.totalorder %s139, %s140
    %p151 = scmp.eq.s32.totalorder %s16, 0
    %p152 = por %p150, %p151
    %p153 = scmp.ne.s32.totalorder %s139, %s140
    %p154 = scmp.eq.s32.totalorder %s17, 1
    %p155 = por %p153, %p154
    %p157 = scmp.ne.s32.totalorder %s140, %s156
    %p158 = scmp.eq.s32.totalorder %s17, 0
    %p159 = por %p157, %p158
    %p160 = scmp.le.s32.totalorder 1, %s11
    %p161 = scmp.lt.s32.totalorder %s11, 3
    %p162 = pnand %p160, %p161
    %p163 = pneg %p162
    // Predicated region
    $region9: #{darts_forward.1} parent=5 // pred_check
      _
    $region10: #{darts_forward.1} parent=5 // pred_check_branch
      %165 = sbr.rel (%p162) target = $region12
    $region11: #{darts_forward.1} parent=5 // pred_region
      %s166 = ssub.s32 %s11, 1
      // Predicated region
      $region13: #{darts_forward.1} parent=11 // pred_check
        %p167 = pneg %p32
      $region14: #{darts_forward.1} parent=11 // pred_check_branch
        %169 = sbr.rel (%p167) target = $region16
      $region15: #{darts_forward.1} parent=11 // pred_region
        _
      $region16: #{darts_forward.1} parent=11 // pred_fallthru
        _
      // Predicated region
      $region17: #{darts_forward.1} parent=11 // pred_check
        %p170 = pneg %p105
      $region18: #{darts_forward.1} parent=11 // pred_check_branch
        %172 = sbr.rel (%p170) target = $region20
      $region19: #{darts_forward.1} parent=11 // pred_region
        _
      $region20: #{darts_forward.1} parent=11 // pred_fallthru
        _
      // Predicated region
      $region21: #{darts_forward.1} parent=11 // pred_check
        %p173 = pneg %p126
      $region22: #{darts_forward.1} parent=11 // pred_check_branch
        %175 = sbr.rel (%p173) target = $region24
      $region23: #{darts_forward.1} parent=11 // pred_region
        _
      $region24: #{darts_forward.1} parent=11 // pred_fallthru
        _
    $region12: #{darts_forward.1} parent=5 // pred_fallthru
      _
    %p176 = scmp.lt.s32.totalorder %s11, 2
    // Predicated region
    $region25: #{darts_forward.1} parent=5 // pred_check
      %p177 = pneg %p176
    $region26: #{darts_forward.1} parent=5 // pred_check_branch
      %179 = sbr.rel (%p177) target = $region28
    $region27: #{darts_forward.1} parent=5 // pred_region
      // Predicated region
      $region29: #{darts_forward.1} parent=27 // pred_check
        %p180 = pneg %p52
      $region30: #{darts_forward.1} parent=27 // pred_check_branch
        %182 = sbr.rel (%p180) target = $region32
      $region31: #{darts_forward.1} parent=27 // pred_region
        %s183 = smul.u32 2, %s11
        %p184 = scmp.lt.s32.totalorder %s183, 3
        %s185 = scalar_select %p184, %s183, 3
        %s186 = smul.addr %s185, 4
        %s187 = smul.addr %s186, 4
        %s188 = scalar_lea.vmem %s1, %s187
        %s189 = smul.u32 2, %s11
      $region32: #{darts_forward.1} parent=27 // pred_fallthru
        _
      // Predicated region
      $region33: #{darts_forward.1} parent=27 // pred_check
        %p190 = pneg %p78
      $region34: #{darts_forward.1} parent=27 // pred_check_branch
        %192 = sbr.rel (%p190) target = $region36
      $region35: #{darts_forward.1} parent=27 // pred_region
        %s193 = smul.u32 2, %s11
        %p194 = scmp.lt.s32.totalorder %s193, 3
        %s195 = scalar_select %p194, %s193, 3
        %s196 = smul.addr %s195, 4
        %s197 = scalar_lea.vmem %s2, %s196
        %s198 = smul.u32 2, %s11
      $region36: #{darts_forward.1} parent=27 // pred_fallthru
        _
    $region28: #{darts_forward.1} parent=5 // pred_fallthru
      _
    %p199 = scmp.le.s32.totalorder 1, %s11
    %p200 = scmp.lt.s32.totalorder %s11, 3
    %p201 = pnand %p199, %p200
    %p202 = pneg %p201
    // Predicated region
    $region37: #{darts_forward.1} parent=5 // pred_check
      _
    $region38: #{darts_forward.1} parent=5 // pred_check_branch
      %204 = sbr.rel (%p201) target = $region40
    $region39: #{darts_forward.1} parent=5 // pred_region
      %s205 = ssub.s32 %s11, 1
      %p206 = pneg %p32
      %p207 = pneg %p29
      %s208 = smul.u32 2, %s16
      %p209 = scmp.lt.s32.totalorder %s208, 3
      %s210 = scalar_select %p209, %s208, 3
      %s211 = smul.addr %s210, 4
      %s212 = smul.addr %s211, 4
      %s213 = scalar_lea.vmem %s1, %s212
      %p214 = pneg %p58
      %p215 = pneg %p55
      %s216 = smul.u32 2, %s16
      %p217 = scmp.lt.s32.totalorder %s216, 3
      %s218 = scalar_select %p217, %s216, 3
      %s219 = smul.addr %s218, 4
      %s220 = scalar_lea.vmem %s2, %s219
      %p221 = pneg %p84
      %p222 = pneg %p81
      %p223 = pneg %p105
      %p224 = pneg %p102
      %p225 = pneg %p126
      %p226 = pneg %p123
      %p227 = pneg %p152
      %p228 = pneg %p149
      %s229 = smul.u32 2, %s16
      %p230 = scmp.lt.s32.totalorder %s229, 3
      %s231 = scalar_select %p230, %s229, 3
      %s232 = smul.addr %s231, 2
      %s233 = smul.addr %s232, 8
      %s234 = scalar_lea.vmem %s5, %s233
      %s235 = smul.u32 2, %s16
      %p236 = scmp.lt.s32.totalorder %s235, 3
      %s237 = scalar_select %p236, %s235, 3
      %s238 = smul.addr %s237, 4
      %s239 = smul.addr %s238, 4
      %s240 = scalar_lea.vmem %s1, %s239
      %s241 = smul.u32 2, %s16
      %s242 = smul.u32 2, %s16
      %p243 = scmp.lt.s32.totalorder %s242, 3
      %s244 = scalar_select %p243, %s242, 3
      %s245 = smul.addr %s244, 4
      %s246 = scalar_lea.vmem %s2, %s245
      %s247 = smul.u32 2, %s16
      %s248 = smul.u32 2, %s16
      %p249 = scmp.lt.s32.totalorder %s248, 3
      %s250 = scalar_select %p249, %s248, 3
      %s251 = smul.addr %s250, 2
      %s252 = smul.addr %s251, 8
      %s253 = scalar_lea.vmem %s5, %s252
      %s254 = smul.u32 2, %s16
      %v256 = vld [vmem:[%s3] sm:$0x11]
      %v258 = vunpack.c.l.b16 %v256
      %v259 = vunpack.c.h.b16 %v256
      %v260 = vpack.c.b16 %v258, %v258
      %v261 = vpack.c.b16 %v259, %v259
      %v263 = vpack.i.b16 %v260, %v260
      %v265 = vlaneseq
      %v266 = vshrl.u32 %v265, 7
      %v267 = vsub.s32 0, %v266
      %v268 = vrot.slane %v263, %v267
      %v270 = vpack.i.b16 %v261, %v261
      %v272 = vlaneseq
      %v273 = vshrl.u32 %v272, 7
      %v274 = vsub.s32 0, %v273
      %v275 = vrot.slane %v270, %v274
      %v276 = vld [vmem:[%s3] sm:$0x22]
      %v278 = vunpack.c.l.b16 %v276
      %v279 = vunpack.c.h.b16 %v276
      %v280 = vpack.c.b16 %v278, %v278
      %v281 = vpack.c.b16 %v279, %v279
      %v283 = vpack.i.b16 %v280, %v280
      %v285 = vlaneseq
      %v286 = vshrl.u32 %v285, 7
      %v287 = vsub.s32 1, %v286
      %v288 = vrot.slane %v283, %v287
      %v290 = vpack.i.b16 %v281, %v281
      %v292 = vlaneseq
      %v293 = vshrl.u32 %v292, 7
      %v294 = vsub.s32 1, %v293
      %v295 = vrot.slane %v290, %v294
      %v296 = vshrl.u32 %v280, 16
      %v297 = vpack.i.b16 %v296, %v296
      %v299 = vlaneseq
      %v300 = vshrl.u32 %v299, 7
      %v301 = vsub.s32 1, %v300
      %v302 = vrot.slane %v297, %v301
      %v303 = vshrl.u32 %v281, 16
      %v304 = vpack.i.b16 %v303, %v303
      %v306 = vlaneseq
      %v307 = vshrl.u32 %v306, 7
      %v308 = vsub.s32 1, %v307
      %v309 = vrot.slane %v304, %v308
      %v310 = vld [vmem:[%s3] sm:$0x44]
      %v312 = vunpack.c.l.b16 %v310
      %v313 = vunpack.c.h.b16 %v310
      %v314 = vpack.c.b16 %v312, %v312
      %v315 = vpack.c.b16 %v313, %v313
      %v317 = vshrl.u32 %v314, 16
      %v318 = vpack.i.b16 %v317, %v317
      %v320 = vlaneseq
      %v321 = vshrl.u32 %v320, 7
      %v322 = vsub.s32 2, %v321
      %v323 = vrot.slane %v318, %v322
      %v325 = vshrl.u32 %v315, 16
      %v326 = vpack.i.b16 %v325, %v325
      %v328 = vlaneseq
      %v329 = vshrl.u32 %v328, 7
      %v330 = vsub.s32 2, %v329
      %v331 = vrot.slane %v326, %v330
      %v332 = vld [vmem:[%s3] sm:$0x88]
      %v334 = vunpack.c.l.b16 %v332
      %v335 = vunpack.c.h.b16 %v332
      %v336 = vpack.c.b16 %v334, %v334
      %v337 = vpack.c.b16 %v335, %v335
      %v339 = vpack.i.b16 %v336, %v336
      %v341 = vlaneseq
      %v342 = vshrl.u32 %v341, 7
      %v343 = vsub.s32 3, %v342
      %v344 = vrot.slane %v339, %v343
      %v346 = vpack.i.b16 %v337, %v337
      %v348 = vlaneseq
      %v349 = vshrl.u32 %v348, 7
      %v350 = vsub.s32 3, %v349
      %v351 = vrot.slane %v346, %v350
      %v352 = vld [vmem:[%s3 + $0x8] sm:$0x11]
      %v354 = vunpack.c.l.b16 %v352
      %v355 = vunpack.c.h.b16 %v352
      %v356 = vpack.c.b16 %v354, %v354
      %v357 = vpack.c.b16 %v355, %v355
      %v359 = vpack.i.b16 %v356, %v356
      %v361 = vlaneseq
      %v362 = vshrl.u32 %v361, 7
      %v363 = vsub.s32 0, %v362
      %v364 = vrot.slane %v359, %v363
      %v366 = vpack.i.b16 %v357, %v357
      %v368 = vlaneseq
      %v369 = vshrl.u32 %v368, 7
      %v370 = vsub.s32 0, %v369
      %v371 = vrot.slane %v366, %v370
      %v372 = vld [vmem:[%s240] sm:$0xff]
      %v375 = vunpack.c.l.b16 %v268
      %v376 = vunpack.c.l.b16 %v275
      %v377 = vpack.c.b16 %v376, %v375
      %v379 = vmul.bf16 %v372, %v377
      %380 = vst [vmem:[#allocation2] sm:$0xff] %v379
      %s381 = scalar_lea.vmem %s240, 16
      %v382 = vld [vmem:[%s381] sm:$0xff]
      %v383 = vmul.bf16 %v382, %v377
      %384 = vst [vmem:[#allocation2 + $0x8] sm:$0xff] %v383
      %v385 = vld [vmem:[%s240] sm:$0xff]
      %v386 = vld [vmem:[%s240 + $0x8] sm:$0xf]
      %v389 = vunpack.c.l.b16 %v288
      %v390 = vunpack.c.l.b16 %v295
      %v391 = vpack.c.b16 %v390, %v389
      %392 = vrot.lane.b32.xlu0 %v391, 2
      %v393 = vpop.permute.xlu0 %392
      %v394 = vrot.slane %v393, 4
      %vm395 = vcmask 15360
      %v396 = vsel %vm395, %v394, %v393
      %v399 = vmul.bf16 %v385, %v396
      %v400 = vmul.bf16 %v386, %v394
      %403 = vrot.lane.b32.xlu0 %v399, 126
      %v404 = vpop.permute.xlu0 %403
      %405 = vrot.lane.b32.xlu0 %v400, 126
      %v406 = vpop.permute.xlu0 %405
      %v407 = vrot.slane %v404, 4
      %v408 = vrot.slane %v406, 4
      %vm409 = vcmask 1043456
      %v410 = vsel %vm409, %v407, %v408
      %vm411 = vcmask 1031168
      %v412 = vsel %vm411, %v404, %v410
      %414 = vst [vmem:[#allocation2 + $0x10] sm:$0xff] %v412
      %v415 = vld [vmem:[%s381] sm:$0xff]
      %v416 = vld [vmem:[%s381 + $0x8] sm:$0xf]
      %v417 = vmul.bf16 %v415, %v396
      %v418 = vmul.bf16 %v416, %v394
      %421 = vrot.lane.b32.xlu0 %v417, 126
      %v422 = vpop.permute.xlu0 %421
      %423 = vrot.lane.b32.xlu0 %v418, 126
      %v424 = vpop.permute.xlu0 %423
      %v425 = vrot.slane %v422, 4
      %v426 = vrot.slane %v424, 4
      %v427 = vsel %vm409, %v425, %v426
      %v428 = vsel %vm411, %v422, %v427
      %430 = vst [vmem:[#allocation2 + $0x18] sm:$0xff] %v428
      %v431 = vld [vmem:[%s240] sm:$0xff]
      %v432 = vld [vmem:[%s240 + $0x8] sm:$0xf]
      %435 = vrot.lane.b32.xlu0 %v431, 124
      %v436 = vpop.permute.xlu0 %435
      %437 = vrot.lane.b32.xlu0 %v432, 124
      %v438 = vpop.permute.xlu0 %437
      %v439 = vrot.slane %v436, 4
      %v440 = vrot.slane %v438, 4
      %v441 = vsel %vm409, %v439, %v440
      %vm442 = vcmask 1014784
      %v443 = vsel %vm442, %v436, %v441
      %445 = vst [vmem:[#allocation2 + $0x20] sm:$0xff] %v443
      %v446 = vld [vmem:[%s381] sm:$0xff]
      %v447 = vld [vmem:[%s381 + $0x8] sm:$0xf]
      %450 = vrot.lane.b32.xlu0 %v446, 124
      %v451 = vpop.permute.xlu0 %450
      %452 = vrot.lane.b32.xlu0 %v447, 124
      %v453 = vpop.permute.xlu0 %452
      %v454 = vrot.slane %v451, 4
      %v455 = vrot.slane %v453, 4
      %v456 = vsel %vm409, %v454, %v455
      %v457 = vsel %vm442, %v451, %v456
      %459 = vst [vmem:[#allocation2 + $0x28] sm:$0xff] %v457
      %v460 = vld [vmem:[%s240] sm:$0xff]
      %v461 = vld [vmem:[%s240 + $0x8] sm:$0xf]
      %v464 = vunpack.c.l.b16 %v344
      %v465 = vunpack.c.l.b16 %v351
      %v466 = vpack.c.b16 %v465, %v464
      %467 = vrot.lane.b32.xlu0 %v466, 6
      %v468 = vpop.permute.xlu0 %467
      %v469 = vrot.slane %v468, 4
      %vm470 = vcmask 48128
      %v471 = vsel %vm470, %v469, %v468
      %v474 = vmul.bf16 %v460, %v471
      %v475 = vmul.bf16 %v461, %v469
      %478 = vrot.lane.b32.xlu0 %v474, 122
      %v479 = vpop.permute.xlu0 %478
      %480 = vrot.lane.b32.xlu0 %v475, 122
      %v481 = vpop.permute.xlu0 %480
      %v482 = vrot.slane %v479, 4
      %v483 = vrot.slane %v481, 4
      %v484 = vsel %vm409, %v482, %v483
      %vm485 = vcmask 998400
      %v486 = vsel %vm485, %v479, %v484
      %488 = vst [vmem:[#allocation2 + $0x30] sm:$0xff] %v486
      %v489 = vld [vmem:[%s381] sm:$0xff]
      %v490 = vld [vmem:[%s381 + $0x8] sm:$0xf]
      %v491 = vmul.bf16 %v489, %v471
      %v492 = vmul.bf16 %v490, %v469
      %495 = vrot.lane.b32.xlu0 %v491, 122
      %v496 = vpop.permute.xlu0 %495
      %497 = vrot.lane.b32.xlu0 %v492, 122
      %v498 = vpop.permute.xlu0 %497
      %v499 = vrot.slane %v496, 4
      %v500 = vrot.slane %v498, 4
      %v501 = vsel %vm409, %v499, %v500
      %v502 = vsel %vm485, %v496, %v501
      %504 = vst [vmem:[#allocation2 + $0x38] sm:$0xff] %v502
      %v505 = vld [vmem:[%s240] sm:$0xff]
      %v506 = vld [vmem:[%s240 + $0x8] sm:$0xf]
      %v509 = vunpack.c.l.b16 %v364
      %v510 = vunpack.c.l.b16 %v371
      %v511 = vpack.c.b16 %v510, %v509
      %512 = vrot.lane.b32.xlu0 %v511, 8
      %v513 = vpop.permute.xlu0 %512
      %v514 = vrot.slane %v513, 4
      %vm515 = vcmask 64512
      %v516 = vsel %vm515, %v514, %v513
      %v519 = vmul.bf16 %v505, %v516
      %v520 = vmul.bf16 %v506, %v514
      %523 = vrot.lane.b32.xlu0 %v519, 120
      %v524 = vpop.permute.xlu0 %523
      %525 = vrot.lane.b32.xlu0 %v520, 120
      %v526 = vpop.permute.xlu0 %525
      %v527 = vrot.slane %v524, 4
      %v528 = vrot.slane %v526, 4
      %v529 = vsel %vm409, %v527, %v528
      %vm530 = vcmask 982016
      %v531 = vsel %vm530, %v524, %v529
      %533 = vst [vmem:[#allocation2 + $0x40] sm:$0xff] %v531
      %v534 = vld [vmem:[%s381] sm:$0xff]
      %v535 = vld [vmem:[%s381 + $0x8] sm:$0xf]
      %v536 = vmul.bf16 %v534, %v516
      %v537 = vmul.bf16 %v535, %v514
      %540 = vrot.lane.b32.xlu0 %v536, 120
      %v541 = vpop.permute.xlu0 %540
      %542 = vrot.lane.b32.xlu0 %v537, 120
      %v543 = vpop.permute.xlu0 %542
      %v544 = vrot.slane %v541, 4
      %v545 = vrot.slane %v543, 4
      %v546 = vsel %vm409, %v544, %v545
      %v547 = vsel %vm530, %v541, %v546
      %549 = vst [vmem:[#allocation2 + $0x48] sm:$0xff] %v547
      %v550 = vld [vmem:[%s240] sm:$0xff]
      %v551 = vld [vmem:[%s240 + $0x8] sm:$0xf]
      %552 = vrot.lane.b32.xlu0 %v377, 32
      %v553 = vpop.permute.xlu0 %552
      %v554 = vrot.slane %v553, 4
      %vm555 = vcmask 261120
      %v556 = vsel %vm555, %v554, %v553
      %v559 = vmul.bf16 %v550, %v556
      %v560 = vmul.bf16 %v551, %v554
      %563 = vrot.lane.b32.xlu0 %v559, 96
      %v564 = vpop.permute.xlu0 %563
      %565 = vrot.lane.b32.xlu0 %v560, 96
      %v566 = vpop.permute.xlu0 %565
      %v567 = vrot.slane %v564, 4
      %v568 = vrot.slane %v566, 4
      %v569 = vsel %vm409, %v567, %v568
      %vm570 = vcmask 785408
      %v571 = vsel %vm570, %v564, %v569
      %573 = vst [vmem:[#allocation2 + $0x50] sm:$0xff] %v571
      %v574 = vld [vmem:[%s381] sm:$0xff]
      %v575 = vld [vmem:[%s381 + $0x8] sm:$0xf]
      %v576 = vmul.bf16 %v574, %v556
      %v577 = vmul.bf16 %v575, %v554
      %580 = vrot.lane.b32.xlu0 %v576, 96
      %v581 = vpop.permute.xlu0 %580
      %582 = vrot.lane.b32.xlu0 %v577, 96
      %v583 = vpop.permute.xlu0 %582
      %v584 = vrot.slane %v581, 4
      %v585 = vrot.slane %v583, 4
      %v586 = vsel %vm409, %v584, %v585
      %v587 = vsel %vm570, %v581, %v586
      %589 = vst [vmem:[#allocation2 + $0x58] sm:$0xff] %v587
      %v590 = vld [vmem:[%s240] sm:$0xff]
      %v591 = vld [vmem:[%s240 + $0x8] sm:$0xf]
      %592 = vrot.lane.b32.xlu0 %v391, 34
      %v593 = vpop.permute.xlu0 %592
      %v594 = vrot.slane %v593, 4
      %vm595 = vcmask 277504
      %v596 = vsel %vm595, %v594, %v593
      %v599 = vmul.bf16 %v590, %v596
      %v600 = vmul.bf16 %v591, %v594
      %603 = vrot.lane.b32.xlu0 %v599, 94
      %v604 = vpop.permute.xlu0 %603
      %605 = vrot.lane.b32.xlu0 %v600, 94
      %v606 = vpop.permute.xlu0 %605
      %v607 = vrot.slane %v604, 4
      %v608 = vrot.slane %v606, 4
      %v609 = vsel %vm409, %v607, %v608
      %vm610 = vcmask 769024
      %v611 = vsel %vm610, %v604, %v609
      %613 = vst [vmem:[#allocation2 + $0x60] sm:$0xff] %v611
      %v614 = vld [vmem:[%s381] sm:$0xff]
      %v615 = vld [vmem:[%s381 + $0x8] sm:$0xf]
      %v616 = vmul.bf16 %v614, %v596
      %v617 = vmul.bf16 %v615, %v594
      %620 = vrot.lane.b32.xlu0 %v616, 94
      %v621 = vpop.permute.xlu0 %620
      %622 = vrot.lane.b32.xlu0 %v617, 94
      %v623 = vpop.permute.xlu0 %622
      %v624 = vrot.slane %v621, 4
      %v625 = vrot.slane %v623, 4
      %v626 = vsel %vm409, %v624, %v625
      %v627 = vsel %vm610, %v621, %v626
      %629 = vst [vmem:[#allocation2 + $0x68] sm:$0xff] %v627
      %v630 = vld [vmem:[%s240] sm:$0xff]
      %v631 = vld [vmem:[%s240 + $0x8] sm:$0xf]
      %v634 = vunpack.c.l.b16 %v302
      %v635 = vunpack.c.l.b16 %v309
      %v636 = vpack.c.b16 %v635, %v634
      %637 = vrot.lane.b32.xlu0 %v636, 35
      %v638 = vpop.permute.xlu0 %637
      %v639 = vrot.slane %v638, 4
      %vm640 = vcmask 285696
      %v641 = vsel %vm640, %v639, %v638
      %v644 = vmul.bf16 %v630, %v641
      %v645 = vmul.bf16 %v631, %v639
      %648 = vrot.lane.b32.xlu0 %v644, 93
      %v649 = vpop.permute.xlu0 %648
      %650 = vrot.lane.b32.xlu0 %v645, 93
      %v651 = vpop.permute.xlu0 %650
      %v652 = vrot.slane %v649, 4
      %v653 = vrot.slane %v651, 4
      %v654 = vsel %vm409, %v652, %v653
      %vm655 = vcmask 760832
      %v656 = vsel %vm655, %v649, %v654
      %658 = vst [vmem:[#allocation2 + $0x70] sm:$0xff] %v656
      %v659 = vld [vmem:[%s381] sm:$0xff]
      %v660 = vld [vmem:[%s381 + $0x8] sm:$0xf]
      %v661 = vmul.bf16 %v659, %v641
      %v662 = vmul.bf16 %v660, %v639
      %665 = vrot.lane.b32.xlu0 %v661, 93
      %v666 = vpop.permute.xlu0 %665
      %667 = vrot.lane.b32.xlu0 %v662, 93
      %v668 = vpop.permute.xlu0 %667
      %v669 = vrot.slane %v666, 4
      %v670 = vrot.slane %v668, 4
      %v671 = vsel %vm409, %v669, %v670
      %v672 = vsel %vm655, %v666, %v671
      %674 = vst [vmem:[#allocation2 + $0x78] sm:$0xff] %v672
      %v675 = vld [vmem:[%s240] sm:$0xff]
      %v676 = vld [vmem:[%s240 + $0x8] sm:$0xf]
      %679 = vrot.lane.b32.xlu0 %v675, 92
      %v680 = vpop.permute.xlu0 %679
      %681 = vrot.lane.b32.xlu0 %v676, 92
      %v682 = vpop.permute.xlu0 %681
      %v683 = vrot.slane %v680, 4
      %v684 = vrot.slane %v682, 4
      %v685 = vsel %vm409, %v683, %v684
      %vm686 = vcmask 752640
      %v687 = vsel %vm686, %v680, %v685
      %689 = vst [vmem:[#allocation2 + $0x80] sm:$0xff] %v687
      %v690 = vld [vmem:[%s381] sm:$0xff]
      %v691 = vld [vmem:[%s381 + $0x8] sm:$0xf]
      %694 = vrot.lane.b32.xlu0 %v690, 92
      %v695 = vpop.permute.xlu0 %694
      %696 = vrot.lane.b32.xlu0 %v691, 92
      %v697 = vpop.permute.xlu0 %696
      %v698 = vrot.slane %v695, 4
      %v699 = vrot.slane %v697, 4
      %v700 = vsel %vm409, %v698, %v699
      %v701 = vsel %vm686, %v695, %v700
      %703 = vst [vmem:[#allocation2 + $0x88] sm:$0xff] %v701
      %v704 = vld [vmem:[%s240] sm:$0xff]
      %v705 = vld [vmem:[%s240 + $0x8] sm:$0xf]
      %v708 = vunpack.c.l.b16 %v323
      %v709 = vunpack.c.l.b16 %v331
      %v710 = vpack.c.b16 %v709, %v708
      %711 = vrot.lane.b32.xlu0 %v710, 37
      %v712 = vpop.permute.xlu0 %711
      %v713 = vrot.slane %v712, 4
      %vm714 = vcmask 302080
      %v715 = vsel %vm714, %v713, %v712
      %v718 = vmul.bf16 %v704, %v715
      %v719 = vmul.bf16 %v705, %v713
      %722 = vrot.lane.b32.xlu0 %v718, 91
      %v723 = vpop.permute.xlu0 %722
      %724 = vrot.lane.b32.xlu0 %v719, 91
      %v725 = vpop.permute.xlu0 %724
      %v726 = vrot.slane %v723, 4
      %v727 = vrot.slane %v725, 4
      %v728 = vsel %vm409, %v726, %v727
      %vm729 = vcmask 744448
      %v730 = vsel %vm729, %v723, %v728
      %732 = vst [vmem:[#allocation2 + $0x90] sm:$0xff] %v730
      %v733 = vld [vmem:[%s381] sm:$0xff]
      %v734 = vld [vmem:[%s381 + $0x8] sm:$0xf]
      %v735 = vmul.bf16 %v733, %v715
      %v736 = vmul.bf16 %v734, %v713
      %739 = vrot.lane.b32.xlu0 %v735, 91
      %v740 = vpop.permute.xlu0 %739
      %741 = vrot.lane.b32.xlu0 %v736, 91
      %v742 = vpop.permute.xlu0 %741
      %v743 = vrot.slane %v740, 4
      %v744 = vrot.slane %v742, 4
      %v745 = vsel %vm409, %v743, %v744
      %v746 = vsel %vm729, %v740, %v745
      %748 = vst [vmem:[#allocation2 + $0x98] sm:$0xff] %v746
      %v749 = vld [vmem:[%s240] sm:$0xff]
      %v750 = vld [vmem:[%s240 + $0x8] sm:$0xf]
      %751 = vrot.lane.b32.xlu0 %v466, 38
      %v752 = vpop.permute.xlu0 %751
      %v753 = vrot.slane %v752, 4
      %vm754 = vcmask 310272
      %v755 = vsel %vm754, %v753, %v752
      %v758 = vmul.bf16 %v749, %v755
      %v759 = vmul.bf16 %v750, %v753
      %762 = vrot.lane.b32.xlu0 %v758, 90
      %v763 = vpop.permute.xlu0 %762
      %764 = vrot.lane.b32.xlu0 %v759, 90
      %v765 = vpop.permute.xlu0 %764
      %v766 = vrot.slane %v763, 4
      %v767 = vrot.slane %v765, 4
      %v768 = vsel %vm409, %v766, %v767
      %vm769 = vcmask 736256
      %v770 = vsel %vm769, %v763, %v768
      %772 = vst [vmem:[#allocation2 + $0xa0] sm:$0xff] %v770
      %v773 = vld [vmem:[%s381] sm:$0xff]
      %v774 = vld [vmem:[%s381 + $0x8] sm:$0xf]
      %v775 = vmul.bf16 %v773, %v755
      %v776 = vmul.bf16 %v774, %v753
      %779 = vrot.lane.b32.xlu0 %v775, 90
      %v780 = vpop.permute.xlu0 %779
      %781 = vrot.lane.b32.xlu0 %v776, 90
      %v782 = vpop.permute.xlu0 %781
      %v783 = vrot.slane %v780, 4
      %v784 = vrot.slane %v782, 4
      %v785 = vsel %vm409, %v783, %v784
      %v786 = vsel %vm769, %v780, %v785
      %788 = vst [vmem:[#allocation2 + $0xa8] sm:$0xff] %v786
      %v789 = vld [vmem:[%s240] sm:$0xff]
      %v790 = vld [vmem:[%s240 + $0x8] sm:$0xf]
      %791 = vrot.lane.b32.xlu0 %v511, 40
      %v792 = vpop.permute.xlu0 %791
      %v793 = vrot.slane %v792, 4
      %vm794 = vcmask 326656
      %v795 = vsel %vm794, %v793, %v792
      %v798 = vmul.bf16 %v789, %v795
      %v799 = vmul.bf16 %v790, %v793
      %802 = vrot.lane.b32.xlu0 %v798, 88
      %v803 = vpop.permute.xlu0 %802
      %804 = vrot.lane.b32.xlu0 %v799, 88
      %v805 = vpop.permute.xlu0 %804
      %v806 = vrot.slane %v803, 4
      %v807 = vrot.slane %v805, 4
      %v808 = vsel %vm409, %v806, %v807
      %vm809 = vcmask 719872
      %v810 = vsel %vm809, %v803, %v808
      %812 = vst [vmem:[#allocation2 + $0xb0] sm:$0xff] %v810
      %v813 = vld [vmem:[%s381] sm:$0xff]
      %v814 = vld [vmem:[%s381 + $0x8] sm:$0xf]
      %v815 = vmul.bf16 %v813, %v795
      %v816 = vmul.bf16 %v814, %v793
      %819 = vrot.lane.b32.xlu0 %v815, 88
      %v820 = vpop.permute.xlu0 %819
      %821 = vrot.lane.b32.xlu0 %v816, 88
      %v822 = vpop.permute.xlu0 %821
      %v823 = vrot.slane %v820, 4
      %v824 = vrot.slane %v822, 4
      %v825 = vsel %vm409, %v823, %v824
      %v826 = vsel %vm809, %v820, %v825
      %828 = vst [vmem:[#allocation2 + $0xb8] sm:$0xff] %v826
      %v829 = vld [vmem:[%s240] sm:$0xff]
      %v830 = vld [vmem:[%s240 + $0x8] sm:$0xf]
      %831 = vrot.lane.b32.xlu0 %v391, 50
      %v832 = vpop.permute.xlu0 %831
      %v833 = vrot.slane %v832, 4
      %vm834 = vcmask 408576
      %v835 = vsel %vm834, %v833, %v832
      %v838 = vmul.bf16 %v829, %v835
      %v839 = vmul.bf16 %v830, %v833
      %842 = vrot.lane.b32.xlu0 %v838, 78
      %v843 = vpop.permute.xlu0 %842
      %844 = vrot.lane.b32.xlu0 %v839, 78
      %v845 = vpop.permute.xlu0 %844
      %v846 = vrot.slane %v843, 4
      %v847 = vrot.slane %v845, 4
      %v848 = vsel %vm409, %v846, %v847
      %vm849 = vcmask 637952
      %v850 = vsel %vm849, %v843, %v848
      %852 = vst [vmem:[#allocation2 + $0xc0] sm:$0xff] %v850
      %v853 = vld [vmem:[%s381] sm:$0xff]
      %v854 = vld [vmem:[%s381 + $0x8] sm:$0xf]
      %v855 = vmul.bf16 %v853, %v835
      %v856 = vmul.bf16 %v854, %v833
      %859 = vrot.lane.b32.xlu0 %v855, 78
      %v860 = vpop.permute.xlu0 %859
      %861 = vrot.lane.b32.xlu0 %v856, 78
      %v862 = vpop.permute.xlu0 %861
      %v863 = vrot.slane %v860, 4
      %v864 = vrot.slane %v862, 4
      %v865 = vsel %vm409, %v863, %v864
      %v866 = vsel %vm849, %v860, %v865
      %868 = vst [vmem:[#allocation2 + $0xc8] sm:$0xff] %v866
      %v869 = vld [vmem:[%s240] sm:$0xff]
      %v870 = vld [vmem:[%s240 + $0x8] sm:$0xf]
      %871 = vrot.lane.b32.xlu0 %v636, 51
      %v872 = vpop.permute.xlu0 %871
      %v873 = vrot.slane %v872, 4
      %vm874 = vcmask 416768
      %v875 = vsel %vm874, %v873, %v872
      %v878 = vmul.bf16 %v869, %v875
      %v879 = vmul.bf16 %v870, %v873
      %882 = vrot.lane.b32.xlu0 %v878, 77
      %v883 = vpop.permute.xlu0 %882
      %884 = vrot.lane.b32.xlu0 %v879, 77
      %v885 = vpop.permute.xlu0 %884
      %v886 = vrot.slane %v883, 4
      %v887 = vrot.slane %v885, 4
      %v888 = vsel %vm409, %v886, %v887
      %vm889 = vcmask 629760
      %v890 = vsel %vm889, %v883, %v888
      %892 = vst [vmem:[#allocation2 + $0xd0] sm:$0xff] %v890
      %v893 = vld [vmem:[%s381] sm:$0xff]
      %v894 = vld [vmem:[%s381 + $0x8] sm:$0xf]
      %v895 = vmul.bf16 %v893, %v875
      %v896 = vmul.bf16 %v894, %v873
      %899 = vrot.lane.b32.xlu0 %v895, 77
      %v900 = vpop.permute.xlu0 %899
      %901 = vrot.lane.b32.xlu0 %v896, 77
      %v902 = vpop.permute.xlu0 %901
      %v903 = vrot.slane %v900, 4
      %v904 = vrot.slane %v902, 4
      %v905 = vsel %vm409, %v903, %v904
      %v906 = vsel %vm889, %v900, %v905
      %908 = vst [vmem:[#allocation2 + $0xd8] sm:$0xff] %v906
      %v909 = vld [vmem:[%s240] sm:$0xff]
      %v910 = vld [vmem:[%s240 + $0x8] sm:$0xf]
      %913 = vrot.lane.b32.xlu0 %v909, 76
      %v914 = vpop.permute.xlu0 %913
      %915 = vrot.lane.b32.xlu0 %v910, 76
      %v916 = vpop.permute.xlu0 %915
      %v917 = vrot.slane %v914, 4
      %v918 = vrot.slane %v916, 4
      %v919 = vsel %vm409, %v917, %v918
      %vm920 = vcmask 621568
      %v921 = vsel %vm920, %v914, %v919
      %923 = vst [vmem:[#allocation2 + $0xe0] sm:$0xff] %v921
      %v924 = vld [vmem:[%s381] sm:$0xff]
      %v925 = vld [vmem:[%s381 + $0x8] sm:$0xf]
      %928 = vrot.lane.b32.xlu0 %v924, 76
      %v929 = vpop.permute.xlu0 %928
      %930 = vrot.lane.b32.xlu0 %v925, 76
      %v931 = vpop.permute.xlu0 %930
      %v932 = vrot.slane %v929, 4
      %v933 = vrot.slane %v931, 4
      %v934 = vsel %vm409, %v932, %v933
      %v935 = vsel %vm920, %v929, %v934
      %937 = vst [vmem:[#allocation2 + $0xe8] sm:$0xff] %v935
      %v938 = vld [vmem:[%s240] sm:$0xff]
      %v939 = vld [vmem:[%s240 + $0x8] sm:$0xf]
      %940 = vrot.lane.b32.xlu0 %v710, 53
      %v941 = vpop.permute.xlu0 %940
      %v942 = vrot.slane %v941, 4
      %vm943 = vcmask 433152
      %v944 = vsel %vm943, %v942, %v941
      %v947 = vmul.bf16 %v938, %v944
      %v948 = vmul.bf16 %v939, %v942
      %951 = vrot.lane.b32.xlu0 %v947, 75
      %v952 = vpop.permute.xlu0 %951
      %953 = vrot.lane.b32.xlu0 %v948, 75
      %v954 = vpop.permute.xlu0 %953
      %v955 = vrot.slane %v952, 4
      %v956 = vrot.slane %v954, 4
      %v957 = vsel %vm409, %v955, %v956
      %vm958 = vcmask 613376
      %v959 = vsel %vm958, %v952, %v957
      %961 = vst [vmem:[#allocation2 + $0xf0] sm:$0xff] %v959
      %v962 = vld [vmem:[%s381] sm:$0xff]
      %v963 = vld [vmem:[%s381 + $0x8] sm:$0xf]
      %v964 = vmul.bf16 %v962, %v944
      %v965 = vmul.bf16 %v963, %v942
      %968 = vrot.lane.b32.xlu0 %v964, 75
      %v969 = vpop.permute.xlu0 %968
      %970 = vrot.lane.b32.xlu0 %v965, 75
      %v971 = vpop.permute.xlu0 %970
      %v972 = vrot.slane %v969, 4
      %v973 = vrot.slane %v971, 4
      %v974 = vsel %vm409, %v972, %v973
      %v975 = vsel %vm958, %v969, %v974
      %977 = vst [vmem:[#allocation2 + $0xf8] sm:$0xff] %v975
      %v978 = vld [vmem:[%s240] sm:$0xff]
      %v979 = vld [vmem:[%s240 + $0x8] sm:$0xf]
      %980 = vrot.lane.b32.xlu0 %v466, 54
      %v981 = vpop.permute.xlu0 %980
      %v982 = vrot.slane %v981, 4
      %vm983 = vcmask 441344
      %v984 = vsel %vm983, %v982, %v981
      %v987 = vmul.bf16 %v978, %v984
      %v988 = vmul.bf16 %v979, %v982
      %991 = vrot.lane.b32.xlu0 %v987, 74
      %v992 = vpop.permute.xlu0 %991
      %993 = vrot.lane.b32.xlu0 %v988, 74
      %v994 = vpop.permute.xlu0 %993
      %v995 = vrot.slane %v992, 4
      %v996 = vrot.slane %v994, 4
      %v997 = vsel %vm409, %v995, %v996
      %vm998 = vcmask 605184
      %v999 = vsel %vm998, %v992, %v997
      %1001 = vst [vmem:[#allocation2 + $0x100] sm:$0xff] %v999
      %v1002 = vld [vmem:[%s381] sm:$0xff]
      %v1003 = vld [vmem:[%s381 + $0x8] sm:$0xf]
      %v1004 = vmul.bf16 %v1002, %v984
      %v1005 = vmul.bf16 %v1003, %v982
      %1008 = vrot.lane.b32.xlu0 %v1004, 74
      %v1009 = vpop.permute.xlu0 %1008
      %1010 = vrot.lane.b32.xlu0 %v1005, 74
      %v1011 = vpop.permute.xlu0 %1010
      %v1012 = vrot.slane %v1009, 4
      %v1013 = vrot.slane %v1011, 4
      %v1014 = vsel %vm409, %v1012, %v1013
      %v1015 = vsel %vm998, %v1009, %v1014
      %1017 = vst [vmem:[#allocation2 + $0x108] sm:$0xff] %v1015
      %v1018 = vld [vmem:[%s240] sm:$0xff]
      %v1019 = vld [vmem:[%s240 + $0x8] sm:$0xf]
      %1020 = vrot.lane.b32.xlu0 %v377, 64
      %v1021 = vpop.permute.xlu0 %1020
      %v1022 = vrot.slane %v1021, 4
      %vm1023 = vcmask 523264
      %v1024 = vsel %vm1023, %v1022, %v1021
      %v1027 = vmul.bf16 %v1018, %v1024
      %v1028 = vmul.bf16 %v1019, %v1022
      %1031 = vrot.lane.b32.xlu0 %v1027, 64
      %v1032 = vpop.permute.xlu0 %1031
      %1033 = vrot.lane.b32.xlu0 %v1028, 64
      %v1034 = vpop.permute.xlu0 %1033
      %v1035 = vrot.slane %v1032, 4
      %v1036 = vrot.slane %v1034, 4
      %v1037 = vsel %vm409, %v1035, %v1036
      %v1038 = vsel %vm1023, %v1032, %v1037
      %1040 = vst [vmem:[#allocation2 + $0x110] sm:$0xff] %v1038
      %v1041 = vld [vmem:[%s381] sm:$0xff]
      %v1042 = vld [vmem:[%s381 + $0x8] sm:$0xf]
      %v1043 = vmul.bf16 %v1041, %v1024
      %v1044 = vmul.bf16 %v1042, %v1022
      %1047 = vrot.lane.b32.xlu0 %v1043, 64
      %v1048 = vpop.permute.xlu0 %1047
      %1049 = vrot.lane.b32.xlu0 %v1044, 64
      %v1050 = vpop.permute.xlu0 %1049
      %v1051 = vrot.slane %v1048, 4
      %v1052 = vrot.slane %v1050, 4
      %v1053 = vsel %vm409, %v1051, %v1052
      %v1054 = vsel %vm1023, %v1048, %v1053
      %1056 = vst [vmem:[#allocation2 + $0x118] sm:$0xff] %v1054
      %v1057 = vld [vmem:[%s240] sm:$0xff]
      %v1058 = vld [vmem:[%s240 + $0x8] sm:$0xf]
      %1059 = vrot.lane.b32.xlu0 %v391, 66
      %v1060 = vpop.permute.xlu0 %1059
      %v1061 = vrot.slane %v1060, 4
      %vm1062 = vcmask 539648
      %v1063 = vsel %vm1062, %v1061, %v1060
      %v1066 = vmul.bf16 %v1057, %v1063
      %v1067 = vmul.bf16 %v1058, %v1061
      %1070 = vrot.lane.b32.xlu0 %v1066, 62
      %v1071 = vpop.permute.xlu0 %1070
      %1072 = vrot.lane.b32.xlu0 %v1067, 62
      %v1073 = vpop.permute.xlu0 %1072
      %v1074 = vrot.slane %v1071, 4
      %v1075 = vrot.slane %v1073, 4
      %v1076 = vsel %vm409, %v1074, %v1075
      %vm1077 = vcmask 506880
      %v1078 = vsel %vm1077, %v1071, %v1076
      %1080 = vst [vmem:[#allocation2 + $0x120] sm:$0xff] %v1078
      %v1081 = vld [vmem:[%s381] sm:$0xff]
      %v1082 = vld [vmem:[%s381 + $0x8] sm:$0xf]
      %v1083 = vmul.bf16 %v1081, %v1063
      %v1084 = vmul.bf16 %v1082, %v1061
      %1087 = vrot.lane.b32.xlu0 %v1083, 62
      %v1088 = vpop.permute.xlu0 %1087
      %1089 = vrot.lane.b32.xlu0 %v1084, 62
      %v1090 = vpop.permute.xlu0 %1089
      %v1091 = vrot.slane %v1088, 4
      %v1092 = vrot.slane %v1090, 4
      %v1093 = vsel %vm409, %v1091, %v1092
      %v1094 = vsel %vm1077, %v1088, %v1093
      %1096 = vst [vmem:[#allocation2 + $0x128] sm:$0xff] %v1094
      %v1097 = vld [vmem:[%s240] sm:$0xff]
      %v1098 = vld [vmem:[%s240 + $0x8] sm:$0xf]
      %1099 = vrot.lane.b32.xlu0 %v636, 67
      %v1100 = vpop.permute.xlu0 %1099
      %v1101 = vrot.slane %v1100, 4
      %vm1102 = vcmask 547840
      %v1103 = vsel %vm1102, %v1101, %v1100
      %v1106 = vmul.bf16 %v1097, %v1103
      %v1107 = vmul.bf16 %v1098, %v1101
      %1110 = vrot.lane.b32.xlu0 %v1106, 61
      %v1111 = vpop.permute.xlu0 %1110
      %1112 = vrot.lane.b32.xlu0 %v1107, 61
      %v1113 = vpop.permute.xlu0 %1112
      %v1114 = vrot.slane %v1111, 4
      %v1115 = vrot.slane %v1113, 4
      %v1116 = vsel %vm409, %v1114, %v1115
      %vm1117 = vcmask 498688
      %v1118 = vsel %vm1117, %v1111, %v1116
      %1120 = vst [vmem:[#allocation2 + $0x130] sm:$0xff] %v1118
      %v1121 = vld [vmem:[%s381] sm:$0xff]
      %v1122 = vld [vmem:[%s381 + $0x8] sm:$0xf]
      %v1123 = vmul.bf16 %v1121, %v1103
      %v1124 = vmul.bf16 %v1122, %v1101
      %1127 = vrot.lane.b32.xlu0 %v1123, 61
      %v1128 = vpop.permute.xlu0 %1127
      %1129 = vrot.lane.b32.xlu0 %v1124, 61
      %v1130 = vpop.permute.xlu0 %1129
      %v1131 = vrot.slane %v1128, 4
      %v1132 = vrot.slane %v1130, 4
      %v1133 = vsel %vm409, %v1131, %v1132
      %v1134 = vsel %vm1117, %v1128, %v1133
      %1136 = vst [vmem:[#allocation2 + $0x138] sm:$0xff] %v1134
      %v1137 = vld [vmem:[%s240] sm:$0xff]
      %v1138 = vld [vmem:[%s240 + $0x8] sm:$0xf]
      %1141 = vrot.lane.b32.xlu0 %v1137, 60
      %v1142 = vpop.permute.xlu0 %1141
      %1143 = vrot.lane.b32.xlu0 %v1138, 60
      %v1144 = vpop.permute.xlu0 %1143
      %v1145 = vrot.slane %v1142, 4
      %v1146 = vrot.slane %v1144, 4
      %v1147 = vsel %vm409, %v1145, %v1146
      %vm1148 = vcmask 490496
      %v1149 = vsel %vm1148, %v1142, %v1147
      %1151 = vst [vmem:[#allocation2 + $0x140] sm:$0xff] %v1149
      %v1152 = vld [vmem:[%s381] sm:$0xff]
      %v1153 = vld [vmem:[%s381 + $0x8] sm:$0xf]
      %1156 = vrot.lane.b32.xlu0 %v1152, 60
      %v1157 = vpop.permute.xlu0 %1156
      %1158 = vrot.lane.b32.xlu0 %v1153, 60
      %v1159 = vpop.permute.xlu0 %1158
      %v1160 = vrot.slane %v1157, 4
      %v1161 = vrot.slane %v1159, 4
      %v1162 = vsel %vm409, %v1160, %v1161
      %v1163 = vsel %vm1148, %v1157, %v1162
      %1165 = vst [vmem:[#allocation2 + $0x148] sm:$0xff] %v1163
      %v1166 = vld [vmem:[%s240] sm:$0xff]
      %v1167 = vld [vmem:[%s240 + $0x8] sm:$0xf]
      %1168 = vrot.lane.b32.xlu0 %v710, 69
      %v1169 = vpop.permute.xlu0 %1168
      %v1170 = vrot.slane %v1169, 4
      %vm1171 = vcmask 564224
      %v1172 = vsel %vm1171, %v1170, %v1169
      %v1175 = vmul.bf16 %v1166, %v1172
      %v1176 = vmul.bf16 %v1167, %v1170
      %1179 = vrot.lane.b32.xlu0 %v1175, 59
      %v1180 = vpop.permute.xlu0 %1179
      %1181 = vrot.lane.b32.xlu0 %v1176, 59
      %v1182 = vpop.permute.xlu0 %1181
      %v1183 = vrot.slane %v1180, 4
      %v1184 = vrot.slane %v1182, 4
      %v1185 = vsel %vm409, %v1183, %v1184
      %vm1186 = vcmask 482304
      %v1187 = vsel %vm1186, %v1180, %v1185
      %1189 = vst [vmem:[#allocation2 + $0x150] sm:$0xff] %v1187
      %v1190 = vld [vmem:[%s381] sm:$0xff]
      %v1191 = vld [vmem:[%s381 + $0x8] sm:$0xf]
      %v1192 = vmul.bf16 %v1190, %v1172
      %v1193 = vmul.bf16 %v1191, %v1170
      %1196 = vrot.lane.b32.xlu0 %v1192, 59
      %v1197 = vpop.permute.xlu0 %1196
      %1198 = vrot.lane.b32.xlu0 %v1193, 59
      %v1199 = vpop.permute.xlu0 %1198
      %v1200 = vrot.slane %v1197, 4
      %v1201 = vrot.slane %v1199, 4
      %v1202 = vsel %vm409, %v1200, %v1201
      %v1203 = vsel %vm1186, %v1197, %v1202
      %1205 = vst [vmem:[#allocation2 + $0x158] sm:$0xff] %v1203
      %v1206 = vld [vmem:[%s240] sm:$0xff]
      %v1207 = vld [vmem:[%s240 + $0x8] sm:$0xf]
      %1208 = vrot.lane.b32.xlu0 %v466, 70
      %v1209 = vpop.permute.xlu0 %1208
      %v1210 = vrot.slane %v1209, 4
      %vm1211 = vcmask 572416
      %v1212 = vsel %vm1211, %v1210, %v1209
      %v1215 = vmul.bf16 %v1206, %v1212
      %v1216 = vmul.bf16 %v1207, %v1210
      %1219 = vrot.lane.b32.xlu0 %v1215, 58
      %v1220 = vpop.permute.xlu0 %1219
      %1221 = vrot.lane.b32.xlu0 %v1216, 58
      %v1222 = vpop.permute.xlu0 %1221
      %v1223 = vrot.slane %v1220, 4
      %v1224 = vrot.slane %v1222, 4
      %v1225 = vsel %vm409, %v1223, %v1224
      %vm1226 = vcmask 474112
      %v1227 = vsel %vm1226, %v1220, %v1225
      %1229 = vst [vmem:[#allocation2 + $0x160] sm:$0xff] %v1227
      %v1230 = vld [vmem:[%s381] sm:$0xff]
      %v1231 = vld [vmem:[%s381 + $0x8] sm:$0xf]
      %v1232 = vmul.bf16 %v1230, %v1212
      %v1233 = vmul.bf16 %v1231, %v1210
      %1236 = vrot.lane.b32.xlu0 %v1232, 58
      %v1237 = vpop.permute.xlu0 %1236
      %1238 = vrot.lane.b32.xlu0 %v1233, 58
      %v1239 = vpop.permute.xlu0 %1238
      %v1240 = vrot.slane %v1237, 4
      %v1241 = vrot.slane %v1239, 4
      %v1242 = vsel %vm409, %v1240, %v1241
      %v1243 = vsel %vm1226, %v1237, %v1242
      %1245 = vst [vmem:[#allocation2 + $0x168] sm:$0xff] %v1243
      %v1246 = vld [vmem:[%s240] sm:$0xff]
      %v1247 = vld [vmem:[%s240 + $0x8] sm:$0xf]
      %1248 = vrot.lane.b32.xlu0 %v511, 72
      %v1249 = vpop.permute.xlu0 %1248
      %v1250 = vrot.slane %v1249, 4
      %vm1251 = vcmask 588800
      %v1252 = vsel %vm1251, %v1250, %v1249
      %v1255 = vmul.bf16 %v1246, %v1252
      %v1256 = vmul.bf16 %v1247, %v1250
      %1259 = vrot.lane.b32.xlu0 %v1255, 56
      %v1260 = vpop.permute.xlu0 %1259
      %1261 = vrot.lane.b32.xlu0 %v1256, 56
      %v1262 = vpop.permute.xlu0 %1261
      %v1263 = vrot.slane %v1260, 4
      %v1264 = vrot.slane %v1262, 4
      %v1265 = vsel %vm409, %v1263, %v1264
      %vm1266 = vcmask 457728
      %v1267 = vsel %vm1266, %v1260, %v1265
      %1269 = vst [vmem:[#allocation2 + $0x170] sm:$0xff] %v1267
      %v1270 = vld [vmem:[%s381] sm:$0xff]
      %v1271 = vld [vmem:[%s381 + $0x8] sm:$0xf]
      %v1272 = vmul.bf16 %v1270, %v1252
      %v1273 = vmul.bf16 %v1271, %v1250
      %1276 = vrot.lane.b32.xlu0 %v1272, 56
      %v1277 = vpop.permute.xlu0 %1276
      %1278 = vrot.lane.b32.xlu0 %v1273, 56
      %v1279 = vpop.permute.xlu0 %1278
      %v1280 = vrot.slane %v1277, 4
      %v1281 = vrot.slane %v1279, 4
      %v1282 = vsel %vm409, %v1280, %v1281
      %v1283 = vsel %vm1266, %v1277, %v1282
      %1285 = vst [vmem:[#allocation2 + $0x178] sm:$0xff] %v1283
      %v1286 = vld [vmem:[%s240] sm:$0xff]
      %v1287 = vld [vmem:[%s240 + $0x8] sm:$0xf]
      %1288 = vrot.lane.b32.xlu0 %v391, 82
      %v1289 = vpop.permute.xlu0 %1288
      %v1290 = vrot.slane %v1289, 4
      %vm1291 = vcmask 670720
      %v1292 = vsel %vm1291, %v1290, %v1289
      %v1295 = vmul.bf16 %v1286, %v1292
      %v1296 = vmul.bf16 %v1287, %v1290
      %1299 = vrot.lane.b32.xlu0 %v1295, 46
      %v1300 = vpop.permute.xlu0 %1299
      %1301 = vrot.lane.b32.xlu0 %v1296, 46
      %v1302 = vpop.permute.xlu0 %1301
      %v1303 = vrot.slane %v1300, 4
      %v1304 = vrot.slane %v1302, 4
      %v1305 = vsel %vm409, %v1303, %v1304
      %vm1306 = vcmask 375808
      %v1307 = vsel %vm1306, %v1300, %v1305
      %1309 = vst [vmem:[#allocation2 + $0x180] sm:$0xff] %v1307
      %v1310 = vld [vmem:[%s381] sm:$0xff]
      %v1311 = vld [vmem:[%s381 + $0x8] sm:$0xf]
      %v1312 = vmul.bf16 %v1310, %v1292
      %v1313 = vmul.bf16 %v1311, %v1290
      %1316 = vrot.lane.b32.xlu0 %v1312, 46
      %v1317 = vpop.permute.xlu0 %1316
      %1318 = vrot.lane.b32.xlu0 %v1313, 46
      %v1319 = vpop.permute.xlu0 %1318
      %v1320 = vrot.slane %v1317, 4
      %v1321 = vrot.slane %v1319, 4
      %v1322 = vsel %vm409, %v1320, %v1321
      %v1323 = vsel %vm1306, %v1317, %v1322
      %1325 = vst [vmem:[#allocation2 + $0x188] sm:$0xff] %v1323
      %v1326 = vld [vmem:[%s240] sm:$0xff]
      %v1327 = vld [vmem:[%s240 + $0x8] sm:$0xf]
      %1328 = vrot.lane.b32.xlu0 %v636, 83
      %v1329 = vpop.permute.xlu0 %1328
      %v1330 = vrot.slane %v1329, 4
      %vm1331 = vcmask 678912
      %v1332 = vsel %vm1331, %v1330, %v1329
      %v1335 = vmul.bf16 %v1326, %v1332
      %v1336 = vmul.bf16 %v1327, %v1330
      %1339 = vrot.lane.b32.xlu0 %v1335, 45
      %v1340 = vpop.permute.xlu0 %1339
      %1341 = vrot.lane.b32.xlu0 %v1336, 45
      %v1342 = vpop.permute.xlu0 %1341
      %v1343 = vrot.slane %v1340, 4
      %v1344 = vrot.slane %v1342, 4
      %v1345 = vsel %vm409, %v1343, %v1344
      %vm1346 = vcmask 367616
      %v1347 = vsel %vm1346, %v1340, %v1345
      %1349 = vst [vmem:[#allocation2 + $0x190] sm:$0xff] %v1347
      %v1350 = vld [vmem:[%s381] sm:$0xff]
      %v1351 = vld [vmem:[%s381 + $0x8] sm:$0xf]
      %v1352 = vmul.bf16 %v1350, %v1332
      %v1353 = vmul.bf16 %v1351, %v1330
      %1356 = vrot.lane.b32.xlu0 %v1352, 45
      %v1357 = vpop.permute.xlu0 %1356
      %1358 = vrot.lane.b32.xlu0 %v1353, 45
      %v1359 = vpop.permute.xlu0 %1358
      %v1360 = vrot.slane %v1357, 4
      %v1361 = vrot.slane %v1359, 4
      %v1362 = vsel %vm409, %v1360, %v1361
      %v1363 = vsel %vm1346, %v1357, %v1362
      %1365 = vst [vmem:[#allocation2 + $0x198] sm:$0xff] %v1363
      %v1366 = vld [vmem:[%s240] sm:$0xff]
      %v1367 = vld [vmem:[%s240 + $0x8] sm:$0xf]
      %1370 = vrot.lane.b32.xlu0 %v1366, 44
      %v1371 = vpop.permute.xlu0 %1370
      %1372 = vrot.lane.b32.xlu0 %v1367, 44
      %v1373 = vpop.permute.xlu0 %1372
      %v1374 = vrot.slane %v1371, 4
      %v1375 = vrot.slane %v1373, 4
      %v1376 = vsel %vm409, %v1374, %v1375
      %vm1377 = vcmask 359424
      %v1378 = vsel %vm1377, %v1371, %v1376
      %1380 = vst [vmem:[#allocation2 + $0x1a0] sm:$0xff] %v1378
      %v1381 = vld [vmem:[%s381] sm:$0xff]
      %v1382 = vld [vmem:[%s381 + $0x8] sm:$0xf]
      %1385 = vrot.lane.b32.xlu0 %v1381, 44
      %v1386 = vpop.permute.xlu0 %1385
      %1387 = vrot.lane.b32.xlu0 %v1382, 44
      %v1388 = vpop.permute.xlu0 %1387
      %v1389 = vrot.slane %v1386, 4
      %v1390 = vrot.slane %v1388, 4
      %v1391 = vsel %vm409, %v1389, %v1390
      %v1392 = vsel %vm1377, %v1386, %v1391
      %1394 = vst [vmem:[#allocation2 + $0x1a8] sm:$0xff] %v1392
      %v1395 = vld [vmem:[%s240] sm:$0xff]
      %v1396 = vld [vmem:[%s240 + $0x8] sm:$0xf]
      %1397 = vrot.lane.b32.xlu0 %v710, 85
      %v1398 = vpop.permute.xlu0 %1397
      %v1399 = vrot.slane %v1398, 4
      %vm1400 = vcmask 695296
      %v1401 = vsel %vm1400, %v1399, %v1398
      %v1404 = vmul.bf16 %v1395, %v1401
      %v1405 = vmul.bf16 %v1396, %v1399
      %1408 = vrot.lane.b32.xlu0 %v1404, 43
      %v1409 = vpop.permute.xlu0 %1408
      %1410 = vrot.lane.b32.xlu0 %v1405, 43
      %v1411 = vpop.permute.xlu0 %1410
      %v1412 = vrot.slane %v1409, 4
      %v1413 = vrot.slane %v1411, 4
      %v1414 = vsel %vm409, %v1412, %v1413
      %vm1415 = vcmask 351232
      %v1416 = vsel %vm1415, %v1409, %v1414
      %1418 = vst [vmem:[#allocation2 + $0x1b0] sm:$0xff] %v1416
      %v1419 = vld [vmem:[%s381] sm:$0xff]
      %v1420 = vld [vmem:[%s381 + $0x8] sm:$0xf]
      %v1421 = vmul.bf16 %v1419, %v1401
      %v1422 = vmul.bf16 %v1420, %v1399
      %1425 = vrot.lane.b32.xlu0 %v1421, 43
      %v1426 = vpop.permute.xlu0 %1425
      %1427 = vrot.lane.b32.xlu0 %v1422, 43
      %v1428 = vpop.permute.xlu0 %1427
      %v1429 = vrot.slane %v1426, 4
      %v1430 = vrot.slane %v1428, 4
      %v1431 = vsel %vm409, %v1429, %v1430
      %v1432 = vsel %vm1415, %v1426, %v1431
      %1434 = vst [vmem:[#allocation2 + $0x1b8] sm:$0xff] %v1432
      %v1435 = vld [vmem:[%s240] sm:$0xff]
      %v1436 = vld [vmem:[%s240 + $0x8] sm:$0xf]
      %1437 = vrot.lane.b32.xlu0 %v466, 86
      %v1438 = vpop.permute.xlu0 %1437
      %v1439 = vrot.slane %v1438, 4
      %vm1440 = vcmask 703488
      %v1441 = vsel %vm1440, %v1439, %v1438
      %v1444 = vmul.bf16 %v1435, %v1441
      %v1445 = vmul.bf16 %v1436, %v1439
      %1448 = vrot.lane.b32.xlu0 %v1444, 42
      %v1449 = vpop.permute.xlu0 %1448
      %1450 = vrot.lane.b32.xlu0 %v1445, 42
      %v1451 = vpop.permute.xlu0 %1450
      %v1452 = vrot.slane %v1449, 4
      %v1453 = vrot.slane %v1451, 4
      %v1454 = vsel %vm409, %v1452, %v1453
      %vm1455 = vcmask 343040
      %v1456 = vsel %vm1455, %v1449, %v1454
      %1458 = vst [vmem:[#allocation2 + $0x1c0] sm:$0xff] %v1456
      %v1459 = vld [vmem:[%s381] sm:$0xff]
      %v1460 = vld [vmem:[%s381 + $0x8] sm:$0xf]
      %v1461 = vmul.bf16 %v1459, %v1441
      %v1462 = vmul.bf16 %v1460, %v1439
      %1465 = vrot.lane.b32.xlu0 %v1461, 42
      %v1466 = vpop.permute.xlu0 %1465
      %1467 = vrot.lane.b32.xlu0 %v1462, 42
      %v1468 = vpop.permute.xlu0 %1467
      %v1469 = vrot.slane %v1466, 4
      %v1470 = vrot.slane %v1468, 4
      %v1471 = vsel %vm409, %v1469, %v1470
      %v1472 = vsel %vm1455, %v1466, %v1471
      %1474 = vst [vmem:[#allocation2 + $0x1c8] sm:$0xff] %v1472
      %v1475 = vld [vmem:[%s240] sm:$0xff]
      %v1476 = vld [vmem:[%s240 + $0x8] sm:$0xf]
      %1477 = vrot.lane.b32.xlu0 %v377, 96
      %v1478 = vpop.permute.xlu0 %1477
      %v1479 = vrot.slane %v1478, 4
      %v1480 = vsel %vm570, %v1479, %v1478
      %v1483 = vmul.bf16 %v1475, %v1480
      %v1484 = vmul.bf16 %v1476, %v1479
      %1487 = vrot.lane.b32.xlu0 %v1483, 32
      %v1488 = vpop.permute.xlu0 %1487
      %1489 = vrot.lane.b32.xlu0 %v1484, 32
      %v1490 = vpop.permute.xlu0 %1489
      %v1491 = vrot.slane %v1488, 4
      %v1492 = vrot.slane %v1490, 4
      %v1493 = vsel %vm409, %v1491, %v1492
      %v1494 = vsel %vm555, %v1488, %v1493
      %1496 = vst [vmem:[#allocation2 + $0x1d0] sm:$0xff] %v1494
      %v1497 = vld [vmem:[%s381] sm:$0xff]
      %v1498 = vld [vmem:[%s381 + $0x8] sm:$0xf]
      %v1499 = vmul.bf16 %v1497, %v1480
      %v1500 = vmul.bf16 %v1498, %v1479
      %1503 = vrot.lane.b32.xlu0 %v1499, 32
      %v1504 = vpop.permute.xlu0 %1503
      %1505 = vrot.lane.b32.xlu0 %v1500, 32
      %v1506 = vpop.permute.xlu0 %1505
      %v1507 = vrot.slane %v1504, 4
      %v1508 = vrot.slane %v1506, 4
      %v1509 = vsel %vm409, %v1507, %v1508
      %v1510 = vsel %vm555, %v1504, %v1509
      %1512 = vst [vmem:[#allocation2 + $0x1d8] sm:$0xff] %v1510
      %v1513 = vld [vmem:[%s240] sm:$0xff]
      %v1514 = vld [vmem:[%s240 + $0x8] sm:$0xf]
      %1515 = vrot.lane.b32.xlu0 %v391, 98
      %v1516 = vpop.permute.xlu0 %1515
      %v1517 = vrot.slane %v1516, 4
      %vm1518 = vcmask 801792
      %v1519 = vsel %vm1518, %v1517, %v1516
      %v1522 = vmul.bf16 %v1513, %v1519
      %v1523 = vmul.bf16 %v1514, %v1517
      %1526 = vrot.lane.b32.xlu0 %v1522, 30
      %v1527 = vpop.permute.xlu0 %1526
      %1528 = vrot.lane.b32.xlu0 %v1523, 30
      %v1529 = vpop.permute.xlu0 %1528
      %v1530 = vrot.slane %v1527, 4
      %v1531 = vrot.slane %v1529, 4
      %v1532 = vsel %vm409, %v1530, %v1531
      %vm1533 = vcmask 244736
      %v1534 = vsel %vm1533, %v1527, %v1532
      %1536 = vst [vmem:[#allocation2 + $0x1e0] sm:$0xff] %v1534
      %v1537 = vld [vmem:[%s381] sm:$0xff]
      %v1538 = vld [vmem:[%s381 + $0x8] sm:$0xf]
      %v1539 = vmul.bf16 %v1537, %v1519
      %v1540 = vmul.bf16 %v1538, %v1517
      %1543 = vrot.lane.b32.xlu0 %v1539, 30
      %v1544 = vpop.permute.xlu0 %1543
      %1545 = vrot.lane.b32.xlu0 %v1540, 30
      %v1546 = vpop.permute.xlu0 %1545
      %v1547 = vrot.slane %v1544, 4
      %v1548 = vrot.slane %v1546, 4
      %v1549 = vsel %vm409, %v1547, %v1548
      %v1550 = vsel %vm1533, %v1544, %v1549
      %1552 = vst [vmem:[#allocation2 + $0x1e8] sm:$0xff] %v1550
      %v1553 = vld [vmem:[%s240] sm:$0xff]
      %v1554 = vld [vmem:[%s240 + $0x8] sm:$0xf]
      %1555 = vrot.lane.b32.xlu0 %v636, 99
      %v1556 = vpop.permute.xlu0 %1555
      %v1557 = vrot.slane %v1556, 4
      %vm1558 = vcmask 809984
      %v1559 = vsel %vm1558, %v1557, %v1556
      %v1562 = vmul.bf16 %v1553, %v1559
      %v1563 = vmul.bf16 %v1554, %v1557
      %1566 = vrot.lane.b32.xlu0 %v1562, 29
      %v1567 = vpop.permute.xlu0 %1566
      %1568 = vrot.lane.b32.xlu0 %v1563, 29
      %v1569 = vpop.permute.xlu0 %1568
      %v1570 = vrot.slane %v1567, 4
      %v1571 = vrot.slane %v1569, 4
      %v1572 = vsel %vm409, %v1570, %v1571
      %vm1573 = vcmask 236544
      %v1574 = vsel %vm1573, %v1567, %v1572
      %1576 = vst [vmem:[#allocation2 + $0x1f0] sm:$0xff] %v1574
      %v1577 = vld [vmem:[%s381] sm:$0xff]
      %v1578 = vld [vmem:[%s381 + $0x8] sm:$0xf]
      %v1579 = vmul.bf16 %v1577, %v1559
      %v1580 = vmul.bf16 %v1578, %v1557
      %1583 = vrot.lane.b32.xlu0 %v1579, 29
      %v1584 = vpop.permute.xlu0 %1583
      %1585 = vrot.lane.b32.xlu0 %v1580, 29
      %v1586 = vpop.permute.xlu0 %1585
      %v1587 = vrot.slane %v1584, 4
      %v1588 = vrot.slane %v1586, 4
      %v1589 = vsel %vm409, %v1587, %v1588
      %v1590 = vsel %vm1573, %v1584, %v1589
      %1592 = vst [vmem:[#allocation2 + $0x1f8] sm:$0xff] %v1590
      %v1593 = vld [vmem:[%s240] sm:$0xff]
      %v1594 = vld [vmem:[%s240 + $0x8] sm:$0xf]
      %1597 = vrot.lane.b32.xlu0 %v1593, 28
      %v1598 = vpop.permute.xlu0 %1597
      %1599 = vrot.lane.b32.xlu0 %v1594, 28
      %v1600 = vpop.permute.xlu0 %1599
      %v1601 = vrot.slane %v1598, 4
      %v1602 = vrot.slane %v1600, 4
      %v1603 = vsel %vm409, %v1601, %v1602
      %vm1604 = vcmask 228352
      %v1605 = vsel %vm1604, %v1598, %v1603
      %1607 = vst [vmem:[#allocation2 + $0x200] sm:$0xff] %v1605
      %v1608 = vld [vmem:[%s381] sm:$0xff]
      %v1609 = vld [vmem:[%s381 + $0x8] sm:$0xf]
      %1612 = vrot.lane.b32.xlu0 %v1608, 28
      %v1613 = vpop.permute.xlu0 %1612
      %1614 = vrot.lane.b32.xlu0 %v1609, 28
      %v1615 = vpop.permute.xlu0 %1614
      %v1616 = vrot.slane %v1613, 4
      %v1617 = vrot.slane %v1615, 4
      %v1618 = vsel %vm409, %v1616, %v1617
      %v1619 = vsel %vm1604, %v1613, %v1618
      %1621 = vst [vmem:[#allocation2 + $0x208] sm:$0xff] %v1619
      %v1622 = vld [vmem:[%s240] sm:$0xff]
      %v1623 = vld [vmem:[%s240 + $0x8] sm:$0xf]
      %1624 = vrot.lane.b32.xlu0 %v710, 101
      %v1625 = vpop.permute.xlu0 %1624
      %v1626 = vrot.slane %v1625, 4
      %vm1627 = vcmask 826368
      %v1628 = vsel %vm1627, %v1626, %v1625
      %v1631 = vmul.bf16 %v1622, %v1628
      %v1632 = vmul.bf16 %v1623, %v1626
      %1635 = vrot.lane.b32.xlu0 %v1631, 27
      %v1636 = vpop.permute.xlu0 %1635
      %1637 = vrot.lane.b32.xlu0 %v1632, 27
      %v1638 = vpop.permute.xlu0 %1637
      %v1639 = vrot.slane %v1636, 4
      %v1640 = vrot.slane %v1638, 4
      %v1641 = vsel %vm409, %v1639, %v1640
      %vm1642 = vcmask 220160
      %v1643 = vsel %vm1642, %v1636, %v1641
      %1645 = vst [vmem:[#allocation2 + $0x210] sm:$0xff] %v1643
      %v1646 = vld [vmem:[%s381] sm:$0xff]
      %v1647 = vld [vmem:[%s381 + $0x8] sm:$0xf]
      %v1648 = vmul.bf16 %v1646, %v1628
      %v1649 = vmul.bf16 %v1647, %v1626
      %1652 = vrot.lane.b32.xlu0 %v1648, 27
      %v1653 = vpop.permute.xlu0 %1652
      %1654 = vrot.lane.b32.xlu0 %v1649, 27
      %v1655 = vpop.permute.xlu0 %1654
      %v1656 = vrot.slane %v1653, 4
      %v1657 = vrot.slane %v1655, 4
      %v1658 = vsel %vm409, %v1656, %v1657
      %v1659 = vsel %vm1642, %v1653, %v1658
      %1661 = vst [vmem:[#allocation2 + $0x218] sm:$0xff] %v1659
      %v1662 = vld [vmem:[%s240] sm:$0xff]
      %v1663 = vld [vmem:[%s240 + $0x8] sm:$0xf]
      %1664 = vrot.lane.b32.xlu0 %v466, 102
      %v1665 = vpop.permute.xlu0 %1664
      %v1666 = vrot.slane %v1665, 4
      %vm1667 = vcmask 834560
      %v1668 = vsel %vm1667, %v1666, %v1665
      %v1671 = vmul.bf16 %v1662, %v1668
      %v1672 = vmul.bf16 %v1663, %v1666
      %1675 = vrot.lane.b32.xlu0 %v1671, 26
      %v1676 = vpop.permute.xlu0 %1675
      %1677 = vrot.lane.b32.xlu0 %v1672, 26
      %v1678 = vpop.permute.xlu0 %1677
      %v1679 = vrot.slane %v1676, 4
      %v1680 = vrot.slane %v1678, 4
      %v1681 = vsel %vm409, %v1679, %v1680
      %vm1682 = vcmask 211968
      %v1683 = vsel %vm1682, %v1676, %v1681
      %1685 = vst [vmem:[#allocation2 + $0x220] sm:$0xff] %v1683
      %v1686 = vld [vmem:[%s381] sm:$0xff]
      %v1687 = vld [vmem:[%s381 + $0x8] sm:$0xf]
      %v1688 = vmul.bf16 %v1686, %v1668
      %v1689 = vmul.bf16 %v1687, %v1666
      %1692 = vrot.lane.b32.xlu0 %v1688, 26
      %v1693 = vpop.permute.xlu0 %1692
      %1694 = vrot.lane.b32.xlu0 %v1689, 26
      %v1695 = vpop.permute.xlu0 %1694
      %v1696 = vrot.slane %v1693, 4
      %v1697 = vrot.slane %v1695, 4
      %v1698 = vsel %vm409, %v1696, %v1697
      %v1699 = vsel %vm1682, %v1693, %v1698
      %1701 = vst [vmem:[#allocation2 + $0x228] sm:$0xff] %v1699
      %v1702 = vld [vmem:[%s240] sm:$0xff]
      %v1703 = vld [vmem:[%s240 + $0x8] sm:$0xf]
      %1704 = vrot.lane.b32.xlu0 %v511, 104
      %v1705 = vpop.permute.xlu0 %1704
      %v1706 = vrot.slane %v1705, 4
      %vm1707 = vcmask 850944
      %v1708 = vsel %vm1707, %v1706, %v1705
      %v1711 = vmul.bf16 %v1702, %v1708
      %v1712 = vmul.bf16 %v1703, %v1706
      %1715 = vrot.lane.b32.xlu0 %v1711, 24
      %v1716 = vpop.permute.xlu0 %1715
      %1717 = vrot.lane.b32.xlu0 %v1712, 24
      %v1718 = vpop.permute.xlu0 %1717
      %v1719 = vrot.slane %v1716, 4
      %v1720 = vrot.slane %v1718, 4
      %v1721 = vsel %vm409, %v1719, %v1720
      %vm1722 = vcmask 195584
      %v1723 = vsel %vm1722, %v1716, %v1721
      %1725 = vst [vmem:[#allocation2 + $0x230] sm:$0xff] %v1723
      %v1726 = vld [vmem:[%s381] sm:$0xff]
      %v1727 = vld [vmem:[%s381 + $0x8] sm:$0xf]
      %v1728 = vmul.bf16 %v1726, %v1708
      %v1729 = vmul.bf16 %v1727, %v1706
      %1732 = vrot.lane.b32.xlu0 %v1728, 24
      %v1733 = vpop.permute.xlu0 %1732
      %1734 = vrot.lane.b32.xlu0 %v1729, 24
      %v1735 = vpop.permute.xlu0 %1734
      %v1736 = vrot.slane %v1733, 4
      %v1737 = vrot.slane %v1735, 4
      %v1738 = vsel %vm409, %v1736, %v1737
      %v1739 = vsel %vm1722, %v1733, %v1738
      %1741 = vst [vmem:[#allocation2 + $0x238] sm:$0xff] %v1739
      %v1742 = vld [vmem:[%s240 + $0x4] sm:$0xff]
      %v1743 = vmul.bf16 %v1742, %v377
      %1744 = vst [vmem:[#allocation2 + $0x240] sm:$0xff] %v1743
      %v1745 = vld [vmem:[%s381 + $0x4] sm:$0xff]
      %v1746 = vmul.bf16 %v1745, %v377
      %1747 = vst [vmem:[#allocation2 + $0x248] sm:$0xff] %v1746
      %v1748 = vld [vmem:[%s240 + $0x4] sm:$0xff]
      %v1749 = vld [vmem:[%s240 + $0xc] sm:$0xf]
      %v1750 = vmul.bf16 %v1748, %v396
      %v1751 = vmul.bf16 %v1749, %v394
      %1754 = vrot.lane.b32.xlu0 %v1750, 126
      %v1755 = vpop.permute.xlu0 %1754
      %1756 = vrot.lane.b32.xlu0 %v1751, 126
      %v1757 = vpop.permute.xlu0 %1756
      %v1758 = vrot.slane %v1755, 4
      %v1759 = vrot.slane %v1757, 4
      %v1760 = vsel %vm409, %v1758, %v1759
      %v1761 = vsel %vm411, %v1755, %v1760
      %1763 = vst [vmem:[#allocation2 + $0x250] sm:$0xff] %v1761
      %v1764 = vld [vmem:[%s381 + $0x4] sm:$0xff]
      %v1765 = vld [vmem:[%s381 + $0xc] sm:$0xf]
      %v1766 = vmul.bf16 %v1764, %v396
      %v1767 = vmul.bf16 %v1765, %v394
      %1770 = vrot.lane.b32.xlu0 %v1766, 126
      %v1771 = vpop.permute.xlu0 %1770
      %1772 = vrot.lane.b32.xlu0 %v1767, 126
      %v1773 = vpop.permute.xlu0 %1772
      %v1774 = vrot.slane %v1771, 4
      %v1775 = vrot.slane %v1773, 4
      %v1776 = vsel %vm409, %v1774, %v1775
      %v1777 = vsel %vm411, %v1771, %v1776
      %1779 = vst [vmem:[#allocation2 + $0x258] sm:$0xff] %v1777
      %v1780 = vld [vmem:[%s240 + $0x4] sm:$0xff]
      %v1781 = vld [vmem:[%s240 + $0xc] sm:$0xf]
      %1784 = vrot.lane.b32.xlu0 %v1780, 124
      %v1785 = vpop.permute.xlu0 %1784
      %1786 = vrot.lane.b32.xlu0 %v1781, 124
      %v1787 = vpop.permute.xlu0 %1786
      %v1788 = vrot.slane %v1785, 4
      %v1789 = vrot.slane %v1787, 4
      %v1790 = vsel %vm409, %v1788, %v1789
      %v1791 = vsel %vm442, %v1785, %v1790
      %1793 = vst [vmem:[#allocation2 + $0x260] sm:$0xff] %v1791
      %v1794 = vld [vmem:[%s381 + $0x4] sm:$0xff]
      %v1795 = vld [vmem:[%s381 + $0xc] sm:$0xf]
      %1798 = vrot.lane.b32.xlu0 %v1794, 124
      %v1799 = vpop.permute.xlu0 %1798
      %1800 = vrot.lane.b32.xlu0 %v1795, 124
      %v1801 = vpop.permute.xlu0 %1800
      %v1802 = vrot.slane %v1799, 4
      %v1803 = vrot.slane %v1801, 4
      %v1804 = vsel %vm409, %v1802, %v1803
      %v1805 = vsel %vm442, %v1799, %v1804
      %1807 = vst [vmem:[#allocation2 + $0x268] sm:$0xff] %v1805
      %v1808 = vld [vmem:[%s240 + $0x4] sm:$0xff]
      %v1809 = vld [vmem:[%s240 + $0xc] sm:$0xf]
      %v1810 = vmul.bf16 %v1808, %v471
      %v1811 = vmul.bf16 %v1809, %v469
      %1814 = vrot.lane.b32.xlu0 %v1810, 122
      %v1815 = vpop.permute.xlu0 %1814
      %1816 = vrot.lane.b32.xlu0 %v1811, 122
      %v1817 = vpop.permute.xlu0 %1816
      %v1818 = vrot.slane %v1815, 4
      %v1819 = vrot.slane %v1817, 4
      %v1820 = vsel %vm409, %v1818, %v1819
      %v1821 = vsel %vm485, %v1815, %v1820
      %1823 = vst [vmem:[#allocation2 + $0x270] sm:$0xff] %v1821
      %v1824 = vld [vmem:[%s381 + $0x4] sm:$0xff]
      %v1825 = vld [vmem:[%s381 + $0xc] sm:$0xf]
      %v1826 = vmul.bf16 %v1824, %v471
      %v1827 = vmul.bf16 %v1825, %v469
      %1830 = vrot.lane.b32.xlu0 %v1826, 122
      %v1831 = vpop.permute.xlu0 %1830
      %1832 = vrot.lane.b32.xlu0 %v1827, 122
      %v1833 = vpop.permute.xlu0 %1832
      %v1834 = vrot.slane %v1831, 4
      %v1835 = vrot.slane %v1833, 4
      %v1836 = vsel %vm409, %v1834, %v1835
      %v1837 = vsel %vm485, %v1831, %v1836
      %1839 = vst [vmem:[#allocation2 + $0x278] sm:$0xff] %v1837
      %v1840 = vld [vmem:[%s240 + $0x4] sm:$0xff]
      %v1841 = vld [vmem:[%s240 + $0xc] sm:$0xf]
      %v1842 = vmul.bf16 %v1840, %v516
      %v1843 = vmul.bf16 %v1841, %v514
      %1846 = vrot.lane.b32.xlu0 %v1842, 120
      %v1847 = vpop.permute.xlu0 %1846
      %1848 = vrot.lane.b32.xlu0 %v1843, 120
      %v1849 = vpop.permute.xlu0 %1848
      %v1850 = vrot.slane %v1847, 4
      %v1851 = vrot.slane %v1849, 4
      %v1852 = vsel %vm409, %v1850, %v1851
      %v1853 = vsel %vm530, %v1847, %v1852
      %1855 = vst [vmem:[#allocation2 + $0x280] sm:$0xff] %v1853
      %v1856 = vld [vmem:[%s381 + $0x4] sm:$0xff]
      %v1857 = vld [vmem:[%s381 + $0xc] sm:$0xf]
      %v1858 = vmul.bf16 %v1856, %v516
      %v1859 = vmul.bf16 %v1857, %v514
      %1862 = vrot.lane.b32.xlu0 %v1858, 120
      %v1863 = vpop.permute.xlu0 %1862
      %1864 = vrot.lane.b32.xlu0 %v1859, 120
      %v1865 = vpop.permute.xlu0 %1864
      %v1866 = vrot.slane %v1863, 4
      %v1867 = vrot.slane %v1865, 4
      %v1868 = vsel %vm409, %v1866, %v1867
      %v1869 = vsel %vm530, %v1863, %v1868
      %1871 = vst [vmem:[#allocation2 + $0x288] sm:$0xff] %v1869
      %v1872 = vld [vmem:[%s0] sm:$0xff]
      %v1873 = vld [vmem:[%s0 + $0x8] sm:$0xf]
      %v1874 = vld [vmem:[#allocation2] sm:$0xff]
      %v1875 = vld [vmem:[#allocation2 + $0x8] sm:$0xff]
      %v1876 = vld [vmem:[#allocation2 + $0x10] sm:$0xff]
      %v1877 = vld [vmem:[#allocation2 + $0x18] sm:$0xff]
      %v1878 = vld [vmem:[#allocation2 + $0x20] sm:$0xff]
      %v1879 = vld [vmem:[#allocation2 + $0x28] sm:$0xff]
      %v1880 = vld [vmem:[#allocation2 + $0x30] sm:$0xff]
      %v1881 = vld [vmem:[#allocation2 + $0x38] sm:$0xff]
      %v1882 = vld [vmem:[#allocation2 + $0x40] sm:$0xff]
      %v1883 = vld [vmem:[#allocation2 + $0x48] sm:$0xff]
      %v1884 = vld [vmem:[#allocation2 + $0x50] sm:$0xff]
      %v1885 = vld [vmem:[#allocation2 + $0x58] sm:$0xff]
      %v1886 = vld [vmem:[#allocation2 + $0x60] sm:$0xff]
      %v1887 = vld [vmem:[#allocation2 + $0x68] sm:$0xff]
      %v1888 = vld [vmem:[#allocation2 + $0x70] sm:$0xff]
      %v1889 = vld [vmem:[#allocation2 + $0x78] sm:$0xff]
      %v1890 = vld [vmem:[#allocation2 + $0x80] sm:$0xff]
      %v1891 = vld [vmem:[#allocation2 + $0x88] sm:$0xff]
      %v1892 = vld [vmem:[#allocation2 + $0x90] sm:$0xff]
      %v1893 = vld [vmem:[#allocation2 + $0x98] sm:$0xff]
      %v1894 = vld [vmem:[#allocation2 + $0xa0] sm:$0xff]
      %v1895 = vld [vmem:[#allocation2 + $0xa8] sm:$0xff]
      %v1896 = vld [vmem:[#allocation2 + $0xb0] sm:$0xff]
      %v1897 = vld [vmem:[#allocation2 + $0xb8] sm:$0xff]
      %v1898 = vld [vmem:[#allocation2 + $0xc0] sm:$0xff]
      %v1899 = vld [vmem:[#allocation2 + $0xc8] sm:$0xff]
      %v1900 = vld [vmem:[#allocation2 + $0xd0] sm:$0xff]
      %v1901 = vld [vmem:[#allocation2 + $0xd8] sm:$0xff]
      %v1902 = vld [vmem:[#allocation2 + $0xe0] sm:$0xff]
      %v1903 = vld [vmem:[#allocation2 + $0xe8] sm:$0xff]
      %v1904 = vld [vmem:[#allocation2 + $0xf0] sm:$0xff]
      %v1905 = vld [vmem:[#allocation2 + $0xf8] sm:$0xff]
      %v1906 = vld [vmem:[#allocation2 + $0x100] sm:$0xff]
      %v1907 = vld [vmem:[#allocation2 + $0x108] sm:$0xff]
      %v1908 = vld [vmem:[#allocation2 + $0x110] sm:$0xff]
      %v1909 = vld [vmem:[#allocation2 + $0x118] sm:$0xff]
      %v1910 = vld [vmem:[#allocation2 + $0x120] sm:$0xff]
      %v1911 = vld [vmem:[#allocation2 + $0x128] sm:$0xff]
      %v1912 = vld [vmem:[#allocation2 + $0x130] sm:$0xff]
      %v1913 = vld [vmem:[#allocation2 + $0x138] sm:$0xff]
      %v1914 = vld [vmem:[#allocation2 + $0x140] sm:$0xff]
      %v1915 = vld [vmem:[#allocation2 + $0x148] sm:$0xff]
      %v1916 = vld [vmem:[#allocation2 + $0x150] sm:$0xff]
      %v1917 = vld [vmem:[#allocation2 + $0x158] sm:$0xff]
      %v1918 = vld [vmem:[#allocation2 + $0x160] sm:$0xff]
      %v1919 = vld [vmem:[#allocation2 + $0x168] sm:$0xff]
      %v1920 = vld [vmem:[#allocation2 + $0x170] sm:$0xff]
      %v1921 = vld [vmem:[#allocation2 + $0x178] sm:$0xff]
      %v1922 = vld [vmem:[#allocation2 + $0x180] sm:$0xff]
      %v1923 = vld [vmem:[#allocation2 + $0x188] sm:$0xff]
      %v1924 = vld [vmem:[#allocation2 + $0x190] sm:$0xff]
      %v1925 = vld [vmem:[#allocation2 + $0x198] sm:$0xff]
      %v1926 = vld [vmem:[#allocation2 + $0x1a0] sm:$0xff]
      %v1927 = vld [vmem:[#allocation2 + $0x1a8] sm:$0xff]
      %v1928 = vld [vmem:[#allocation2 + $0x1b0] sm:$0xff]
      %v1929 = vld [vmem:[#allocation2 + $0x1b8] sm:$0xff]
      %v1930 = vld [vmem:[#allocation2 + $0x1c0] sm:$0xff]
      %v1931 = vld [vmem:[#allocation2 + $0x1c8] sm:$0xff]
      %v1932 = vld [vmem:[#allocation2 + $0x1d0] sm:$0xff]
      %v1933 = vld [vmem:[#allocation2 + $0x1d8] sm:$0xff]
      %v1934 = vld [vmem:[#allocation2 + $0x1e0] sm:$0xff]
      %v1935 = vld [vmem:[#allocation2 + $0x1e8] sm:$0xff]
      %v1936 = vld [vmem:[#allocation2 + $0x1f0] sm:$0xff]
      %v1937 = vld [vmem:[#allocation2 + $0x1f8] sm:$0xff]
      %v1938 = vld [vmem:[#allocation2 + $0x200] sm:$0xff]
      %v1939 = vld [vmem:[#allocation2 + $0x208] sm:$0xff]
      %v1940 = vld [vmem:[#allocation2 + $0x210] sm:$0xff]
      %v1941 = vld [vmem:[#allocation2 + $0x218] sm:$0xff]
      %v1942 = vld [vmem:[#allocation2 + $0x220] sm:$0xff]
      %v1943 = vld [vmem:[#allocation2 + $0x228] sm:$0xff]
      %v1944 = vld [vmem:[#allocation2 + $0x230] sm:$0xff]
      %v1945 = vld [vmem:[#allocation2 + $0x238] sm:$0xff]
      %v1946 = vld [vmem:[#allocation2 + $0x240] sm:$0xff]
      %v1947 = vld [vmem:[#allocation2 + $0x248] sm:$0xff]
      %v1948 = vld [vmem:[#allocation2 + $0x250] sm:$0xff]
      %v1949 = vld [vmem:[#allocation2 + $0x258] sm:$0xff]
      %v1950 = vld [vmem:[#allocation2 + $0x260] sm:$0xff]
      %v1951 = vld [vmem:[#allocation2 + $0x268] sm:$0xff]
      %v1952 = vld [vmem:[#allocation2 + $0x270] sm:$0xff]
      %v1953 = vld [vmem:[#allocation2 + $0x278] sm:$0xff]
      %v1954 = vld [vmem:[#allocation2 + $0x280] sm:$0xff]
      %v1955 = vld [vmem:[#allocation2 + $0x288] sm:$0xff]
      %v1958 = vunpack.c.l.b16 %v1872
      %v1959 = vunpack.c.h.b16 %v1872
      %v1960 = vunpack.c.l.b16 %v1873
      %v1961 = vpack.c.b16 %v1958, %v1958
      %v1962 = vpack.c.b16 %v1959, %v1959
      %v1963 = vpack.c.b16 %v1960, %v1960
      %v2048 = vunpack.c.l.b16 %v1874
      %v2049 = vunpack.c.h.b16 %v1874
      %v2050 = vunpack.c.l.b16 %v1875
      %v2051 = vunpack.c.h.b16 %v1875
      %v2052 = vunpack.c.l.b16 %v1876
      %v2053 = vunpack.c.h.b16 %v1876
      %v2054 = vunpack.c.l.b16 %v1877
      %v2055 = vunpack.c.h.b16 %v1877
      %v2056 = vunpack.c.l.b16 %v1878
      %v2057 = vunpack.c.h.b16 %v1878
      %v2058 = vunpack.c.l.b16 %v1879
      %v2059 = vunpack.c.h.b16 %v1879
      %v2060 = vunpack.c.l.b16 %v1880
      %v2061 = vunpack.c.h.b16 %v1880
      %v2062 = vunpack.c.l.b16 %v1881
      %v2063 = vunpack.c.h.b16 %v1881
      %v2064 = vunpack.c.l.b16 %v1882
      %v2065 = vunpack.c.h.b16 %v1882
      %v2066 = vunpack.c.l.b16 %v1883
      %v2067 = vunpack.c.h.b16 %v1883
      %v2068 = vunpack.c.l.b16 %v1884
      %v2069 = vunpack.c.h.b16 %v1884
      %v2070 = vunpack.c.l.b16 %v1885
      %v2071 = vunpack.c.h.b16 %v1885
      %v2072 = vunpack.c.l.b16 %v1886
      %v2073 = vunpack.c.h.b16 %v1886
      %v2074 = vunpack.c.l.b16 %v1887
      %v2075 = vunpack.c.h.b16 %v1887
      %v2076 = vunpack.c.l.b16 %v1888
      %v2077 = vunpack.c.h.b16 %v1888
      %v2078 = vunpack.c.l.b16 %v1889
      %v2079 = vunpack.c.h.b16 %v1889
      %v2080 = vunpack.c.l.b16 %v1890
      %v2081 = vunpack.c.h.b16 %v1890
      %v2082 = vunpack.c.l.b16 %v1891
      %v2083 = vunpack.c.h.b16 %v1891
      %v2084 = vunpack.c.l.b16 %v1892
      %v2085 = vunpack.c.h.b16 %v1892
      %v2086 = vunpack.c.l.b16 %v1893
      %v2087 = vunpack.c.h.b16 %v1893
      %v2088 = vunpack.c.l.b16 %v1894
      %v2089 = vunpack.c.h.b16 %v1894
      %v2090 = vunpack.c.l.b16 %v1895
      %v2091 = vunpack.c.h.b16 %v1895
      %v2092 = vunpack.c.l.b16 %v1896
      %v2093 = vunpack.c.h.b16 %v1896
      %v2094 = vunpack.c.l.b16 %v1897
      %v2095 = vunpack.c.h.b16 %v1897
      %v2096 = vunpack.c.l.b16 %v1898
      %v2097 = vunpack.c.h.b16 %v1898
      %v2098 = vunpack.c.l.b16 %v1899
      %v2099 = vunpack.c.h.b16 %v1899
      %v2100 = vunpack.c.l.b16 %v1900
      %v2101 = vunpack.c.h.b16 %v1900
      %v2102 = vunpack.c.l.b16 %v1901
      %v2103 = vunpack.c.h.b16 %v1901
      %v2104 = vunpack.c.l.b16 %v1902
      %v2105 = vunpack.c.h.b16 %v1902
      %v2106 = vunpack.c.l.b16 %v1903
      %v2107 = vunpack.c.h.b16 %v1903
      %v2108 = vunpack.c.l.b16 %v1904
      %v2109 = vunpack.c.h.b16 %v1904
      %v2110 = vunpack.c.l.b16 %v1905
      %v2111 = vunpack.c.h.b16 %v1905
      %v2112 = vunpack.c.l.b16 %v1906
      %v2113 = vunpack.c.h.b16 %v1906
      %v2114 = vunpack.c.l.b16 %v1907
      %v2115 = vunpack.c.h.b16 %v1907
      %v2116 = vunpack.c.l.b16 %v1908
      %v2117 = vunpack.c.h.b16 %v1908
      %v2118 = vunpack.c.l.b16 %v1909
      %v2119 = vunpack.c.h.b16 %v1909
      %v2120 = vunpack.c.l.b16 %v1910
      %v2121 = vunpack.c.h.b16 %v1910
      %v2122 = vunpack.c.l.b16 %v1911
      %v2123 = vunpack.c.h.b16 %v1911
      %v2124 = vunpack.c.l.b16 %v1912
      %v2125 = vunpack.c.h.b16 %v1912
      %v2126 = vunpack.c.l.b16 %v1913
      %v2127 = vunpack.c.h.b16 %v1913
      %v2128 = vunpack.c.l.b16 %v1914
      %v2129 = vunpack.c.h.b16 %v1914
      %v2130 = vunpack.c.l.b16 %v1915
      %v2131 = vunpack.c.h.b16 %v1915
      %v2132 = vunpack.c.l.b16 %v1916
      %v2133 = vunpack.c.h.b16 %v1916
      %v2134 = vunpack.c.l.b16 %v1917
      %v2135 = vunpack.c.h.b16 %v1917
      %v2136 = vunpack.c.l.b16 %v1918
      %v2137 = vunpack.c.h.b16 %v1918
      %v2138 = vunpack.c.l.b16 %v1919
      %v2139 = vunpack.c.h.b16 %v1919
      %v2140 = vunpack.c.l.b16 %v1920
      %v2141 = vunpack.c.h.b16 %v1920
      %v2142 = vunpack.c.l.b16 %v1921
      %v2143 = vunpack.c.h.b16 %v1921
      %v2144 = vunpack.c.l.b16 %v1922
      %v2145 = vunpack.c.h.b16 %v1922
      %v2146 = vunpack.c.l.b16 %v1923
      %v2147 = vunpack.c.h.b16 %v1923
      %v2148 = vunpack.c.l.b16 %v1924
      %v2149 = vunpack.c.h.b16 %v1924
      %v2150 = vunpack.c.l.b16 %v1925
      %v2151 = vunpack.c.h.b16 %v1925
      %v2152 = vunpack.c.l.b16 %v1926
      %v2153 = vunpack.c.h.b16 %v1926
      %v2154 = vunpack.c.l.b16 %v1927
      %v2155 = vunpack.c.h.b16 %v1927
      %v2156 = vunpack.c.l.b16 %v1928
      %v2157 = vunpack.c.h.b16 %v1928
      %v2158 = vunpack.c.l.b16 %v1929
      %v2159 = vunpack.c.h.b16 %v1929
      %v2160 = vunpack.c.l.b16 %v1930
      %v2161 = vunpack.c.h.b16 %v1930
      %v2162 = vunpack.c.l.b16 %v1931
      %v2163 = vunpack.c.h.b16 %v1931
      %v2164 = vunpack.c.l.b16 %v1932
      %v2165 = vunpack.c.h.b16 %v1932
      %v2166 = vunpack.c.l.b16 %v1933
      %v2167 = vunpack.c.h.b16 %v1933
      %v2168 = vunpack.c.l.b16 %v1934
      %v2169 = vunpack.c.h.b16 %v1934
      %v2170 = vunpack.c.l.b16 %v1935
      %v2171 = vunpack.c.h.b16 %v1935
      %v2172 = vunpack.c.l.b16 %v1936
      %v2173 = vunpack.c.h.b16 %v1936
      %v2174 = vunpack.c.l.b16 %v1937
      %v2175 = vunpack.c.h.b16 %v1937
      %v2176 = vunpack.c.l.b16 %v1938
      %v2177 = vunpack.c.h.b16 %v1938
      %v2178 = vunpack.c.l.b16 %v1939
      %v2179 = vunpack.c.h.b16 %v1939
      %v2180 = vunpack.c.l.b16 %v1940
      %v2181 = vunpack.c.h.b16 %v1940
      %v2182 = vunpack.c.l.b16 %v1941
      %v2183 = vunpack.c.h.b16 %v1941
      %v2184 = vunpack.c.l.b16 %v1942
      %v2185 = vunpack.c.h.b16 %v1942
      %v2186 = vunpack.c.l.b16 %v1943
      %v2187 = vunpack.c.h.b16 %v1943
      %v2188 = vunpack.c.l.b16 %v1944
      %v2189 = vunpack.c.h.b16 %v1944
      %v2190 = vunpack.c.l.b16 %v1945
      %v2191 = vunpack.c.h.b16 %v1945
      %v2192 = vunpack.c.l.b16 %v1946
      %v2193 = vunpack.c.h.b16 %v1946
      %v2194 = vunpack.c.l.b16 %v1947
      %v2195 = vunpack.c.h.b16 %v1947
      %v2196 = vunpack.c.l.b16 %v1948
      %v2197 = vunpack.c.h.b16 %v1948
      %v2198 = vunpack.c.l.b16 %v1949
      %v2199 = vunpack.c.h.b16 %v1949
      %v2200 = vunpack.c.l.b16 %v1950
      %v2201 = vunpack.c.h.b16 %v1950
      %v2202 = vunpack.c.l.b16 %v1951
      %v2203 = vunpack.c.h.b16 %v1951
      %v2204 = vunpack.c.l.b16 %v1952
      %v2205 = vunpack.c.h.b16 %v1952
      %v2206 = vunpack.c.l.b16 %v1953
      %v2207 = vunpack.c.h.b16 %v1953
      %v2208 = vunpack.c.l.b16 %v1954
      %v2209 = vunpack.c.h.b16 %v1954
      %v2210 = vunpack.c.l.b16 %v1955
      %v2211 = vunpack.c.h.b16 %v1955
      %v2212 = vpack.c.b16 %v2052, %v2048
      %v2213 = vpack.c.b16 %v2053, %v2049
      %v2214 = vpack.c.b16 %v2054, %v2050
      %v2215 = vpack.c.b16 %v2055, %v2051
      %v2216 = vpack.c.b16 %v2060, %v2056
      %v2217 = vpack.c.b16 %v2061, %v2057
      %v2218 = vpack.c.b16 %v2062, %v2058
      %v2219 = vpack.c.b16 %v2063, %v2059
      %v2220 = vpack.c.b16 %v2068, %v2064
      %v2221 = vpack.c.b16 %v2069, %v2065
      %v2222 = vpack.c.b16 %v2070, %v2066
      %v2223 = vpack.c.b16 %v2071, %v2067
      %v2224 = vpack.c.b16 %v2076, %v2072
      %v2225 = vpack.c.b16 %v2077, %v2073
      %v2226 = vpack.c.b16 %v2078, %v2074
      %v2227 = vpack.c.b16 %v2079, %v2075
      %v2228 = vpack.c.b16 %v2084, %v2080
      %v2229 = vpack.c.b16 %v2085, %v2081
      %v2230 = vpack.c.b16 %v2086, %v2082
      %v2231 = vpack.c.b16 %v2087, %v2083
      %v2232 = vpack.c.b16 %v2092, %v2088
      %v2233 = vpack.c.b16 %v2093, %v2089
      %v2234 = vpack.c.b16 %v2094, %v2090
      %v2235 = vpack.c.b16 %v2095, %v2091
      %v2236 = vpack.c.b16 %v2100, %v2096
      %v2237 = vpack.c.b16 %v2101, %v2097
      %v2238 = vpack.c.b16 %v2102, %v2098
      %v2239 = vpack.c.b16 %v2103, %v2099
      %v2240 = vpack.c.b16 %v2108, %v2104
      %v2241 = vpack.c.b16 %v2109, %v2105
      %v2242 = vpack.c.b16 %v2110, %v2106
      %v2243 = vpack.c.b16 %v2111, %v2107
      %v2244 = vpack.c.b16 %v2116, %v2112
      %v2245 = vpack.c.b16 %v2117, %v2113
      %v2246 = vpack.c.b16 %v2118, %v2114
      %v2247 = vpack.c.b16 %v2119, %v2115
      %v2248 = vpack.c.b16 %v2124, %v2120
      %v2249 = vpack.c.b16 %v2125, %v2121
      %v2250 = vpack.c.b16 %v2126, %v2122
      %v2251 = vpack.c.b16 %v2127, %v2123
      %v2252 = vpack.c.b16 %v2132, %v2128
      %v2253 = vpack.c.b16 %v2133, %v2129
      %v2254 = vpack.c.b16 %v2134, %v2130
      %v2255 = vpack.c.b16 %v2135, %v2131
      %v2256 = vpack.c.b16 %v2140, %v2136
      %v2257 = vpack.c.b16 %v2141, %v2137
      %v2258 = vpack.c.b16 %v2142, %v2138
      %v2259 = vpack.c.b16 %v2143, %v2139
      %v2260 = vpack.c.b16 %v2148, %v2144
      %v2261 = vpack.c.b16 %v2149, %v2145
      %v2262 = vpack.c.b16 %v2150, %v2146
      %v2263 = vpack.c.b16 %v2151, %v2147
      %v2264 = vpack.c.b16 %v2156, %v2152
      %v2265 = vpack.c.b16 %v2157, %v2153
      %v2266 = vpack.c.b16 %v2158, %v2154
      %v2267 = vpack.c.b16 %v2159, %v2155
      %v2268 = vpack.c.b16 %v2164, %v2160
      %v2269 = vpack.c.b16 %v2165, %v2161
      %v2270 = vpack.c.b16 %v2166, %v2162
      %v2271 = vpack.c.b16 %v2167, %v2163
      %v2272 = vpack.c.b16 %v2172, %v2168
      %v2273 = vpack.c.b16 %v2173, %v2169
      %v2274 = vpack.c.b16 %v2174, %v2170
      %v2275 = vpack.c.b16 %v2175, %v2171
      %v2276 = vpack.c.b16 %v2180, %v2176
      %v2277 = vpack.c.b16 %v2181, %v2177
      %v2278 = vpack.c.b16 %v2182, %v2178
      %v2279 = vpack.c.b16 %v2183, %v2179
      %v2280 = vpack.c.b16 %v2188, %v2184
      %v2281 = vpack.c.b16 %v2189, %v2185
      %v2282 = vpack.c.b16 %v2190, %v2186
      %v2283 = vpack.c.b16 %v2191, %v2187
      %v2284 = vpack.c.b16 %v2196, %v2192
      %v2285 = vpack.c.b16 %v2197, %v2193
      %v2286 = vpack.c.b16 %v2198, %v2194
      %v2287 = vpack.c.b16 %v2199, %v2195
      %v2288 = vpack.c.b16 %v2204, %v2200
      %v2289 = vpack.c.b16 %v2205, %v2201
      %v2290 = vpack.c.b16 %v2206, %v2202
      %v2291 = vpack.c.b16 %v2207, %v2203
      %v2292 = vpack.c.b16 %v2208, %v2208
      %v2293 = vpack.c.b16 %v2209, %v2209
      %v2294 = vpack.c.b16 %v2210, %v2210
      %v2295 = vpack.c.b16 %v2211, %v2211
      %vm2376 = vcmask 588800
      %v2378 = vsel %vm2376, %v1963, 0
      %vm2380 = vcmask 1043456
      %v2382 = vsel %vm2380, %v2292, 0
      %v2385 = vsel %vm2380, %v2293, 0
      %v2388 = vsel %vm2380, %v2294, 0
      %v2391 = vsel %vm2380, %v2295, 0
      %2393 = vmatprep.subr.bf16.mxu0 %v2241
      %2394 = vmatpush1.bf16.msra.mxu0 %v2240
      %2395 = vmatprep.subr.bf16.mxu0 %v2237
      %2396 = vmatpush1.bf16.msra.mxu0 %v2236
      %2397 = vmatprep.subr.bf16.mxu0 %v2233
      %2398 = vmatpush1.bf16.msra.mxu0 %v2232
      %2399 = vmatprep.subr.bf16.mxu0 %v2229
      %2400 = vmatpush1.bf16.msra.mxu0 %v2228
      %2401 = vmatprep.subr.bf16.mxu0 %v2225
      %2402 = vmatpush1.bf16.msra.mxu0 %v2224
      %2403 = vmatprep.subr.bf16.mxu0 %v2221
      %2404 = vmatpush1.bf16.msra.mxu0 %v2220
      %2405 = vmatprep.subr.bf16.mxu0 %v2217
      %2406 = vmatpush1.bf16.msra.mxu0 %v2216
      %2407 = vmatprep.subr.bf16.mxu0 %v2213
      %2408 = vmatpush1.bf16.msra.mxu0 %v2212
      %2409 = vmatprep.subr.bf16.mxu0 %v2273
      %2410 = vmatpush2.bf16.msra.mxu0 %v2272
      %2411 = vmatprep.subr.bf16.mxu0 %v2269
      %2412 = vmatpush2.bf16.msra.mxu0 %v2268
      %2413 = vmatprep.subr.bf16.mxu0 %v2265
      %2414 = vmatpush2.bf16.msra.mxu0 %v2264
      %2415 = vmatprep.subr.bf16.mxu0 %v2261
      %2416 = vmatpush2.bf16.msra.mxu0 %v2260
      %2417 = vmatprep.subr.bf16.mxu0 %v2257
      %2418 = vmatpush2.bf16.msra.mxu0 %v2256
      %2419 = vmatprep.subr.bf16.mxu0 %v2253
      %2420 = vmatpush2.bf16.msra.mxu0 %v2252
      %2421 = vmatprep.subr.bf16.mxu0 %v2249
      %2422 = vmatpush2.bf16.msra.mxu0 %v2248
      %2423 = vmatprep.subr.bf16.mxu0 %v2245
      %2424 = vmatpush2.bf16.msra.mxu0 %v2244
      %2425 = vmatprep.mubr.bf16.mxu0 %v1962
      %2426 = vmatmul.mubr.bf16.gmra.mxu0 %v1961
      %v2427 = vpop.f32.mrf.mxu0
      %v2428 = vadd.f32 0.0, %v2427
      %v2429 = vpop.f32.mrf.mxu0
      %v2430 = vadd.f32 0.0, %v2429
      %v2431 = vpop.f32.mrf.mxu0
      %v2432 = vpop.f32.mrf.mxu0
      %2433 = vdwg.mxu0
      %2434 = vmatprep.subr.bf16.mxu0 0
      %2435 = vmatpush1.bf16.msra.mxu0 0
      %2436 = vmatprep.subr.bf16.mxu0 0
      %2437 = vmatpush1.bf16.msra.mxu0 0
      %2438 = vmatprep.subr.bf16.mxu0 0
      %2439 = vmatpush1.bf16.msra.mxu0 0
      %2440 = vmatprep.subr.bf16.mxu0 %v2385
      %2441 = vmatpush1.bf16.msra.mxu0 %v2382
      %2442 = vmatprep.subr.bf16.mxu0 %v2289
      %2443 = vmatpush1.bf16.msra.mxu0 %v2288
      %2444 = vmatprep.subr.bf16.mxu0 %v2285
      %2445 = vmatpush1.bf16.msra.mxu0 %v2284
      %2446 = vmatprep.subr.bf16.mxu0 %v2281
      %2447 = vmatpush1.bf16.msra.mxu0 %v2280
      %2448 = vmatprep.subr.bf16.mxu0 %v2277
      %2449 = vmatpush1.bf16.msra.mxu0 %v2276
      %2450 = vmatprep.subr.bf16.mxu0 0
      %2451 = vmatpush2.bf16.msra.mxu0 0
      %2452 = vmatprep.subr.bf16.mxu0 0
      %2453 = vmatpush2.bf16.msra.mxu0 0
      %2454 = vmatprep.subr.bf16.mxu0 0
      %2455 = vmatpush2.bf16.msra.mxu0 0
      %2456 = vmatprep.subr.bf16.mxu0 0
      %2457 = vmatpush2.bf16.msra.mxu0 0
      %2458 = vmatprep.subr.bf16.mxu0 0
      %2459 = vmatpush2.bf16.msra.mxu0 0
      %2460 = vmatprep.subr.bf16.mxu0 0
      %2461 = vmatpush2.bf16.msra.mxu0 0
      %2462 = vmatprep.subr.bf16.mxu0 0
      %2463 = vmatpush2.bf16.msra.mxu0 0
      %2464 = vmatprep.subr.bf16.mxu0 0
      %2465 = vmatpush2.bf16.msra.mxu0 0
      %2466 = vmatprep.mubr.bf16.mxu0 0
      %2467 = vmatmul.mubr.bf16.gmra.mxu0 %v2378
      %v2468 = vpop.f32.mrf.mxu0
      %v2469 = vadd.f32 %v2428, %v2468
      %v2470 = vpop.f32.mrf.mxu0
      %v2471 = vadd.f32 %v2430, %v2470
      %v2472 = vpop.f32.mrf.mxu0
      %v2473 = vpop.f32.mrf.mxu0
      %2474 = vdwg.mxu0
      %2475 = vmatprep.subr.bf16.mxu0 %v2243
      %2476 = vmatpush1.bf16.msra.mxu0 %v2242
      %2477 = vmatprep.subr.bf16.mxu0 %v2239
      %2478 = vmatpush1.bf16.msra.mxu0 %v2238
      %2479 = vmatprep.subr.bf16.mxu0 %v2235
      %2480 = vmatpush1.bf16.msra.mxu0 %v2234
      %2481 = vmatprep.subr.bf16.mxu0 %v2231
      %2482 = vmatpush1.bf16.msra.mxu0 %v2230
      %2483 = vmatprep.subr.bf16.mxu0 %v2227
      %2484 = vmatpush1.bf16.msra.mxu0 %v2226
      %2485 = vmatprep.subr.bf16.mxu0 %v2223
      %2486 = vmatpush1.bf16.msra.mxu0 %v2222
      %2487 = vmatprep.subr.bf16.mxu0 %v2219
      %2488 = vmatpush1.bf16.msra.mxu0 %v2218
      %2489 = vmatprep.subr.bf16.mxu0 %v2215
      %2490 = vmatpush1.bf16.msra.mxu0 %v2214
      %2491 = vmatprep.subr.bf16.mxu0 %v2275
      %2492 = vmatpush2.bf16.msra.mxu0 %v2274
      %2493 = vmatprep.subr.bf16.mxu0 %v2271
      %2494 = vmatpush2.bf16.msra.mxu0 %v2270
      %2495 = vmatprep.subr.bf16.mxu0 %v2267
      %2496 = vmatpush2.bf16.msra.mxu0 %v2266
      %2497 = vmatprep.subr.bf16.mxu0 %v2263
      %2498 = vmatpush2.bf16.msra.mxu0 %v2262
      %2499 = vmatprep.subr.bf16.mxu0 %v2259
      %2500 = vmatpush2.bf16.msra.mxu0 %v2258
      %2501 = vmatprep.subr.bf16.mxu0 %v2255
      %2502 = vmatpush2.bf16.msra.mxu0 %v2254
      %2503 = vmatprep.subr.bf16.mxu0 %v2251
      %2504 = vmatpush2.bf16.msra.mxu0 %v2250
      %2505 = vmatprep.subr.bf16.mxu0 %v2247
      %2506 = vmatpush2.bf16.msra.mxu0 %v2246
      %2507 = vmatprep.mubr.bf16.mxu0 %v1962
      %2508 = vmatmul.mubr.bf16.gmra.mxu0 %v1961
      %v2509 = vpop.f32.mrf.mxu0
      %v2510 = vadd.f32 0.0, %v2509
      %v2511 = vpop.f32.mrf.mxu0
      %v2512 = vadd.f32 0.0, %v2511
      %v2513 = vpop.f32.mrf.mxu0
      %v2514 = vpop.f32.mrf.mxu0
      %2515 = vdwg.mxu0
      %2516 = vmatprep.subr.bf16.mxu0 0
      %2517 = vmatpush1.bf16.msra.mxu0 0
      %2518 = vmatprep.subr.bf16.mxu0 0
      %2519 = vmatpush1.bf16.msra.mxu0 0
      %2520 = vmatprep.subr.bf16.mxu0 0
      %2521 = vmatpush1.bf16.msra.mxu0 0
      %2522 = vmatprep.subr.bf16.mxu0 %v2391
      %2523 = vmatpush1.bf16.msra.mxu0 %v2388
      %2524 = vmatprep.subr.bf16.mxu0 %v2291
      %2525 = vmatpush1.bf16.msra.mxu0 %v2290
      %2526 = vmatprep.subr.bf16.mxu0 %v2287
      %2527 = vmatpush1.bf16.msra.mxu0 %v2286
      %2528 = vmatprep.subr.bf16.mxu0 %v2283
      %2529 = vmatpush1.bf16.msra.mxu0 %v2282
      %2530 = vmatprep.subr.bf16.mxu0 %v2279
      %2531 = vmatpush1.bf16.msra.mxu0 %v2278
      %2532 = vmatprep.subr.bf16.mxu0 0
      %2533 = vmatpush2.bf16.msra.mxu0 0
      %2534 = vmatprep.subr.bf16.mxu0 0
      %2535 = vmatpush2.bf16.msra.mxu0 0
      %2536 = vmatprep.subr.bf16.mxu0 0
      %2537 = vmatpush2.bf16.msra.mxu0 0
      %2538 = vmatprep.subr.bf16.mxu0 0
      %2539 = vmatpush2.bf16.msra.mxu0 0
      %2540 = vmatprep.subr.bf16.mxu0 0
      %2541 = vmatpush2.bf16.msra.mxu0 0
      %2542 = vmatprep.subr.bf16.mxu0 0
      %2543 = vmatpush2.bf16.msra.mxu0 0
      %2544 = vmatprep.subr.bf16.mxu0 0
      %2545 = vmatpush2.bf16.msra.mxu0 0
      %2546 = vmatprep.subr.bf16.mxu0 0
      %2547 = vmatpush2.bf16.msra.mxu0 0
      %2548 = vmatprep.mubr.bf16.mxu0 0
      %2549 = vmatmul.mubr.bf16.gmra.mxu0 %v2378
      %v2550 = vpop.f32.mrf.mxu0
      %v2551 = vadd.f32 %v2510, %v2550
      %v2552 = vpop.f32.mrf.mxu0
      %v2553 = vadd.f32 %v2512, %v2552
      %v2554 = vpop.f32.mrf.mxu0
      %v2555 = vpop.f32.mrf.mxu0
      %2556 = vdwg.mxu0
      %v2557 = vld [vmem:[%s4] sm:$0xff]
      %v2558 = vld [vmem:[%s4 + $0x8] sm:$0xff]
      %v2559 = vld [vmem:[%s4 + $0x10] sm:$0xff]
      %v2560 = vld [vmem:[%s4 + $0x18] sm:$0xff]
      %v2561 = vld [vmem:[%s4 + $0x20] sm:$0x33]
      %v2562 = vld [vmem:[%s246] sm:$0xf]
      %v2568 = vunpack.c.l.b16 %v2557
      %v2569 = vunpack.c.h.b16 %v2557
      %v2570 = vunpack.c.l.b16 %v2558
      %v2571 = vunpack.c.h.b16 %v2558
      %v2572 = vunpack.c.l.b16 %v2559
      %v2573 = vunpack.c.h.b16 %v2559
      %v2574 = vunpack.c.l.b16 %v2560
      %v2575 = vunpack.c.h.b16 %v2560
      %v2576 = vunpack.c.l.b16 %v2561
      %v2577 = vunpack.c.h.b16 %v2561
      %v2578 = vpack.c.b16 %v2570, %v2568
      %v2579 = vpack.c.b16 %v2571, %v2569
      %v2580 = vpack.c.b16 %v2574, %v2572
      %v2581 = vpack.c.b16 %v2575, %v2573
      %v2582 = vpack.c.b16 %v2576, %v2576
      %v2583 = vpack.c.b16 %v2577, %v2577
      %vm2588 = vcmask 293888
      %v2590 = vsel %vm2588, %v2562, 0
      %vm2592 = vcmask 1041408
      %v2594 = vsel %vm2592, %v2582, 0
      %v2597 = vsel %vm2592, %v2583, 0
      %2599 = vmatprep.subr.bf16.mxu0 0
      %2600 = vmatpush1.bf16.msra.mxu0 0
      %2601 = vmatprep.subr.bf16.mxu0 0
      %2602 = vmatpush1.bf16.msra.mxu0 0
      %2603 = vmatprep.subr.bf16.mxu0 0
      %2604 = vmatpush1.bf16.msra.mxu0 0
      %2605 = vmatprep.subr.bf16.mxu0 0
      %2606 = vmatpush1.bf16.msra.mxu0 0
      %2607 = vmatprep.subr.bf16.mxu0 0
      %2608 = vmatpush1.bf16.msra.mxu0 0
      %2609 = vmatprep.subr.bf16.mxu0 %v2597
      %2610 = vmatpush1.bf16.msra.mxu0 %v2594
      %2611 = vmatprep.subr.bf16.mxu0 %v2581
      %2612 = vmatpush1.bf16.msra.mxu0 %v2580
      %2613 = vmatprep.subr.bf16.mxu0 %v2579
      %2614 = vmatpush1.bf16.msra.mxu0 %v2578
      %2615 = vmatprep.subr.bf16.mxu0 0
      %2616 = vmatpush2.bf16.msra.mxu0 0
      %2617 = vmatprep.subr.bf16.mxu0 0
      %2618 = vmatpush2.bf16.msra.mxu0 0
      %2619 = vmatprep.subr.bf16.mxu0 0
      %2620 = vmatpush2.bf16.msra.mxu0 0
      %2621 = vmatprep.subr.bf16.mxu0 0
      %2622 = vmatpush2.bf16.msra.mxu0 0
      %2623 = vmatprep.subr.bf16.mxu0 0
      %2624 = vmatpush2.bf16.msra.mxu0 0
      %2625 = vmatprep.subr.bf16.mxu0 0
      %2626 = vmatpush2.bf16.msra.mxu0 0
      %2627 = vmatprep.subr.bf16.mxu0 0
      %2628 = vmatpush2.bf16.msra.mxu0 0
      %2629 = vmatprep.subr.bf16.mxu0 0
      %2630 = vmatpush2.bf16.msra.mxu0 0
      %2631 = vmatprep.mubr.bf16.mxu0 0
      %2632 = vmatmul.mubr.bf16.gmra.mxu0 %v2590
      %v2633 = vpop.f32.mrf.mxu0
      %v2634 = vadd.f32 0.0, %v2633
      %v2635 = vpop.f32.mrf.mxu0
      %v2636 = vadd.f32 0.0, %v2635
      %v2637 = vpop.f32.mrf.mxu0
      %v2638 = vpop.f32.mrf.mxu0
      %2639 = vdwg.mxu0
      %v2640 = vadd.f32 %v2469, %v2634
      %v2641 = vadd.f32 %v2471, %v2636
      %2642 = vst [vmem:[%s253] sm:$0xff] %v2640
      %2643 = vst [vmem:[%s253 + $0x8] sm:$0xff] %v2641
      %s2644 = scalar_lea.vmem %s246, 4
      %v2645 = vld [vmem:[%s2644] sm:$0xf]
      %v2647 = vsel %vm2588, %v2645, 0
      %2649 = vmatprep.subr.bf16.mxu0 0
      %2650 = vmatpush1.bf16.msra.mxu0 0
      %2651 = vmatprep.subr.bf16.mxu0 0
      %2652 = vmatpush1.bf16.msra.mxu0 0
      %2653 = vmatprep.subr.bf16.mxu0 0
      %2654 = vmatpush1.bf16.msra.mxu0 0
      %2655 = vmatprep.subr.bf16.mxu0 0
      %2656 = vmatpush1.bf16.msra.mxu0 0
      %2657 = vmatprep.subr.bf16.mxu0 0
      %2658 = vmatpush1.bf16.msra.mxu0 0
      %2659 = vmatprep.subr.bf16.mxu0 %v2597
      %2660 = vmatpush1.bf16.msra.mxu0 %v2594
      %2661 = vmatprep.subr.bf16.mxu0 %v2581
      %2662 = vmatpush1.bf16.msra.mxu0 %v2580
      %2663 = vmatprep.subr.bf16.mxu0 %v2579
      %2664 = vmatpush1.bf16.msra.mxu0 %v2578
      %2665 = vmatprep.subr.bf16.mxu0 0
      %2666 = vmatpush2.bf16.msra.mxu0 0
      %2667 = vmatprep.subr.bf16.mxu0 0
      %2668 = vmatpush2.bf16.msra.mxu0 0
      %2669 = vmatprep.subr.bf16.mxu0 0
      %2670 = vmatpush2.bf16.msra.mxu0 0
      %2671 = vmatprep.subr.bf16.mxu0 0
      %2672 = vmatpush2.bf16.msra.mxu0 0
      %2673 = vmatprep.subr.bf16.mxu0 0
      %2674 = vmatpush2.bf16.msra.mxu0 0
      %2675 = vmatprep.subr.bf16.mxu0 0
      %2676 = vmatpush2.bf16.msra.mxu0 0
      %2677 = vmatprep.subr.bf16.mxu0 0
      %2678 = vmatpush2.bf16.msra.mxu0 0
      %2679 = vmatprep.subr.bf16.mxu0 0
      %2680 = vmatpush2.bf16.msra.mxu0 0
      %2681 = vmatprep.mubr.bf16.mxu0 0
      %2682 = vmatmul.mubr.bf16.gmra.mxu0 %v2647
      %v2683 = vpop.f32.mrf.mxu0
      %v2684 = vadd.f32 0.0, %v2683
      %v2685 = vpop.f32.mrf.mxu0
      %v2686 = vadd.f32 0.0, %v2685
      %v2687 = vpop.f32.mrf.mxu0
      %v2688 = vpop.f32.mrf.mxu0
      %2689 = vdwg.mxu0
      %v2690 = vadd.f32 %v2551, %v2684
      %v2691 = vadd.f32 %v2553, %v2686
      %s2692 = scalar_lea.vmem %s253, 16
      %2693 = vst [vmem:[%s2692] sm:$0xff] %v2690
      %2694 = vst [vmem:[%s2692 + $0x8] sm:$0xff] %v2691
      %s2695 = smul.u32 2, %s16
      %p2696 = scmp.lt.s32.totalorder %s2695, 3
      %s2697 = scalar_select %p2696, %s2695, 3
      %s2698 = smul.addr %s2697, 2
      %s2699 = smul.addr %s2698, 8
      %s2700 = scalar_lea.vmem %s5, %s2699
      // Predicated region
      $region41: #{darts_forward.1} parent=39 // pred_check
        %p2701 = pneg %p149
      $region42: #{darts_forward.1} parent=39 // pred_check_branch
        %2703 = sbr.rel (%p2701) target = $region44
      $region43: #{darts_forward.1} parent=39 // pred_region
        %s2704 = smul.u32 2, %s16
      $region44: #{darts_forward.1} parent=39 // pred_fallthru
        _
    $region40: #{darts_forward.1} parent=5 // pred_fallthru
      _
    %p2705 = scmp.le.s32.totalorder 2, %s11
    // Predicated region
    $region45: #{darts_forward.1} parent=5 // pred_check
      %p2706 = pneg %p2705
    $region46: #{darts_forward.1} parent=5 // pred_check_branch
      %2708 = sbr.rel (%p2706) target = $region48
    $region47: #{darts_forward.1} parent=5 // pred_region
      %s2709 = ssub.s32 %s11, 2
      // Predicated region
      $region49: #{darts_forward.1} parent=47 // pred_check
        %p2710 = pneg %p155
      $region50: #{darts_forward.1} parent=47 // pred_check_branch
        %2712 = sbr.rel (%p2710) target = $region52
      $region51: #{darts_forward.1} parent=47 // pred_region
        %s2713 = smul.u32 2, %s17
        %p2714 = scmp.lt.s32.totalorder %s2713, 3
        %s2715 = scalar_select %p2714, %s2713, 3
        %s2716 = smul.addr %s2715, 2
        %s2717 = smul.addr %s2716, 8
        %s2718 = scalar_lea.vmem %s5, %s2717
      $region52: #{darts_forward.1} parent=47 // pred_fallthru
        _
    $region48: #{darts_forward.1} parent=5 // pred_fallthru
      _
  $region6: #{darts_forward.1} parent=0 // loop_footer
    %s15 = sadd.s32 1, %s11
  $region7: #{darts_forward.1} parent=0 // loop_footer_branch
    %10 = sbr.rel target = $region3
  $region8: #{darts_forward.1} parent=0 // loop_exit
    _

</llo_original>
